<compile_context>
chip_gen: v7x
topology: tpu7x:2x2x1
jax: 0.10.0
libtpu: 0.0.40
codegen_flags: <defaults>
</compile_context>

<pallas_src>
import math
import functools

import jax
import jax.numpy as jnp
from jax.experimental import pallas as pl
from jax.experimental.pallas import tpu as pltpu

A_COEF = 0.7   # self.a
B_COEF = 0.3   # self.b
LN_EPS = 1e-5  # torch.nn.LayerNorm default


def _layernorm(x, w, b):
    mu = jnp.mean(x, axis=-1, keepdims=True)
    var = jnp.mean(jnp.square(x - mu), axis=-1, keepdims=True)
    return (x - mu) * jax.lax.rsqrt(var + LN_EPS) * w + b


def _gelu_exact(x):
    # torch.nn.GELU() default = exact erf formulation
    return 0.5 * x * (1.0 + jax.lax.erf(x * (1.0 / math.sqrt(2.0))))


# ---------------------------------------------------------------------------
# Per-layer (MFI_Block) kernel.  One grid step == one batch tile of `bt` samples.
# ---------------------------------------------------------------------------
def mfi_block_kernel(q_ref, k_ref, v_ref, x_ref,
                     ln_w_ref, ln_b_ref,
                     wq_ref, bq_ref, wk_ref, bk_ref,
                     wv_ref, bv_ref, wo_ref, bo_ref,
                     w1_ref, b1_ref, w2_ref, b2_ref,
                     fw_ref, fb_ref,
                     x_out_ref, q_out_ref, k_out_ref, v_out_ref,
                     ctx_ref,
                     *, heads, head_size, bt, seq, apply_final_ln):
    C = heads * head_size
    rows = bt * seq

    x1 = x_ref[...].reshape(rows, C)            # residual (f32)
    ln_w = ln_w_ref[0]                          # (C,)
    ln_b = ln_b_ref[0]

    xn = _layernorm(x1, ln_w, ln_b)             # f32 elementwise
    xn_b = xn.astype(jnp.bfloat16)              # bf16 MXU operand

    # Fused mfi_qk was de-interleaved (even output features -> Q, odd -> K) and all
    # weights pre-transposed to (in, out) bf16 in the wrapper.
    q_full = jnp.dot(xn_b, wq_ref[...], preferred_element_type=jnp.float32) + bq_ref[0]
    k_full = jnp.dot(xn_b, wk_ref[...], preferred_element_type=jnp.float32) + bk_ref[0]
    v_full = jnp.dot(xn_b, wv_ref[...], preferred_element_type=jnp.float32) + bv_ref[0]

    # Full-width a*new + b*old state mix (single VPU op, f32, lane-dense).
    Qm = A_COEF * q_full + B_COEF * q_ref[...].reshape(rows, C)
    Km = A_COEF * k_full + B_COEF * k_ref[...].reshape(rows, C)
    Vm = B_COEF * v_ref[...].reshape(rows, C) + A_COEF * v_full

    # Updated Q/K/V state carried to the next layer — one lane-dense write each.
    q_out_ref[...] = Qm.reshape(bt, seq, C)
    k_out_ref[...] = Km.reshape(bt, seq, C)
    v_out_ref[...] = Vm.reshape(bt, seq, C)

    # Fold the 1/sqrt(D) softmax scale into the (single, full-width) bf16 cast of
    # Q instead of scaling every per-head (seq, seq) score matrix.
    scale = 1.0 / math.sqrt(head_size)
    Qb = (Qm * scale).astype(jnp.bfloat16)
    Kb = Km.astype(jnp.bfloat16)
    Vb = Vm.astype(jnp.bfloat16)

    dn = (((1,), (1,)), ((), ()))               # contract last dims: Q @ K^T, no .T
    for b in range(bt):                         # static unroll (small)
        r0 = b * seq
        for h in range(heads):
            c0 = h * head_size
            Qh = Qb[r0:r0 + seq, c0:c0 + head_size]
            Kh = Kb[r0:r0 + seq, c0:c0 + head_size]
            Vh = Vb[r0:r0 + seq, c0:c0 + head_size]
            s = jax.lax.dot_general(Qh, Kh, dn,
                                    preferred_element_type=jnp.float32)
            s = s - jnp.max(s, axis=-1, keepdims=True)
            p = jnp.exp(s)                       # f32 softmax
            p = p * pl.reciprocal(jnp.sum(p, axis=-1, keepdims=True), approx=True)
            # Per-head context goes into a lane-dense VMEM scratch at a static
            # column offset (replaces the lane-axis concatenate).
            ctx_ref[b, :, c0:c0 + head_size] = jnp.dot(
                p.astype(jnp.bfloat16), Vh, preferred_element_type=jnp.float32)

    ctx = ctx_ref[...].reshape(rows, C).astype(jnp.bfloat16)
    attn_out = jnp.dot(ctx, wo_ref[...], preferred_element_type=jnp.float32) + bo_ref[0]

    x = x1 + attn_out
    x2 = x
    xn2 = _layernorm(x, ln_w, ln_b)   # NB: same (shared) LayerNorm module as above
    hdn = _gelu_exact(jnp.dot(xn2.astype(jnp.bfloat16), w1_ref[...],
                              preferred_element_type=jnp.float32) + b1_ref[0])
    mlp = jnp.dot(hdn.astype(jnp.bfloat16), w2_ref[...],
                  preferred_element_type=jnp.float32) + b2_ref[0]
    out = mlp + x2
    if apply_final_ln:                 # final model-level LayerNorm fused in
        out = _layernorm(out, fw_ref[0], fb_ref[0])
    x_out_ref[...] = out.reshape(bt, seq, C)


# ---------------------------------------------------------------------------
# Wrappers
# ---------------------------------------------------------------------------
def _pick_bt(B, N):
    # Fold batch rows so the projection matmuls present ~>=128 rows to the MXU,
    # while keeping >= 2 grid steps so v7x's second TensorCore has work.
    if B <= 1:
        return 1
    bt = max(1, min(B // 2, max(1, 128 // max(N, 1))))
    while B % bt:
        bt -= 1
    return max(bt, 1)


def run_mfi_block(Q, K, V, x, p, fin, *, heads, bt, apply_final_ln):
    B, N, C = x.shape
    D = C // heads
    hid = p["w1"].shape[1]
    grid = (B // bt,)

    bnc = pl.BlockSpec((bt, N, C), lambda i: (i, 0, 0))

    def const_spec(shape):
        # constant index_map -> block is DMA'd once, not per grid step
        return pl.BlockSpec(shape, lambda i: (0, 0))

    kern = functools.partial(mfi_block_kernel, heads=heads, head_size=D,
                             bt=bt, seq=N, apply_final_ln=apply_final_ln)

    in_specs = [
        bnc, bnc, bnc, bnc,                              # Q, K, V state + x, (B,N,C)
        const_spec((1, C)), const_spec((1, C)),          # block layernorm w, b
        const_spec((C, C)), const_spec((1, C)),          # wq (in,out) bf16, bq f32
        const_spec((C, C)), const_spec((1, C)),          # wk, bk
        const_spec((C, C)), const_spec((1, C)),          # wv, bv
        const_spec((C, C)), const_spec((1, C)),          # wo, bo
        const_spec((C, hid)), const_spec((1, hid)),      # mlp linear1
        const_spec((hid, C)), const_spec((1, C)),        # mlp linear2
        const_spec((1, C)), const_spec((1, C)),          # final model layernorm w, b
    ]
    out_specs = [bnc, bnc, bnc, bnc]
    out_shape = tuple(jax.ShapeDtypeStruct((B, N, C), jnp.float32) for _ in range(4))

    return pl.pallas_call(
        kern,
        grid=grid,
        in_specs=in_specs,
        out_specs=out_specs,
        out_shape=out_shape,
        scratch_shapes=[pltpu.VMEM((bt, N, C), jnp.float32)],   # ctx assembly
        compiler_params=pltpu.CompilerParams(
            dimension_semantics=("parallel",),
            vmem_limit_bytes=32 * 1024 * 1024,
        ),
    )(Q, K, V, x,
      p["ln_w"], p["ln_b"],
      p["wq"], p["bq"], p["wk"], p["bk"],
      p["wv"], p["bv"], p["wo"], p["bo"],
      p["w1"], p["b1"], p["w2"], p["b2"],
      fin["ln_w"], fin["ln_b"])


def mfi_model_forward(Query, Key, Value, x, layer_params, final_ln, heads, bt=None):
    B, N, C = x.shape
    if bt is None:
        bt = _pick_bt(B, N)
    # Q/K/V state stays lane-dense (B, N, C); column h*(C//heads)+d corresponds to
    # the (B, H, N, D) view used by the PyTorch module, so no transposes are needed.
    Q, K, V = Query, Key, Value
    n_layers = len(layer_params)
    for li, p in enumerate(layer_params):
        x, Q, K, V = run_mfi_block(Q, K, V, x, p, final_ln,
                                   heads=heads, bt=bt,
                                   apply_final_ln=(li == n_layers - 1))
    return x
    # TODO(synk): cross-call prefetch of layer i+1 weights (semaphore future) would
    # hide weight HBM traffic behind compute at realistic C/hid.


# ---------------------------------------------------------------------------
# Deterministic parameter init (PyTorch Linear-style uniform bounds).
# Weights are pre-transposed to (in, out) and stored as bf16 (MXU operand dtype);
# biases / layernorm params stay f32.
# ---------------------------------------------------------------------------
def init_params(key, layers, C, hidden):
    def lin(k, out_dim, in_dim):
        bound = 1.0 / math.sqrt(in_dim)
        kw, kb = jax.random.split(k)
        w = jax.random.uniform(kw, (out_dim, in_dim), jnp.float32, -bound, bound)
        b = jax.random.uniform(kb, (out_dim,), jnp.float32, -bound, bound)
        return w, b

    def bf16_T(w):
        return jnp.asarray(w.T, dtype=jnp.bfloat16)

    params = []
    for _ in range(layers):
        key, k_qk, k_v, k_o, k_1, k_2 = jax.random.split(key, 6)
        qk_w, qk_b = lin(k_qk, 2 * C, C)     # fused mfi_qk: (2C, C)
        wv, bv = lin(k_v, C, C)
        wo, bo = lin(k_o, C, C)
        w1, b1 = lin(k_1, hidden, C)
        w2, b2 = lin(k_2, C, hidden)
        # De-interleave mfi_qk: output feature h*2D+2d -> Q(h,d), h*2D+2d+1 -> K(h,d),
        # matching view(B,N,H,D,2).permute(4,0,2,1,3) in the PyTorch module.
        params.append(dict(
            ln_w=jnp.ones((1, C), jnp.float32),
            ln_b=jnp.zeros((1, C), jnp.float32),
            wq=bf16_T(qk_w[0::2]), bq=qk_b[0::2].reshape(1, C),
            wk=bf16_T(qk_w[1::2]), bk=qk_b[1::2].reshape(1, C),
            wv=bf16_T(wv), bv=bv.reshape(1, C),
            wo=bf16_T(wo), bo=bo.reshape(1, C),
            w1=bf16_T(w1), b1=b1.reshape(1, hidden),
            w2=bf16_T(w2), b2=b2.reshape(1, C),
        ))
    final = dict(ln_w=jnp.ones((1, C), jnp.float32),
                 ln_b=jnp.zeros((1, C), jnp.float32))
    return params, final


# ---------------------------------------------------------------------------
# Pure-JAX f32 reference (mirrors the PyTorch forward, dropout = identity).
# Weights (stored bf16) are upcast to f32 here; the kernel additionally rounds
# activations to bf16 for MXU matmuls, which is the only numerical difference.
# ---------------------------------------------------------------------------
def mfi_reference(Query, Key, Value, x, layer_params, final_ln, heads):
    B, N, C = x.shape
    D = C // heads
    Q = Query.reshape(B, N, heads, D).transpose(0, 2, 1, 3)
    K = Key.reshape(B, N, heads, D).transpose(0, 2, 1, 3)
    V = Value.reshape(B, N, heads, D).transpose(0, 2, 1, 3)

    def ln(v, w, b):
        mu = jnp.mean(v, -1, keepdims=True)
        var = jnp.mean((v - mu) ** 2, -1, keepdims=True)
        return (v - mu) / jnp.sqrt(var + LN_EPS) * w + b

    f32 = lambda a: jnp.asarray(a, jnp.float32)

    for p in layer_params:
        x1 = x
        xn = ln(x, p["ln_w"][0], p["ln_b"][0])
        q_full = xn @ f32(p["wq"]) + p["bq"][0]
        k_full = xn @ f32(p["wk"]) + p["bk"][0]
        v_full = xn @ f32(p["wv"]) + p["bv"][0]
        Qn = q_full.reshape(B, N, heads, D).transpose(0, 2, 1, 3)
        Kn = k_full.reshape(B, N, heads, D).transpose(0, 2, 1, 3)
        Vn = v_full.reshape(B, N, heads, D).transpose(0, 2, 1, 3)
        Q = A_COEF * Qn + B_COEF * Q
        K = A_COEF * Kn + B_COEF * K
        V = B_COEF * V + A_COEF * Vn
        attn = jnp.einsum("bhnd,bhmd->bhnm", Q, K) / math.sqrt(D)
        attn = jax.nn.softmax(attn, axis=-1)
        ctx = jnp.einsum("bhnm,bhmd->bhnd", attn, V)
        ctx = ctx.transpose(0, 2, 1, 3).reshape(B, N, C)
        x = x1 + ctx @ f32(p["wo"]) + p["bo"][0]
        x2 = x
        xn2 = ln(x, p["ln_w"][0], p["ln_b"][0])
        h = jax.nn.gelu(xn2 @ f32(p["w1"]) + p["b1"][0], approximate=False)
        x = h @ f32(p["w2"]) + p["b2"][0] + x2
    return ln(x, final_ln["ln_w"][0], final_ln["ln_b"][0])


if __name__ == "__main__":
    B, N, C = 2, 8, 32          # batch, seq, embed
    H, HID, LAYERS = 4, 64, 2   # heads, mlp hidden, mfi_layers

    key = jax.random.PRNGKey(0)
    k_q, k_k, k_v, k_x, k_p = jax.random.split(key, 5)
    Query = jax.random.normal(k_q, (B, N, C), jnp.float32)
    Key = jax.random.normal(k_k, (B, N, C), jnp.float32)
    Value = jax.random.normal(k_v, (B, N, C), jnp.float32)
    x = jax.random.normal(k_x, (B, N, C), jnp.float32)

    layer_params, final_ln = init_params(k_p, LAYERS, C, HID)

    # jit the whole layer stack: one executable, no per-layer host round-trips.
    fwd = jax.jit(mfi_model_forward, static_argnums=(6, 7))
    out = fwd(Query, Key, Value, x, layer_params, final_ln, H, None)
    out = jax.block_until_ready(out)

    ref = mfi_reference(Query, Key, Value, x, layer_params, final_ln, H)
    assert out.shape == (B, N, C)
    max_err = float(jnp.max(jnp.abs(out - ref)))
    assert jnp.allclose(out, ref, rtol=3e-2, atol=3e-2), \
        f"mismatch vs reference (max abs err {max_err:.4e})"

    print("KERNEL_OK")
</pallas_src>

<mosaic_0001>
module attributes {stable_mosaic.version = 11 : i64} {
  func.func @mfi_block_kernel(%arg0: i32, %arg1: memref<1x8x32xf32, #tpu.memory_space<vmem>>, %arg2: memref<1x8x32xf32, #tpu.memory_space<vmem>>, %arg3: memref<1x8x32xf32, #tpu.memory_space<vmem>>, %arg4: memref<1x8x32xf32, #tpu.memory_space<vmem>>, %arg5: memref<1x32xf32, #tpu.memory_space<vmem>>, %arg6: memref<1x32xf32, #tpu.memory_space<vmem>>, %arg7: memref<32x32xbf16, #tpu.memory_space<vmem>>, %arg8: memref<1x32xf32, #tpu.memory_space<vmem>>, %arg9: memref<32x32xbf16, #tpu.memory_space<vmem>>, %arg10: memref<1x32xf32, #tpu.memory_space<vmem>>, %arg11: memref<32x32xbf16, #tpu.memory_space<vmem>>, %arg12: memref<1x32xf32, #tpu.memory_space<vmem>>, %arg13: memref<32x32xbf16, #tpu.memory_space<vmem>>, %arg14: memref<1x32xf32, #tpu.memory_space<vmem>>, %arg15: memref<32x64xbf16, #tpu.memory_space<vmem>>, %arg16: memref<1x64xf32, #tpu.memory_space<vmem>>, %arg17: memref<64x32xbf16, #tpu.memory_space<vmem>>, %arg18: memref<1x32xf32, #tpu.memory_space<vmem>>, %arg19: memref<1x32xf32, #tpu.memory_space<vmem>>, %arg20: memref<1x32xf32, #tpu.memory_space<vmem>>, %arg21: memref<1x8x32xf32, #tpu.memory_space<vmem>>, %arg22: memref<1x8x32xf32, #tpu.memory_space<vmem>>, %arg23: memref<1x8x32xf32, #tpu.memory_space<vmem>>, %arg24: memref<1x8x32xf32, #tpu.memory_space<vmem>>, %arg25: memref<1x8x32xf32, #tpu.memory_space<vmem>>) attributes {dimension_semantics = [#tpu.dimension_semantics<parallel>], iteration_bounds = array<i64: 2>, scalar_prefetch = 0 : i64, scratch_operands = 1 : i64, tpu.core_type = #tpu.core_type<tc>, window_params = [{transform_indices = @transform_0, window_bounds = array<i64: 1, 8, 32>}, {transform_indices = @transform_1, window_bounds = array<i64: 1, 8, 32>}, {transform_indices = @transform_2, window_bounds = array<i64: 1, 8, 32>}, {transform_indices = @transform_3, window_bounds = array<i64: 1, 8, 32>}, {pipeline_mode = #tpu.pipeline_mode<synchronous>, transform_indices = @transform_4, window_bounds = array<i64: 1, 32>}, {pipeline_mode = #tpu.pipeline_mode<synchronous>, transform_indices = @transform_5, window_bounds = array<i64: 1, 32>}, {pipeline_mode = #tpu.pipeline_mode<synchronous>, transform_indices = @transform_6, window_bounds = array<i64: 32, 32>}, {pipeline_mode = #tpu.pipeline_mode<synchronous>, transform_indices = @transform_7, window_bounds = array<i64: 1, 32>}, {pipeline_mode = #tpu.pipeline_mode<synchronous>, transform_indices = @transform_8, window_bounds = array<i64: 32, 32>}, {pipeline_mode = #tpu.pipeline_mode<synchronous>, transform_indices = @transform_9, window_bounds = array<i64: 1, 32>}, {pipeline_mode = #tpu.pipeline_mode<synchronous>, transform_indices = @transform_10, window_bounds = array<i64: 32, 32>}, {pipeline_mode = #tpu.pipeline_mode<synchronous>, transform_indices = @transform_11, window_bounds = array<i64: 1, 32>}, {pipeline_mode = #tpu.pipeline_mode<synchronous>, transform_indices = @transform_12, window_bounds = array<i64: 32, 32>}, {pipeline_mode = #tpu.pipeline_mode<synchronous>, transform_indices = @transform_13, window_bounds = array<i64: 1, 32>}, {pipeline_mode = #tpu.pipeline_mode<synchronous>, transform_indices = @transform_14, window_bounds = array<i64: 32, 64>}, {pipeline_mode = #tpu.pipeline_mode<synchronous>, transform_indices = @transform_15, window_bounds = array<i64: 1, 64>}, {pipeline_mode = #tpu.pipeline_mode<synchronous>, transform_indices = @transform_16, window_bounds = array<i64: 64, 32>}, {pipeline_mode = #tpu.pipeline_mode<synchronous>, transform_indices = @transform_17, window_bounds = array<i64: 1, 32>}, {pipeline_mode = #tpu.pipeline_mode<synchronous>, transform_indices = @transform_18, window_bounds = array<i64: 1, 32>}, {pipeline_mode = #tpu.pipeline_mode<synchronous>, transform_indices = @transform_19, window_bounds = array<i64: 1, 32>}, {transform_indices = @transform_20, window_bounds = array<i64: 1, 8, 32>}, {transform_indices = @transform_21, window_bounds = array<i64: 1, 8, 32>}, {transform_indices = @transform_22, window_bounds = array<i64: 1, 8, 32>}, {transform_indices = @transform_23, window_bounds = array<i64: 1, 8, 32>}]} {
    %c0 = arith.constant 0 : index
    %c0_0 = arith.constant 0 : index
    %c0_1 = arith.constant 0 : index
    %0 = vector.load %arg4[%c0, %c0_0, %c0_1] : memref<1x8x32xf32, #tpu.memory_space<vmem>>, vector<1x8x32xf32>
    %1 = vector.shape_cast %0 : vector<1x8x32xf32> to vector<8x32xf32>
    %c0_2 = arith.constant 0 : index
    %c0_3 = arith.constant 0 : index
    %2 = vector.load %arg5[%c0_2, %c0_3] : memref<1x32xf32, #tpu.memory_space<vmem>>, vector<1x32xf32>
    %3 = vector.shape_cast %2 : vector<1x32xf32> to vector<32xf32>
    %c0_4 = arith.constant 0 : index
    %c0_5 = arith.constant 0 : index
    %4 = vector.load %arg6[%c0_4, %c0_5] : memref<1x32xf32, #tpu.memory_space<vmem>>, vector<1x32xf32>
    %5 = vector.shape_cast %4 : vector<1x32xf32> to vector<32xf32>
    %cst = arith.constant dense<0.000000e+00> : vector<8xf32>
    %6 = vector.multi_reduction <add>, %1, %cst [1] : vector<8x32xf32> to vector<8xf32>
    %7 = vector.shape_cast %6 : vector<8xf32> to vector<8x1xf32>
    %cst_6 = arith.constant 3.200000e+01 : f32
    %8 = vector.broadcast %cst_6 : f32 to vector<8x1xf32>
    %9 = arith.divf %7, %8 : vector<8x1xf32>
    %10 = vector.broadcast %9 : vector<8x1xf32> to vector<8x32xf32>
    %11 = arith.subf %1, %10 : vector<8x32xf32>
    %12 = arith.mulf %11, %11 : vector<8x32xf32>
    %cst_7 = arith.constant dense<0.000000e+00> : vector<8xf32>
    %13 = vector.multi_reduction <add>, %12, %cst_7 [1] : vector<8x32xf32> to vector<8xf32>
    %14 = vector.shape_cast %13 : vector<8xf32> to vector<8x1xf32>
    %cst_8 = arith.constant 3.200000e+01 : f32
    %15 = vector.broadcast %cst_8 : f32 to vector<8x1xf32>
    %16 = arith.divf %14, %15 : vector<8x1xf32>
    %17 = vector.broadcast %9 : vector<8x1xf32> to vector<8x32xf32>
    %18 = arith.subf %1, %17 : vector<8x32xf32>
    %cst_9 = arith.constant 9.99999974E-6 : f32
    %19 = vector.broadcast %cst_9 : f32 to vector<8x1xf32>
    %20 = arith.addf %16, %19 : vector<8x1xf32>
    %21 = math.rsqrt %20 : vector<8x1xf32>
    %22 = vector.broadcast %21 : vector<8x1xf32> to vector<8x32xf32>
    %23 = arith.mulf %18, %22 : vector<8x32xf32>
    %24 = vector.shape_cast %3 : vector<32xf32> to vector<1x32xf32>
    %25 = vector.broadcast %24 : vector<1x32xf32> to vector<8x32xf32>
    %26 = arith.mulf %23, %25 : vector<8x32xf32>
    %27 = vector.shape_cast %5 : vector<32xf32> to vector<1x32xf32>
    %28 = vector.broadcast %27 : vector<1x32xf32> to vector<8x32xf32>
    %29 = arith.addf %26, %28 : vector<8x32xf32>
    %30 = arith.truncf %29 : vector<8x32xf32> to vector<8x32xbf16>
    %c0_10 = arith.constant 0 : index
    %c0_11 = arith.constant 0 : index
    %31 = vector.load %arg7[%c0_10, %c0_11] : memref<32x32xbf16, #tpu.memory_space<vmem>>, vector<32x32xbf16>
    %cst_12 = arith.constant dense<0.000000e+00> : vector<8x32xf32>
    %32 = tpu.matmul %30, %31, %cst_12 {dimension_numbers = #tpu.dot_dimension_numbers<[1], [0], [0], [1], [0, 0, 1, 1], [], []>} : vector<8x32xbf16>, vector<32x32xbf16>, vector<8x32xf32> -> vector<8x32xf32>
    %c0_13 = arith.constant 0 : index
    %c0_14 = arith.constant 0 : index
    %33 = vector.load %arg8[%c0_13, %c0_14] : memref<1x32xf32, #tpu.memory_space<vmem>>, vector<1x32xf32>
    %34 = vector.shape_cast %33 : vector<1x32xf32> to vector<32xf32>
    %35 = vector.shape_cast %34 : vector<32xf32> to vector<1x32xf32>
    %36 = vector.broadcast %35 : vector<1x32xf32> to vector<8x32xf32>
    %37 = arith.addf %32, %36 : vector<8x32xf32>
    %c0_15 = arith.constant 0 : index
    %c0_16 = arith.constant 0 : index
    %38 = vector.load %arg9[%c0_15, %c0_16] : memref<32x32xbf16, #tpu.memory_space<vmem>>, vector<32x32xbf16>
    %cst_17 = arith.constant dense<0.000000e+00> : vector<8x32xf32>
    %39 = tpu.matmul %30, %38, %cst_17 {dimension_numbers = #tpu.dot_dimension_numbers<[1], [0], [0], [1], [0, 0, 1, 1], [], []>} : vector<8x32xbf16>, vector<32x32xbf16>, vector<8x32xf32> -> vector<8x32xf32>
    %c0_18 = arith.constant 0 : index
    %c0_19 = arith.constant 0 : index
    %40 = vector.load %arg10[%c0_18, %c0_19] : memref<1x32xf32, #tpu.memory_space<vmem>>, vector<1x32xf32>
    %41 = vector.shape_cast %40 : vector<1x32xf32> to vector<32xf32>
    %42 = vector.shape_cast %41 : vector<32xf32> to vector<1x32xf32>
    %43 = vector.broadcast %42 : vector<1x32xf32> to vector<8x32xf32>
    %44 = arith.addf %39, %43 : vector<8x32xf32>
    %c0_20 = arith.constant 0 : index
    %c0_21 = arith.constant 0 : index
    %45 = vector.load %arg11[%c0_20, %c0_21] : memref<32x32xbf16, #tpu.memory_space<vmem>>, vector<32x32xbf16>
    %cst_22 = arith.constant dense<0.000000e+00> : vector<8x32xf32>
    %46 = tpu.matmul %30, %45, %cst_22 {dimension_numbers = #tpu.dot_dimension_numbers<[1], [0], [0], [1], [0, 0, 1, 1], [], []>} : vector<8x32xbf16>, vector<32x32xbf16>, vector<8x32xf32> -> vector<8x32xf32>
    %c0_23 = arith.constant 0 : index
    %c0_24 = arith.constant 0 : index
    %47 = vector.load %arg12[%c0_23, %c0_24] : memref<1x32xf32, #tpu.memory_space<vmem>>, vector<1x32xf32>
    %48 = vector.shape_cast %47 : vector<1x32xf32> to vector<32xf32>
    %49 = vector.shape_cast %48 : vector<32xf32> to vector<1x32xf32>
    %50 = vector.broadcast %49 : vector<1x32xf32> to vector<8x32xf32>
    %51 = arith.addf %46, %50 : vector<8x32xf32>
    %cst_25 = arith.constant 0.699999988 : f32
    %52 = vector.broadcast %cst_25 : f32 to vector<8x32xf32>
    %53 = arith.mulf %52, %37 : vector<8x32xf32>
    %c0_26 = arith.constant 0 : index
    %c0_27 = arith.constant 0 : index
    %c0_28 = arith.constant 0 : index
    %54 = vector.load %arg1[%c0_26, %c0_27, %c0_28] : memref<1x8x32xf32, #tpu.memory_space<vmem>>, vector<1x8x32xf32>
    %55 = vector.shape_cast %54 : vector<1x8x32xf32> to vector<8x32xf32>
    %cst_29 = arith.constant 3.000000e-01 : f32
    %56 = vector.broadcast %cst_29 : f32 to vector<8x32xf32>
    %57 = arith.mulf %56, %55 : vector<8x32xf32>
    %58 = arith.addf %53, %57 : vector<8x32xf32>
    %cst_30 = arith.constant 0.699999988 : f32
    %59 = vector.broadcast %cst_30 : f32 to vector<8x32xf32>
    %60 = arith.mulf %59, %44 : vector<8x32xf32>
    %c0_31 = arith.constant 0 : index
    %c0_32 = arith.constant 0 : index
    %c0_33 = arith.constant 0 : index
    %61 = vector.load %arg2[%c0_31, %c0_32, %c0_33] : memref<1x8x32xf32, #tpu.memory_space<vmem>>, vector<1x8x32xf32>
    %62 = vector.shape_cast %61 : vector<1x8x32xf32> to vector<8x32xf32>
    %cst_34 = arith.constant 3.000000e-01 : f32
    %63 = vector.broadcast %cst_34 : f32 to vector<8x32xf32>
    %64 = arith.mulf %63, %62 : vector<8x32xf32>
    %65 = arith.addf %60, %64 : vector<8x32xf32>
    %c0_35 = arith.constant 0 : index
    %c0_36 = arith.constant 0 : index
    %c0_37 = arith.constant 0 : index
    %66 = vector.load %arg3[%c0_35, %c0_36, %c0_37] : memref<1x8x32xf32, #tpu.memory_space<vmem>>, vector<1x8x32xf32>
    %67 = vector.shape_cast %66 : vector<1x8x32xf32> to vector<8x32xf32>
    %cst_38 = arith.constant 3.000000e-01 : f32
    %68 = vector.broadcast %cst_38 : f32 to vector<8x32xf32>
    %69 = arith.mulf %68, %67 : vector<8x32xf32>
    %cst_39 = arith.constant 0.699999988 : f32
    %70 = vector.broadcast %cst_39 : f32 to vector<8x32xf32>
    %71 = arith.mulf %70, %51 : vector<8x32xf32>
    %72 = arith.addf %69, %71 : vector<8x32xf32>
    %73 = vector.shape_cast %58 : vector<8x32xf32> to vector<1x8x32xf32>
    %c0_40 = arith.constant 0 : index
    %c0_41 = arith.constant 0 : index
    %c0_42 = arith.constant 0 : index
    %74 = vector.load %arg22[%c0_40, %c0_41, %c0_42] : memref<1x8x32xf32, #tpu.memory_space<vmem>>, vector<1x8x32xf32>
    tpu.vector_store %arg22[%c0_40, %c0_41, %c0_42], %73 {strides = array<i32>} : memref<1x8x32xf32, #tpu.memory_space<vmem>>, vector<1x8x32xf32>,
    %75 = vector.shape_cast %65 : vector<8x32xf32> to vector<1x8x32xf32>
    %c0_43 = arith.constant 0 : index
    %c0_44 = arith.constant 0 : index
    %c0_45 = arith.constant 0 : index
    %76 = vector.load %arg23[%c0_43, %c0_44, %c0_45] : memref<1x8x32xf32, #tpu.memory_space<vmem>>, vector<1x8x32xf32>
    tpu.vector_store %arg23[%c0_43, %c0_44, %c0_45], %75 {strides = array<i32>} : memref<1x8x32xf32, #tpu.memory_space<vmem>>, vector<1x8x32xf32>,
    %77 = vector.shape_cast %72 : vector<8x32xf32> to vector<1x8x32xf32>
    %c0_46 = arith.constant 0 : index
    %c0_47 = arith.constant 0 : index
    %c0_48 = arith.constant 0 : index
    %78 = vector.load %arg24[%c0_46, %c0_47, %c0_48] : memref<1x8x32xf32, #tpu.memory_space<vmem>>, vector<1x8x32xf32>
    tpu.vector_store %arg24[%c0_46, %c0_47, %c0_48], %77 {strides = array<i32>} : memref<1x8x32xf32, #tpu.memory_space<vmem>>, vector<1x8x32xf32>,
    %cst_49 = arith.constant 0.353553385 : f32
    %79 = vector.broadcast %cst_49 : f32 to vector<8x32xf32>
    %80 = arith.mulf %58, %79 : vector<8x32xf32>
    %81 = arith.truncf %80 : vector<8x32xf32> to vector<8x32xbf16>
    %82 = arith.truncf %65 : vector<8x32xf32> to vector<8x32xbf16>
    %83 = arith.truncf %72 : vector<8x32xf32> to vector<8x32xbf16>
    %84 = vector.extract_strided_slice %81 {offsets = [0, 0], sizes = [8, 8], strides = [1, 1]} : vector<8x32xbf16> to vector<8x8xbf16>
    %85 = vector.extract_strided_slice %82 {offsets = [0, 0], sizes = [8, 8], strides = [1, 1]} : vector<8x32xbf16> to vector<8x8xbf16>
    %86 = vector.extract_strided_slice %83 {offsets = [0, 0], sizes = [8, 8], strides = [1, 1]} : vector<8x32xbf16> to vector<8x8xbf16>
    %cst_50 = arith.constant dense<0.000000e+00> : vector<8x8xf32>
    %87 = tpu.matmul %84, %85, %cst_50 {dimension_numbers = #tpu.dot_dimension_numbers<[1], [1], [0], [0], [0, 0, 1, 0], [], []>} : vector<8x8xbf16>, vector<8x8xbf16>, vector<8x8xf32> -> vector<8x8xf32>
    %cst_51 = arith.constant dense<0xFF800000> : vector<8xf32>
    %88 = vector.multi_reduction <maximumf>, %87, %cst_51 [1] : vector<8x8xf32> to vector<8xf32>
    %89 = vector.shape_cast %88 : vector<8xf32> to vector<8x1xf32>
    %90 = vector.broadcast %89 : vector<8x1xf32> to vector<8x8xf32>
    %91 = arith.subf %87, %90 : vector<8x8xf32>
    %92 = math.exp %91 : vector<8x8xf32>
    %cst_52 = arith.constant dense<0.000000e+00> : vector<8xf32>
    %93 = vector.multi_reduction <add>, %92, %cst_52 [1] : vector<8x8xf32> to vector<8xf32>
    %94 = vector.shape_cast %93 : vector<8xf32> to vector<8x1xf32>
    %95 = tpu.reciprocal %94 {approx = true} : vector<8x1xf32> -> vector<8x1xf32>
    %96 = vector.broadcast %95 : vector<8x1xf32> to vector<8x8xf32>
    %97 = arith.mulf %92, %96 : vector<8x8xf32>
    %98 = arith.truncf %97 : vector<8x8xf32> to vector<8x8xbf16>
    %cst_53 = arith.constant dense<0.000000e+00> : vector<8x8xf32>
    %99 = tpu.matmul %98, %86, %cst_53 {dimension_numbers = #tpu.dot_dimension_numbers<[1], [0], [0], [1], [0, 0, 1, 1], [], []>} : vector<8x8xbf16>, vector<8x8xbf16>, vector<8x8xf32> -> vector<8x8xf32>
    %c0_54 = arith.constant 0 : index
    %c0_55 = arith.constant 0 : index
    %c0_56 = arith.constant 0 : index
    %100 = vector.load %arg25[%c0_54, %c0_55, %c0_56] : memref<1x8x32xf32, #tpu.memory_space<vmem>>, vector<1x8x8xf32>
    %101 = vector.shape_cast %100 : vector<1x8x8xf32> to vector<8x8xf32>
    %102 = vector.shape_cast %99 : vector<8x8xf32> to vector<1x8x8xf32>
    tpu.vector_store %arg25[%c0_54, %c0_55, %c0_56], %102 {strides = array<i32>} : memref<1x8x32xf32, #tpu.memory_space<vmem>>, vector<1x8x8xf32>,
    %103 = vector.extract_strided_slice %81 {offsets = [0, 8], sizes = [8, 8], strides = [1, 1]} : vector<8x32xbf16> to vector<8x8xbf16>
    %104 = vector.extract_strided_slice %82 {offsets = [0, 8], sizes = [8, 8], strides = [1, 1]} : vector<8x32xbf16> to vector<8x8xbf16>
    %105 = vector.extract_strided_slice %83 {offsets = [0, 8], sizes = [8, 8], strides = [1, 1]} : vector<8x32xbf16> to vector<8x8xbf16>
    %cst_57 = arith.constant dense<0.000000e+00> : vector<8x8xf32>
    %106 = tpu.matmul %103, %104, %cst_57 {dimension_numbers = #tpu.dot_dimension_numbers<[1], [1], [0], [0], [0, 0, 1, 0], [], []>} : vector<8x8xbf16>, vector<8x8xbf16>, vector<8x8xf32> -> vector<8x8xf32>
    %cst_58 = arith.constant dense<0xFF800000> : vector<8xf32>
    %107 = vector.multi_reduction <maximumf>, %106, %cst_58 [1] : vector<8x8xf32> to vector<8xf32>
    %108 = vector.shape_cast %107 : vector<8xf32> to vector<8x1xf32>
    %109 = vector.broadcast %108 : vector<8x1xf32> to vector<8x8xf32>
    %110 = arith.subf %106, %109 : vector<8x8xf32>
    %111 = math.exp %110 : vector<8x8xf32>
    %cst_59 = arith.constant dense<0.000000e+00> : vector<8xf32>
    %112 = vector.multi_reduction <add>, %111, %cst_59 [1] : vector<8x8xf32> to vector<8xf32>
    %113 = vector.shape_cast %112 : vector<8xf32> to vector<8x1xf32>
    %114 = tpu.reciprocal %113 {approx = true} : vector<8x1xf32> -> vector<8x1xf32>
    %115 = vector.broadcast %114 : vector<8x1xf32> to vector<8x8xf32>
    %116 = arith.mulf %111, %115 : vector<8x8xf32>
    %117 = arith.truncf %116 : vector<8x8xf32> to vector<8x8xbf16>
    %cst_60 = arith.constant dense<0.000000e+00> : vector<8x8xf32>
    %118 = tpu.matmul %117, %105, %cst_60 {dimension_numbers = #tpu.dot_dimension_numbers<[1], [0], [0], [1], [0, 0, 1, 1], [], []>} : vector<8x8xbf16>, vector<8x8xbf16>, vector<8x8xf32> -> vector<8x8xf32>
    %c0_61 = arith.constant 0 : index
    %c0_62 = arith.constant 0 : index
    %c8 = arith.constant 8 : index
    %119 = vector.load %arg25[%c0_61, %c0_62, %c8] : memref<1x8x32xf32, #tpu.memory_space<vmem>>, vector<1x8x8xf32>
    %120 = vector.shape_cast %119 : vector<1x8x8xf32> to vector<8x8xf32>
    %121 = vector.shape_cast %118 : vector<8x8xf32> to vector<1x8x8xf32>
    tpu.vector_store %arg25[%c0_61, %c0_62, %c8], %121 {strides = array<i32>} : memref<1x8x32xf32, #tpu.memory_space<vmem>>, vector<1x8x8xf32>,
    %122 = vector.extract_strided_slice %81 {offsets = [0, 16], sizes = [8, 8], strides = [1, 1]} : vector<8x32xbf16> to vector<8x8xbf16>
    %123 = vector.extract_strided_slice %82 {offsets = [0, 16], sizes = [8, 8], strides = [1, 1]} : vector<8x32xbf16> to vector<8x8xbf16>
    %124 = vector.extract_strided_slice %83 {offsets = [0, 16], sizes = [8, 8], strides = [1, 1]} : vector<8x32xbf16> to vector<8x8xbf16>
    %cst_63 = arith.constant dense<0.000000e+00> : vector<8x8xf32>
    %125 = tpu.matmul %122, %123, %cst_63 {dimension_numbers = #tpu.dot_dimension_numbers<[1], [1], [0], [0], [0, 0, 1, 0], [], []>} : vector<8x8xbf16>, vector<8x8xbf16>, vector<8x8xf32> -> vector<8x8xf32>
    %cst_64 = arith.constant dense<0xFF800000> : vector<8xf32>
    %126 = vector.multi_reduction <maximumf>, %125, %cst_64 [1] : vector<8x8xf32> to vector<8xf32>
    %127 = vector.shape_cast %126 : vector<8xf32> to vector<8x1xf32>
    %128 = vector.broadcast %127 : vector<8x1xf32> to vector<8x8xf32>
    %129 = arith.subf %125, %128 : vector<8x8xf32>
    %130 = math.exp %129 : vector<8x8xf32>
    %cst_65 = arith.constant dense<0.000000e+00> : vector<8xf32>
    %131 = vector.multi_reduction <add>, %130, %cst_65 [1] : vector<8x8xf32> to vector<8xf32>
    %132 = vector.shape_cast %131 : vector<8xf32> to vector<8x1xf32>
    %133 = tpu.reciprocal %132 {approx = true} : vector<8x1xf32> -> vector<8x1xf32>
    %134 = vector.broadcast %133 : vector<8x1xf32> to vector<8x8xf32>
    %135 = arith.mulf %130, %134 : vector<8x8xf32>
    %136 = arith.truncf %135 : vector<8x8xf32> to vector<8x8xbf16>
    %cst_66 = arith.constant dense<0.000000e+00> : vector<8x8xf32>
    %137 = tpu.matmul %136, %124, %cst_66 {dimension_numbers = #tpu.dot_dimension_numbers<[1], [0], [0], [1], [0, 0, 1, 1], [], []>} : vector<8x8xbf16>, vector<8x8xbf16>, vector<8x8xf32> -> vector<8x8xf32>
    %c0_67 = arith.constant 0 : index
    %c0_68 = arith.constant 0 : index
    %c16 = arith.constant 16 : index
    %138 = vector.load %arg25[%c0_67, %c0_68, %c16] : memref<1x8x32xf32, #tpu.memory_space<vmem>>, vector<1x8x8xf32>
    %139 = vector.shape_cast %138 : vector<1x8x8xf32> to vector<8x8xf32>
    %140 = vector.shape_cast %137 : vector<8x8xf32> to vector<1x8x8xf32>
    tpu.vector_store %arg25[%c0_67, %c0_68, %c16], %140 {strides = array<i32>} : memref<1x8x32xf32, #tpu.memory_space<vmem>>, vector<1x8x8xf32>,
    %141 = vector.extract_strided_slice %81 {offsets = [0, 24], sizes = [8, 8], strides = [1, 1]} : vector<8x32xbf16> to vector<8x8xbf16>
    %142 = vector.extract_strided_slice %82 {offsets = [0, 24], sizes = [8, 8], strides = [1, 1]} : vector<8x32xbf16> to vector<8x8xbf16>
    %143 = vector.extract_strided_slice %83 {offsets = [0, 24], sizes = [8, 8], strides = [1, 1]} : vector<8x32xbf16> to vector<8x8xbf16>
    %cst_69 = arith.constant dense<0.000000e+00> : vector<8x8xf32>
    %144 = tpu.matmul %141, %142, %cst_69 {dimension_numbers = #tpu.dot_dimension_numbers<[1], [1], [0], [0], [0, 0, 1, 0], [], []>} : vector<8x8xbf16>, vector<8x8xbf16>, vector<8x8xf32> -> vector<8x8xf32>
    %cst_70 = arith.constant dense<0xFF800000> : vector<8xf32>
    %145 = vector.multi_reduction <maximumf>, %144, %cst_70 [1] : vector<8x8xf32> to vector<8xf32>
    %146 = vector.shape_cast %145 : vector<8xf32> to vector<8x1xf32>
    %147 = vector.broadcast %146 : vector<8x1xf32> to vector<8x8xf32>
    %148 = arith.subf %144, %147 : vector<8x8xf32>
    %149 = math.exp %148 : vector<8x8xf32>
    %cst_71 = arith.constant dense<0.000000e+00> : vector<8xf32>
    %150 = vector.multi_reduction <add>, %149, %cst_71 [1] : vector<8x8xf32> to vector<8xf32>
    %151 = vector.shape_cast %150 : vector<8xf32> to vector<8x1xf32>
    %152 = tpu.reciprocal %151 {approx = true} : vector<8x1xf32> -> vector<8x1xf32>
    %153 = vector.broadcast %152 : vector<8x1xf32> to vector<8x8xf32>
    %154 = arith.mulf %149, %153 : vector<8x8xf32>
    %155 = arith.truncf %154 : vector<8x8xf32> to vector<8x8xbf16>
    %cst_72 = arith.constant dense<0.000000e+00> : vector<8x8xf32>
    %156 = tpu.matmul %155, %143, %cst_72 {dimension_numbers = #tpu.dot_dimension_numbers<[1], [0], [0], [1], [0, 0, 1, 1], [], []>} : vector<8x8xbf16>, vector<8x8xbf16>, vector<8x8xf32> -> vector<8x8xf32>
    %c0_73 = arith.constant 0 : index
    %c0_74 = arith.constant 0 : index
    %c24 = arith.constant 24 : index
    %157 = vector.load %arg25[%c0_73, %c0_74, %c24] : memref<1x8x32xf32, #tpu.memory_space<vmem>>, vector<1x8x8xf32>
    %158 = vector.shape_cast %157 : vector<1x8x8xf32> to vector<8x8xf32>
    %159 = vector.shape_cast %156 : vector<8x8xf32> to vector<1x8x8xf32>
    tpu.vector_store %arg25[%c0_73, %c0_74, %c24], %159 {strides = array<i32>} : memref<1x8x32xf32, #tpu.memory_space<vmem>>, vector<1x8x8xf32>,
    %c0_75 = arith.constant 0 : index
    %c0_76 = arith.constant 0 : index
    %c0_77 = arith.constant 0 : index
    %160 = vector.load %arg25[%c0_75, %c0_76, %c0_77] : memref<1x8x32xf32, #tpu.memory_space<vmem>>, vector<1x8x32xf32>
    %161 = vector.shape_cast %160 : vector<1x8x32xf32> to vector<8x32xf32>
    %162 = arith.truncf %161 : vector<8x32xf32> to vector<8x32xbf16>
    %c0_78 = arith.constant 0 : index
    %c0_79 = arith.constant 0 : index
    %163 = vector.load %arg13[%c0_78, %c0_79] : memref<32x32xbf16, #tpu.memory_space<vmem>>, vector<32x32xbf16>
    %cst_80 = arith.constant dense<0.000000e+00> : vector<8x32xf32>
    %164 = tpu.matmul %162, %163, %cst_80 {dimension_numbers = #tpu.dot_dimension_numbers<[1], [0], [0], [1], [0, 0, 1, 1], [], []>} : vector<8x32xbf16>, vector<32x32xbf16>, vector<8x32xf32> -> vector<8x32xf32>
    %c0_81 = arith.constant 0 : index
    %c0_82 = arith.constant 0 : index
    %165 = vector.load %arg14[%c0_81, %c0_82] : memref<1x32xf32, #tpu.memory_space<vmem>>, vector<1x32xf32>
    %166 = vector.shape_cast %165 : vector<1x32xf32> to vector<32xf32>
    %167 = vector.shape_cast %166 : vector<32xf32> to vector<1x32xf32>
    %168 = vector.broadcast %167 : vector<1x32xf32> to vector<8x32xf32>
    %169 = arith.addf %164, %168 : vector<8x32xf32>
    %170 = arith.addf %1, %169 : vector<8x32xf32>
    %cst_83 = arith.constant dense<0.000000e+00> : vector<8xf32>
    %171 = vector.multi_reduction <add>, %170, %cst_83 [1] : vector<8x32xf32> to vector<8xf32>
    %172 = vector.shape_cast %171 : vector<8xf32> to vector<8x1xf32>
    %cst_84 = arith.constant 3.200000e+01 : f32
    %173 = vector.broadcast %cst_84 : f32 to vector<8x1xf32>
    %174 = arith.divf %172, %173 : vector<8x1xf32>
    %175 = vector.broadcast %174 : vector<8x1xf32> to vector<8x32xf32>
    %176 = arith.subf %170, %175 : vector<8x32xf32>
    %177 = arith.mulf %176, %176 : vector<8x32xf32>
    %cst_85 = arith.constant dense<0.000000e+00> : vector<8xf32>
    %178 = vector.multi_reduction <add>, %177, %cst_85 [1] : vector<8x32xf32> to vector<8xf32>
    %179 = vector.shape_cast %178 : vector<8xf32> to vector<8x1xf32>
    %cst_86 = arith.constant 3.200000e+01 : f32
    %180 = vector.broadcast %cst_86 : f32 to vector<8x1xf32>
    %181 = arith.divf %179, %180 : vector<8x1xf32>
    %182 = vector.broadcast %174 : vector<8x1xf32> to vector<8x32xf32>
    %183 = arith.subf %170, %182 : vector<8x32xf32>
    %cst_87 = arith.constant 9.99999974E-6 : f32
    %184 = vector.broadcast %cst_87 : f32 to vector<8x1xf32>
    %185 = arith.addf %181, %184 : vector<8x1xf32>
    %186 = math.rsqrt %185 : vector<8x1xf32>
    %187 = vector.broadcast %186 : vector<8x1xf32> to vector<8x32xf32>
    %188 = arith.mulf %183, %187 : vector<8x32xf32>
    %189 = vector.shape_cast %3 : vector<32xf32> to vector<1x32xf32>
    %190 = vector.broadcast %189 : vector<1x32xf32> to vector<8x32xf32>
    %191 = arith.mulf %188, %190 : vector<8x32xf32>
    %192 = vector.shape_cast %5 : vector<32xf32> to vector<1x32xf32>
    %193 = vector.broadcast %192 : vector<1x32xf32> to vector<8x32xf32>
    %194 = arith.addf %191, %193 : vector<8x32xf32>
    %195 = arith.truncf %194 : vector<8x32xf32> to vector<8x32xbf16>
    %c0_88 = arith.constant 0 : index
    %c0_89 = arith.constant 0 : index
    %196 = vector.load %arg15[%c0_88, %c0_89] : memref<32x64xbf16, #tpu.memory_space<vmem>>, vector<32x64xbf16>
    %cst_90 = arith.constant dense<0.000000e+00> : vector<8x64xf32>
    %197 = tpu.matmul %195, %196, %cst_90 {dimension_numbers = #tpu.dot_dimension_numbers<[1], [0], [0], [1], [0, 0, 1, 1], [], []>} : vector<8x32xbf16>, vector<32x64xbf16>, vector<8x64xf32> -> vector<8x64xf32>
    %c0_91 = arith.constant 0 : index
    %c0_92 = arith.constant 0 : index
    %198 = vector.load %arg16[%c0_91, %c0_92] : memref<1x64xf32, #tpu.memory_space<vmem>>, vector<1x64xf32>
    %199 = vector.shape_cast %198 : vector<1x64xf32> to vector<64xf32>
    %200 = vector.shape_cast %199 : vector<64xf32> to vector<1x64xf32>
    %201 = vector.broadcast %200 : vector<1x64xf32> to vector<8x64xf32>
    %202 = arith.addf %197, %201 : vector<8x64xf32>
    %cst_93 = arith.constant 5.000000e-01 : f32
    %203 = vector.broadcast %cst_93 : f32 to vector<8x64xf32>
    %204 = arith.mulf %203, %202 : vector<8x64xf32>
    %cst_94 = arith.constant 0.707106769 : f32
    %205 = vector.broadcast %cst_94 : f32 to vector<8x64xf32>
    %206 = arith.mulf %202, %205 : vector<8x64xf32>
    %207 = math.erf %206 : vector<8x64xf32>
    %cst_95 = arith.constant 1.000000e+00 : f32
    %208 = vector.broadcast %cst_95 : f32 to vector<8x64xf32>
    %209 = arith.addf %208, %207 : vector<8x64xf32>
    %210 = arith.mulf %204, %209 : vector<8x64xf32>
    %211 = arith.truncf %210 : vector<8x64xf32> to vector<8x64xbf16>
    %c0_96 = arith.constant 0 : index
    %c0_97 = arith.constant 0 : index
    %212 = vector.load %arg17[%c0_96, %c0_97] : memref<64x32xbf16, #tpu.memory_space<vmem>>, vector<64x32xbf16>
    %cst_98 = arith.constant dense<0.000000e+00> : vector<8x32xf32>
    %213 = tpu.matmul %211, %212, %cst_98 {dimension_numbers = #tpu.dot_dimension_numbers<[1], [0], [0], [1], [0, 0, 1, 1], [], []>} : vector<8x64xbf16>, vector<64x32xbf16>, vector<8x32xf32> -> vector<8x32xf32>
    %c0_99 = arith.constant 0 : index
    %c0_100 = arith.constant 0 : index
    %214 = vector.load %arg18[%c0_99, %c0_100] : memref<1x32xf32, #tpu.memory_space<vmem>>, vector<1x32xf32>
    %215 = vector.shape_cast %214 : vector<1x32xf32> to vector<32xf32>
    %216 = vector.shape_cast %215 : vector<32xf32> to vector<1x32xf32>
    %217 = vector.broadcast %216 : vector<1x32xf32> to vector<8x32xf32>
    %218 = arith.addf %213, %217 : vector<8x32xf32>
    %219 = arith.addf %218, %170 : vector<8x32xf32>
    %220 = vector.shape_cast %219 : vector<8x32xf32> to vector<1x8x32xf32>
    %c0_101 = arith.constant 0 : index
    %c0_102 = arith.constant 0 : index
    %c0_103 = arith.constant 0 : index
    %221 = vector.load %arg21[%c0_101, %c0_102, %c0_103] : memref<1x8x32xf32, #tpu.memory_space<vmem>>, vector<1x8x32xf32>
    tpu.vector_store %arg21[%c0_101, %c0_102, %c0_103], %220 {strides = array<i32>} : memref<1x8x32xf32, #tpu.memory_space<vmem>>, vector<1x8x32xf32>,
    return
  }
  func.func @transform_0(%arg0: i32) -> (i32, i32, i32) {
    %c0_i32 = arith.constant 0 : i32
    %c0_i32_0 = arith.constant 0 : i32
    %c0_i32_1 = arith.constant 0 : i32
    return %arg0, %c0_i32, %c0_i32_0 : i32, i32, i32
  }
  func.func @transform_1(%arg0: i32) -> (i32, i32, i32) {
    %c0_i32 = arith.constant 0 : i32
    %c0_i32_0 = arith.constant 0 : i32
    %c0_i32_1 = arith.constant 0 : i32
    return %arg0, %c0_i32, %c0_i32_0 : i32, i32, i32
  }
  func.func @transform_2(%arg0: i32) -> (i32, i32, i32) {
    %c0_i32 = arith.constant 0 : i32
    %c0_i32_0 = arith.constant 0 : i32
    %c0_i32_1 = arith.constant 0 : i32
    return %arg0, %c0_i32, %c0_i32_0 : i32, i32, i32
  }
  func.func @transform_3(%arg0: i32) -> (i32, i32, i32) {
    %c0_i32 = arith.constant 0 : i32
    %c0_i32_0 = arith.constant 0 : i32
    %c0_i32_1 = arith.constant 0 : i32
    return %arg0, %c0_i32, %c0_i32_0 : i32, i32, i32
  }
  func.func @transform_4(%arg0: i32) -> (i32, i32) {
    %c0_i32 = arith.constant 0 : i32
    %c0_i32_0 = arith.constant 0 : i32
    %c0_i32_1 = arith.constant 0 : i32
    return %c0_i32, %c0_i32_0 : i32, i32
  }
  func.func @transform_5(%arg0: i32) -> (i32, i32) {
    %c0_i32 = arith.constant 0 : i32
    %c0_i32_0 = arith.constant 0 : i32
    %c0_i32_1 = arith.constant 0 : i32
    return %c0_i32, %c0_i32_0 : i32, i32
  }
  func.func @transform_6(%arg0: i32) -> (i32, i32) {
    %c0_i32 = arith.constant 0 : i32
    %c0_i32_0 = arith.constant 0 : i32
    %c0_i32_1 = arith.constant 0 : i32
    return %c0_i32, %c0_i32_0 : i32, i32
  }
  func.func @transform_7(%arg0: i32) -> (i32, i32) {
    %c0_i32 = arith.constant 0 : i32
    %c0_i32_0 = arith.constant 0 : i32
    %c0_i32_1 = arith.constant 0 : i32
    return %c0_i32, %c0_i32_0 : i32, i32
  }
  func.func @transform_8(%arg0: i32) -> (i32, i32) {
    %c0_i32 = arith.constant 0 : i32
    %c0_i32_0 = arith.constant 0 : i32
    %c0_i32_1 = arith.constant 0 : i32
    return %c0_i32, %c0_i32_0 : i32, i32
  }
  func.func @transform_9(%arg0: i32) -> (i32, i32) {
    %c0_i32 = arith.constant 0 : i32
    %c0_i32_0 = arith.constant 0 : i32
    %c0_i32_1 = arith.constant 0 : i32
    return %c0_i32, %c0_i32_0 : i32, i32
  }
  func.func @transform_10(%arg0: i32) -> (i32, i32) {
    %c0_i32 = arith.constant 0 : i32
    %c0_i32_0 = arith.constant 0 : i32
    %c0_i32_1 = arith.constant 0 : i32
    return %c0_i32, %c0_i32_0 : i32, i32
  }
  func.func @transform_11(%arg0: i32) -> (i32, i32) {
    %c0_i32 = arith.constant 0 : i32
    %c0_i32_0 = arith.constant 0 : i32
    %c0_i32_1 = arith.constant 0 : i32
    return %c0_i32, %c0_i32_0 : i32, i32
  }
  func.func @transform_12(%arg0: i32) -> (i32, i32) {
    %c0_i32 = arith.constant 0 : i32
    %c0_i32_0 = arith.constant 0 : i32
    %c0_i32_1 = arith.constant 0 : i32
    return %c0_i32, %c0_i32_0 : i32, i32
  }
  func.func @transform_13(%arg0: i32) -> (i32, i32) {
    %c0_i32 = arith.constant 0 : i32
    %c0_i32_0 = arith.constant 0 : i32
    %c0_i32_1 = arith.constant 0 : i32
    return %c0_i32, %c0_i32_0 : i32, i32
  }
  func.func @transform_14(%arg0: i32) -> (i32, i32) {
    %c0_i32 = arith.constant 0 : i32
    %c0_i32_0 = arith.constant 0 : i32
    %c0_i32_1 = arith.constant 0 : i32
    return %c0_i32, %c0_i32_0 : i32, i32
  }
  func.func @transform_15(%arg0: i32) -> (i32, i32) {
    %c0_i32 = arith.constant 0 : i32
    %c0_i32_0 = arith.constant 0 : i32
    %c0_i32_1 = arith.constant 0 : i32
    return %c0_i32, %c0_i32_0 : i32, i32
  }
  func.func @transform_16(%arg0: i32) -> (i32, i32) {
    %c0_i32 = arith.constant 0 : i32
    %c0_i32_0 = arith.constant 0 : i32
    %c0_i32_1 = arith.constant 0 : i32
    return %c0_i32, %c0_i32_0 : i32, i32
  }
  func.func @transform_17(%arg0: i32) -> (i32, i32) {
    %c0_i32 = arith.constant 0 : i32
    %c0_i32_0 = arith.constant 0 : i32
    %c0_i32_1 = arith.constant 0 : i32
    return %c0_i32, %c0_i32_0 : i32, i32
  }
  func.func @transform_18(%arg0: i32) -> (i32, i32) {
    %c0_i32 = arith.constant 0 : i32
    %c0_i32_0 = arith.constant 0 : i32
    %c0_i32_1 = arith.constant 0 : i32
    return %c0_i32, %c0_i32_0 : i32, i32
  }
  func.func @transform_19(%arg0: i32) -> (i32, i32) {
    %c0_i32 = arith.constant 0 : i32
    %c0_i32_0 = arith.constant 0 : i32
    %c0_i32_1 = arith.constant 0 : i32
    return %c0_i32, %c0_i32_0 : i32, i32
  }
  func.func @transform_20(%arg0: i32) -> (i32, i32, i32) {
    %c0_i32 = arith.constant 0 : i32
    %c0_i32_0 = arith.constant 0 : i32
    %c0_i32_1 = arith.constant 0 : i32
    return %arg0, %c0_i32, %c0_i32_0 : i32, i32, i32
  }
  func.func @transform_21(%arg0: i32) -> (i32, i32, i32) {
    %c0_i32 = arith.constant 0 : i32
    %c0_i32_0 = arith.constant 0 : i32
    %c0_i32_1 = arith.constant 0 : i32
    return %arg0, %c0_i32, %c0_i32_0 : i32, i32, i32
  }
  func.func @transform_22(%arg0: i32) -> (i32, i32, i32) {
    %c0_i32 = arith.constant 0 : i32
    %c0_i32_0 = arith.constant 0 : i32
    %c0_i32_1 = arith.constant 0 : i32
    return %arg0, %c0_i32, %c0_i32_0 : i32, i32, i32
  }
  func.func @transform_23(%arg0: i32) -> (i32, i32, i32) {
    %c0_i32 = arith.constant 0 : i32
    %c0_i32_0 = arith.constant 0 : i32
    %c0_i32_1 = arith.constant 0 : i32
    return %arg0, %c0_i32, %c0_i32_0 : i32, i32, i32
  }
}

module attributes {stable_mosaic.version = 11 : i64} {
  func.func @mfi_block_kernel(%arg0: i32, %arg1: memref<1x8x32xf32, #tpu.memory_space<vmem>>, %arg2: memref<1x8x32xf32, #tpu.memory_space<vmem>>, %arg3: memref<1x8x32xf32, #tpu.memory_space<vmem>>, %arg4: memref<1x8x32xf32, #tpu.memory_space<vmem>>, %arg5: memref<1x32xf32, #tpu.memory_space<vmem>>, %arg6: memref<1x32xf32, #tpu.memory_space<vmem>>, %arg7: memref<32x32xbf16, #tpu.memory_space<vmem>>, %arg8: memref<1x32xf32, #tpu.memory_space<vmem>>, %arg9: memref<32x32xbf16, #tpu.memory_space<vmem>>, %arg10: memref<1x32xf32, #tpu.memory_space<vmem>>, %arg11: memref<32x32xbf16, #tpu.memory_space<vmem>>, %arg12: memref<1x32xf32, #tpu.memory_space<vmem>>, %arg13: memref<32x32xbf16, #tpu.memory_space<vmem>>, %arg14: memref<1x32xf32, #tpu.memory_space<vmem>>, %arg15: memref<32x64xbf16, #tpu.memory_space<vmem>>, %arg16: memref<1x64xf32, #tpu.memory_space<vmem>>, %arg17: memref<64x32xbf16, #tpu.memory_space<vmem>>, %arg18: memref<1x32xf32, #tpu.memory_space<vmem>>, %arg19: memref<1x32xf32, #tpu.memory_space<vmem>>, %arg20: memref<1x32xf32, #tpu.memory_space<vmem>>, %arg21: memref<1x8x32xf32, #tpu.memory_space<vmem>>, %arg22: memref<1x8x32xf32, #tpu.memory_space<vmem>>, %arg23: memref<1x8x32xf32, #tpu.memory_space<vmem>>, %arg24: memref<1x8x32xf32, #tpu.memory_space<vmem>>, %arg25: memref<1x8x32xf32, #tpu.memory_space<vmem>>) attributes {dimension_semantics = [#tpu.dimension_semantics<parallel>], iteration_bounds = array<i64: 2>, scalar_prefetch = 0 : i64, scratch_operands = 1 : i64, tpu.core_type = #tpu.core_type<tc>, window_params = [{transform_indices = @transform_0, window_bounds = array<i64: 1, 8, 32>}, {transform_indices = @transform_1, window_bounds = array<i64: 1, 8, 32>}, {transform_indices = @transform_2, window_bounds = array<i64: 1, 8, 32>}, {transform_indices = @transform_3, window_bounds = array<i64: 1, 8, 32>}, {pipeline_mode = #tpu.pipeline_mode<synchronous>, transform_indices = @transform_4, window_bounds = array<i64: 1, 32>}, {pipeline_mode = #tpu.pipeline_mode<synchronous>, transform_indices = @transform_5, window_bounds = array<i64: 1, 32>}, {pipeline_mode = #tpu.pipeline_mode<synchronous>, transform_indices = @transform_6, window_bounds = array<i64: 32, 32>}, {pipeline_mode = #tpu.pipeline_mode<synchronous>, transform_indices = @transform_7, window_bounds = array<i64: 1, 32>}, {pipeline_mode = #tpu.pipeline_mode<synchronous>, transform_indices = @transform_8, window_bounds = array<i64: 32, 32>}, {pipeline_mode = #tpu.pipeline_mode<synchronous>, transform_indices = @transform_9, window_bounds = array<i64: 1, 32>}, {pipeline_mode = #tpu.pipeline_mode<synchronous>, transform_indices = @transform_10, window_bounds = array<i64: 32, 32>}, {pipeline_mode = #tpu.pipeline_mode<synchronous>, transform_indices = @transform_11, window_bounds = array<i64: 1, 32>}, {pipeline_mode = #tpu.pipeline_mode<synchronous>, transform_indices = @transform_12, window_bounds = array<i64: 32, 32>}, {pipeline_mode = #tpu.pipeline_mode<synchronous>, transform_indices = @transform_13, window_bounds = array<i64: 1, 32>}, {pipeline_mode = #tpu.pipeline_mode<synchronous>, transform_indices = @transform_14, window_bounds = array<i64: 32, 64>}, {pipeline_mode = #tpu.pipeline_mode<synchronous>, transform_indices = @transform_15, window_bounds = array<i64: 1, 64>}, {pipeline_mode = #tpu.pipeline_mode<synchronous>, transform_indices = @transform_16, window_bounds = array<i64: 64, 32>}, {pipeline_mode = #tpu.pipeline_mode<synchronous>, transform_indices = @transform_17, window_bounds = array<i64: 1, 32>}, {pipeline_mode = #tpu.pipeline_mode<synchronous>, transform_indices = @transform_18, window_bounds = array<i64: 1, 32>}, {pipeline_mode = #tpu.pipeline_mode<synchronous>, transform_indices = @transform_19, window_bounds = array<i64: 1, 32>}, {transform_indices = @transform_20, window_bounds = array<i64: 1, 8, 32>}, {transform_indices = @transform_21, window_bounds = array<i64: 1, 8, 32>}, {transform_indices = @transform_22, window_bounds = array<i64: 1, 8, 32>}, {transform_indices = @transform_23, window_bounds = array<i64: 1, 8, 32>}]} {
    %c0 = arith.constant 0 : index
    %c0_0 = arith.constant 0 : index
    %c0_1 = arith.constant 0 : index
    %0 = vector.load %arg4[%c0, %c0_0, %c0_1] : memref<1x8x32xf32, #tpu.memory_space<vmem>>, vector<1x8x32xf32>
    %1 = vector.shape_cast %0 : vector<1x8x32xf32> to vector<8x32xf32>
    %c0_2 = arith.constant 0 : index
    %c0_3 = arith.constant 0 : index
    %2 = vector.load %arg5[%c0_2, %c0_3] : memref<1x32xf32, #tpu.memory_space<vmem>>, vector<1x32xf32>
    %3 = vector.shape_cast %2 : vector<1x32xf32> to vector<32xf32>
    %c0_4 = arith.constant 0 : index
    %c0_5 = arith.constant 0 : index
    %4 = vector.load %arg6[%c0_4, %c0_5] : memref<1x32xf32, #tpu.memory_space<vmem>>, vector<1x32xf32>
    %5 = vector.shape_cast %4 : vector<1x32xf32> to vector<32xf32>
    %cst = arith.constant dense<0.000000e+00> : vector<8xf32>
    %6 = vector.multi_reduction <add>, %1, %cst [1] : vector<8x32xf32> to vector<8xf32>
    %7 = vector.shape_cast %6 : vector<8xf32> to vector<8x1xf32>
    %cst_6 = arith.constant 3.200000e+01 : f32
    %8 = vector.broadcast %cst_6 : f32 to vector<8x1xf32>
    %9 = arith.divf %7, %8 : vector<8x1xf32>
    %10 = vector.broadcast %9 : vector<8x1xf32> to vector<8x32xf32>
    %11 = arith.subf %1, %10 : vector<8x32xf32>
    %12 = arith.mulf %11, %11 : vector<8x32xf32>
    %cst_7 = arith.constant dense<0.000000e+00> : vector<8xf32>
    %13 = vector.multi_reduction <add>, %12, %cst_7 [1] : vector<8x32xf32> to vector<8xf32>
    %14 = vector.shape_cast %13 : vector<8xf32> to vector<8x1xf32>
    %cst_8 = arith.constant 3.200000e+01 : f32
    %15 = vector.broadcast %cst_8 : f32 to vector<8x1xf32>
    %16 = arith.divf %14, %15 : vector<8x1xf32>
    %17 = vector.broadcast %9 : vector<8x1xf32> to vector<8x32xf32>
    %18 = arith.subf %1, %17 : vector<8x32xf32>
    %cst_9 = arith.constant 9.99999974E-6 : f32
    %19 = vector.broadcast %cst_9 : f32 to vector<8x1xf32>
    %20 = arith.addf %16, %19 : vector<8x1xf32>
    %21 = math.rsqrt %20 : vector<8x1xf32>
    %22 = vector.broadcast %21 : vector<8x1xf32> to vector<8x32xf32>
    %23 = arith.mulf %18, %22 : vector<8x32xf32>
    %24 = vector.shape_cast %3 : vector<32xf32> to vector<1x32xf32>
    %25 = vector.broadcast %24 : vector<1x32xf32> to vector<8x32xf32>
    %26 = arith.mulf %23, %25 : vector<8x32xf32>
    %27 = vector.shape_cast %5 : vector<32xf32> to vector<1x32xf32>
    %28 = vector.broadcast %27 : vector<1x32xf32> to vector<8x32xf32>
    %29 = arith.addf %26, %28 : vector<8x32xf32>
    %30 = arith.truncf %29 : vector<8x32xf32> to vector<8x32xbf16>
    %c0_10 = arith.constant 0 : index
    %c0_11 = arith.constant 0 : index
    %31 = vector.load %arg7[%c0_10, %c0_11] : memref<32x32xbf16, #tpu.memory_space<vmem>>, vector<32x32xbf16>
    %cst_12 = arith.constant dense<0.000000e+00> : vector<8x32xf32>
    %32 = tpu.matmul %30, %31, %cst_12 {dimension_numbers = #tpu.dot_dimension_numbers<[1], [0], [0], [1], [0, 0, 1, 1], [], []>} : vector<8x32xbf16>, vector<32x32xbf16>, vector<8x32xf32> -> vector<8x32xf32>
    %c0_13 = arith.constant 0 : index
    %c0_14 = arith.constant 0 : index
    %33 = vector.load %arg8[%c0_13, %c0_14] : memref<1x32xf32, #tpu.memory_space<vmem>>, vector<1x32xf32>
    %34 = vector.shape_cast %33 : vector<1x32xf32> to vector<32xf32>
    %35 = vector.shape_cast %34 : vector<32xf32> to vector<1x32xf32>
    %36 = vector.broadcast %35 : vector<1x32xf32> to vector<8x32xf32>
    %37 = arith.addf %32, %36 : vector<8x32xf32>
    %c0_15 = arith.constant 0 : index
    %c0_16 = arith.constant 0 : index
    %38 = vector.load %arg9[%c0_15, %c0_16] : memref<32x32xbf16, #tpu.memory_space<vmem>>, vector<32x32xbf16>
    %cst_17 = arith.constant dense<0.000000e+00> : vector<8x32xf32>
    %39 = tpu.matmul %30, %38, %cst_17 {dimension_numbers = #tpu.dot_dimension_numbers<[1], [0], [0], [1], [0, 0, 1, 1], [], []>} : vector<8x32xbf16>, vector<32x32xbf16>, vector<8x32xf32> -> vector<8x32xf32>
    %c0_18 = arith.constant 0 : index
    %c0_19 = arith.constant 0 : index
    %40 = vector.load %arg10[%c0_18, %c0_19] : memref<1x32xf32, #tpu.memory_space<vmem>>, vector<1x32xf32>
    %41 = vector.shape_cast %40 : vector<1x32xf32> to vector<32xf32>
    %42 = vector.shape_cast %41 : vector<32xf32> to vector<1x32xf32>
    %43 = vector.broadcast %42 : vector<1x32xf32> to vector<8x32xf32>
    %44 = arith.addf %39, %43 : vector<8x32xf32>
    %c0_20 = arith.constant 0 : index
    %c0_21 = arith.constant 0 : index
    %45 = vector.load %arg11[%c0_20, %c0_21] : memref<32x32xbf16, #tpu.memory_space<vmem>>, vector<32x32xbf16>
    %cst_22 = arith.constant dense<0.000000e+00> : vector<8x32xf32>
    %46 = tpu.matmul %30, %45, %cst_22 {dimension_numbers = #tpu.dot_dimension_numbers<[1], [0], [0], [1], [0, 0, 1, 1], [], []>} : vector<8x32xbf16>, vector<32x32xbf16>, vector<8x32xf32> -> vector<8x32xf32>
    %c0_23 = arith.constant 0 : index
    %c0_24 = arith.constant 0 : index
    %47 = vector.load %arg12[%c0_23, %c0_24] : memref<1x32xf32, #tpu.memory_space<vmem>>, vector<1x32xf32>
    %48 = vector.shape_cast %47 : vector<1x32xf32> to vector<32xf32>
    %49 = vector.shape_cast %48 : vector<32xf32> to vector<1x32xf32>
    %50 = vector.broadcast %49 : vector<1x32xf32> to vector<8x32xf32>
    %51 = arith.addf %46, %50 : vector<8x32xf32>
    %cst_25 = arith.constant 0.699999988 : f32
    %52 = vector.broadcast %cst_25 : f32 to vector<8x32xf32>
    %53 = arith.mulf %52, %37 : vector<8x32xf32>
    %c0_26 = arith.constant 0 : index
    %c0_27 = arith.constant 0 : index
    %c0_28 = arith.constant 0 : index
    %54 = vector.load %arg1[%c0_26, %c0_27, %c0_28] : memref<1x8x32xf32, #tpu.memory_space<vmem>>, vector<1x8x32xf32>
    %55 = vector.shape_cast %54 : vector<1x8x32xf32> to vector<8x32xf32>
    %cst_29 = arith.constant 3.000000e-01 : f32
    %56 = vector.broadcast %cst_29 : f32 to vector<8x32xf32>
    %57 = arith.mulf %56, %55 : vector<8x32xf32>
    %58 = arith.addf %53, %57 : vector<8x32xf32>
    %cst_30 = arith.constant 0.699999988 : f32
    %59 = vector.broadcast %cst_30 : f32 to vector<8x32xf32>
    %60 = arith.mulf %59, %44 : vector<8x32xf32>
    %c0_31 = arith.constant 0 : index
    %c0_32 = arith.constant 0 : index
    %c0_33 = arith.constant 0 : index
    %61 = vector.load %arg2[%c0_31, %c0_32, %c0_33] : memref<1x8x32xf32, #tpu.memory_space<vmem>>, vector<1x8x32xf32>
    %62 = vector.shape_cast %61 : vector<1x8x32xf32> to vector<8x32xf32>
    %cst_34 = arith.constant 3.000000e-01 : f32
    %63 = vector.broadcast %cst_34 : f32 to vector<8x32xf32>
    %64 = arith.mulf %63, %62 : vector<8x32xf32>
    %65 = arith.addf %60, %64 : vector<8x32xf32>
    %c0_35 = arith.constant 0 : index
    %c0_36 = arith.constant 0 : index
    %c0_37 = arith.constant 0 : index
    %66 = vector.load %arg3[%c0_35, %c0_36, %c0_37] : memref<1x8x32xf32, #tpu.memory_space<vmem>>, vector<1x8x32xf32>
    %67 = vector.shape_cast %66 : vector<1x8x32xf32> to vector<8x32xf32>
    %cst_38 = arith.constant 3.000000e-01 : f32
    %68 = vector.broadcast %cst_38 : f32 to vector<8x32xf32>
    %69 = arith.mulf %68, %67 : vector<8x32xf32>
    %cst_39 = arith.constant 0.699999988 : f32
    %70 = vector.broadcast %cst_39 : f32 to vector<8x32xf32>
    %71 = arith.mulf %70, %51 : vector<8x32xf32>
    %72 = arith.addf %69, %71 : vector<8x32xf32>
    %73 = vector.shape_cast %58 : vector<8x32xf32> to vector<1x8x32xf32>
    %c0_40 = arith.constant 0 : index
    %c0_41 = arith.constant 0 : index
    %c0_42 = arith.constant 0 : index
    %74 = vector.load %arg22[%c0_40, %c0_41, %c0_42] : memref<1x8x32xf32, #tpu.memory_space<vmem>>, vector<1x8x32xf32>
    tpu.vector_store %arg22[%c0_40, %c0_41, %c0_42], %73 {strides = array<i32>} : memref<1x8x32xf32, #tpu.memory_space<vmem>>, vector<1x8x32xf32>,
    %75 = vector.shape_cast %65 : vector<8x32xf32> to vector<1x8x32xf32>
    %c0_43 = arith.constant 0 : index
    %c0_44 = arith.constant 0 : index
    %c0_45 = arith.constant 0 : index
    %76 = vector.load %arg23[%c0_43, %c0_44, %c0_45] : memref<1x8x32xf32, #tpu.memory_space<vmem>>, vector<1x8x32xf32>
    tpu.vector_store %arg23[%c0_43, %c0_44, %c0_45], %75 {strides = array<i32>} : memref<1x8x32xf32, #tpu.memory_space<vmem>>, vector<1x8x32xf32>,
    %77 = vector.shape_cast %72 : vector<8x32xf32> to vector<1x8x32xf32>
    %c0_46 = arith.constant 0 : index
    %c0_47 = arith.constant 0 : index
    %c0_48 = arith.constant 0 : index
    %78 = vector.load %arg24[%c0_46, %c0_47, %c0_48] : memref<1x8x32xf32, #tpu.memory_space<vmem>>, vector<1x8x32xf32>
    tpu.vector_store %arg24[%c0_46, %c0_47, %c0_48], %77 {strides = array<i32>} : memref<1x8x32xf32, #tpu.memory_space<vmem>>, vector<1x8x32xf32>,
    %cst_49 = arith.constant 0.353553385 : f32
    %79 = vector.broadcast %cst_49 : f32 to vector<8x32xf32>
    %80 = arith.mulf %58, %79 : vector<8x32xf32>
    %81 = arith.truncf %80 : vector<8x32xf32> to vector<8x32xbf16>
    %82 = arith.truncf %65 : vector<8x32xf32> to vector<8x32xbf16>
    %83 = arith.truncf %72 : vector<8x32xf32> to vector<8x32xbf16>
    %84 = vector.extract_strided_slice %81 {offsets = [0, 0], sizes = [8, 8], strides = [1, 1]} : vector<8x32xbf16> to vector<8x8xbf16>
    %85 = vector.extract_strided_slice %82 {offsets = [0, 0], sizes = [8, 8], strides = [1, 1]} : vector<8x32xbf16> to vector<8x8xbf16>
    %86 = vector.extract_strided_slice %83 {offsets = [0, 0], sizes = [8, 8], strides = [1, 1]} : vector<8x32xbf16> to vector<8x8xbf16>
    %cst_50 = arith.constant dense<0.000000e+00> : vector<8x8xf32>
    %87 = tpu.matmul %84, %85, %cst_50 {dimension_numbers = #tpu.dot_dimension_numbers<[1], [1], [0], [0], [0, 0, 1, 0], [], []>} : vector<8x8xbf16>, vector<8x8xbf16>, vector<8x8xf32> -> vector<8x8xf32>
    %cst_51 = arith.constant dense<0xFF800000> : vector<8xf32>
    %88 = vector.multi_reduction <maximumf>, %87, %cst_51 [1] : vector<8x8xf32> to vector<8xf32>
    %89 = vector.shape_cast %88 : vector<8xf32> to vector<8x1xf32>
    %90 = vector.broadcast %89 : vector<8x1xf32> to vector<8x8xf32>
    %91 = arith.subf %87, %90 : vector<8x8xf32>
    %92 = math.exp %91 : vector<8x8xf32>
    %cst_52 = arith.constant dense<0.000000e+00> : vector<8xf32>
    %93 = vector.multi_reduction <add>, %92, %cst_52 [1] : vector<8x8xf32> to vector<8xf32>
    %94 = vector.shape_cast %93 : vector<8xf32> to vector<8x1xf32>
    %95 = tpu.reciprocal %94 {approx = true} : vector<8x1xf32> -> vector<8x1xf32>
    %96 = vector.broadcast %95 : vector<8x1xf32> to vector<8x8xf32>
    %97 = arith.mulf %92, %96 : vector<8x8xf32>
    %98 = arith.truncf %97 : vector<8x8xf32> to vector<8x8xbf16>
    %cst_53 = arith.constant dense<0.000000e+00> : vector<8x8xf32>
    %99 = tpu.matmul %98, %86, %cst_53 {dimension_numbers = #tpu.dot_dimension_numbers<[1], [0], [0], [1], [0, 0, 1, 1], [], []>} : vector<8x8xbf16>, vector<8x8xbf16>, vector<8x8xf32> -> vector<8x8xf32>
    %c0_54 = arith.constant 0 : index
    %c0_55 = arith.constant 0 : index
    %c0_56 = arith.constant 0 : index
    %100 = vector.load %arg25[%c0_54, %c0_55, %c0_56] : memref<1x8x32xf32, #tpu.memory_space<vmem>>, vector<1x8x8xf32>
    %101 = vector.shape_cast %100 : vector<1x8x8xf32> to vector<8x8xf32>
    %102 = vector.shape_cast %99 : vector<8x8xf32> to vector<1x8x8xf32>
    tpu.vector_store %arg25[%c0_54, %c0_55, %c0_56], %102 {strides = array<i32>} : memref<1x8x32xf32, #tpu.memory_space<vmem>>, vector<1x8x8xf32>,
    %103 = vector.extract_strided_slice %81 {offsets = [0, 8], sizes = [8, 8], strides = [1, 1]} : vector<8x32xbf16> to vector<8x8xbf16>
    %104 = vector.extract_strided_slice %82 {offsets = [0, 8], sizes = [8, 8], strides = [1, 1]} : vector<8x32xbf16> to vector<8x8xbf16>
    %105 = vector.extract_strided_slice %83 {offsets = [0, 8], sizes = [8, 8], strides = [1, 1]} : vector<8x32xbf16> to vector<8x8xbf16>
    %cst_57 = arith.constant dense<0.000000e+00> : vector<8x8xf32>
    %106 = tpu.matmul %103, %104, %cst_57 {dimension_numbers = #tpu.dot_dimension_numbers<[1], [1], [0], [0], [0, 0, 1, 0], [], []>} : vector<8x8xbf16>, vector<8x8xbf16>, vector<8x8xf32> -> vector<8x8xf32>
    %cst_58 = arith.constant dense<0xFF800000> : vector<8xf32>
    %107 = vector.multi_reduction <maximumf>, %106, %cst_58 [1] : vector<8x8xf32> to vector<8xf32>
    %108 = vector.shape_cast %107 : vector<8xf32> to vector<8x1xf32>
    %109 = vector.broadcast %108 : vector<8x1xf32> to vector<8x8xf32>
    %110 = arith.subf %106, %109 : vector<8x8xf32>
    %111 = math.exp %110 : vector<8x8xf32>
    %cst_59 = arith.constant dense<0.000000e+00> : vector<8xf32>
    %112 = vector.multi_reduction <add>, %111, %cst_59 [1] : vector<8x8xf32> to vector<8xf32>
    %113 = vector.shape_cast %112 : vector<8xf32> to vector<8x1xf32>
    %114 = tpu.reciprocal %113 {approx = true} : vector<8x1xf32> -> vector<8x1xf32>
    %115 = vector.broadcast %114 : vector<8x1xf32> to vector<8x8xf32>
    %116 = arith.mulf %111, %115 : vector<8x8xf32>
    %117 = arith.truncf %116 : vector<8x8xf32> to vector<8x8xbf16>
    %cst_60 = arith.constant dense<0.000000e+00> : vector<8x8xf32>
    %118 = tpu.matmul %117, %105, %cst_60 {dimension_numbers = #tpu.dot_dimension_numbers<[1], [0], [0], [1], [0, 0, 1, 1], [], []>} : vector<8x8xbf16>, vector<8x8xbf16>, vector<8x8xf32> -> vector<8x8xf32>
    %c0_61 = arith.constant 0 : index
    %c0_62 = arith.constant 0 : index
    %c8 = arith.constant 8 : index
    %119 = vector.load %arg25[%c0_61, %c0_62, %c8] : memref<1x8x32xf32, #tpu.memory_space<vmem>>, vector<1x8x8xf32>
    %120 = vector.shape_cast %119 : vector<1x8x8xf32> to vector<8x8xf32>
    %121 = vector.shape_cast %118 : vector<8x8xf32> to vector<1x8x8xf32>
    tpu.vector_store %arg25[%c0_61, %c0_62, %c8], %121 {strides = array<i32>} : memref<1x8x32xf32, #tpu.memory_space<vmem>>, vector<1x8x8xf32>,
    %122 = vector.extract_strided_slice %81 {offsets = [0, 16], sizes = [8, 8], strides = [1, 1]} : vector<8x32xbf16> to vector<8x8xbf16>
    %123 = vector.extract_strided_slice %82 {offsets = [0, 16], sizes = [8, 8], strides = [1, 1]} : vector<8x32xbf16> to vector<8x8xbf16>
    %124 = vector.extract_strided_slice %83 {offsets = [0, 16], sizes = [8, 8], strides = [1, 1]} : vector<8x32xbf16> to vector<8x8xbf16>
    %cst_63 = arith.constant dense<0.000000e+00> : vector<8x8xf32>
    %125 = tpu.matmul %122, %123, %cst_63 {dimension_numbers = #tpu.dot_dimension_numbers<[1], [1], [0], [0], [0, 0, 1, 0], [], []>} : vector<8x8xbf16>, vector<8x8xbf16>, vector<8x8xf32> -> vector<8x8xf32>
    %cst_64 = arith.constant dense<0xFF800000> : vector<8xf32>
    %126 = vector.multi_reduction <maximumf>, %125, %cst_64 [1] : vector<8x8xf32> to vector<8xf32>
    %127 = vector.shape_cast %126 : vector<8xf32> to vector<8x1xf32>
    %128 = vector.broadcast %127 : vector<8x1xf32> to vector<8x8xf32>
    %129 = arith.subf %125, %128 : vector<8x8xf32>
    %130 = math.exp %129 : vector<8x8xf32>
    %cst_65 = arith.constant dense<0.000000e+00> : vector<8xf32>
    %131 = vector.multi_reduction <add>, %130, %cst_65 [1] : vector<8x8xf32> to vector<8xf32>
    %132 = vector.shape_cast %131 : vector<8xf32> to vector<8x1xf32>
    %133 = tpu.reciprocal %132 {approx = true} : vector<8x1xf32> -> vector<8x1xf32>
    %134 = vector.broadcast %133 : vector<8x1xf32> to vector<8x8xf32>
    %135 = arith.mulf %130, %134 : vector<8x8xf32>
    %136 = arith.truncf %135 : vector<8x8xf32> to vector<8x8xbf16>
    %cst_66 = arith.constant dense<0.000000e+00> : vector<8x8xf32>
    %137 = tpu.matmul %136, %124, %cst_66 {dimension_numbers = #tpu.dot_dimension_numbers<[1], [0], [0], [1], [0, 0, 1, 1], [], []>} : vector<8x8xbf16>, vector<8x8xbf16>, vector<8x8xf32> -> vector<8x8xf32>
    %c0_67 = arith.constant 0 : index
    %c0_68 = arith.constant 0 : index
    %c16 = arith.constant 16 : index
    %138 = vector.load %arg25[%c0_67, %c0_68, %c16] : memref<1x8x32xf32, #tpu.memory_space<vmem>>, vector<1x8x8xf32>
    %139 = vector.shape_cast %138 : vector<1x8x8xf32> to vector<8x8xf32>
    %140 = vector.shape_cast %137 : vector<8x8xf32> to vector<1x8x8xf32>
    tpu.vector_store %arg25[%c0_67, %c0_68, %c16], %140 {strides = array<i32>} : memref<1x8x32xf32, #tpu.memory_space<vmem>>, vector<1x8x8xf32>,
    %141 = vector.extract_strided_slice %81 {offsets = [0, 24], sizes = [8, 8], strides = [1, 1]} : vector<8x32xbf16> to vector<8x8xbf16>
    %142 = vector.extract_strided_slice %82 {offsets = [0, 24], sizes = [8, 8], strides = [1, 1]} : vector<8x32xbf16> to vector<8x8xbf16>
    %143 = vector.extract_strided_slice %83 {offsets = [0, 24], sizes = [8, 8], strides = [1, 1]} : vector<8x32xbf16> to vector<8x8xbf16>
    %cst_69 = arith.constant dense<0.000000e+00> : vector<8x8xf32>
    %144 = tpu.matmul %141, %142, %cst_69 {dimension_numbers = #tpu.dot_dimension_numbers<[1], [1], [0], [0], [0, 0, 1, 0], [], []>} : vector<8x8xbf16>, vector<8x8xbf16>, vector<8x8xf32> -> vector<8x8xf32>
    %cst_70 = arith.constant dense<0xFF800000> : vector<8xf32>
    %145 = vector.multi_reduction <maximumf>, %144, %cst_70 [1] : vector<8x8xf32> to vector<8xf32>
    %146 = vector.shape_cast %145 : vector<8xf32> to vector<8x1xf32>
    %147 = vector.broadcast %146 : vector<8x1xf32> to vector<8x8xf32>
    %148 = arith.subf %144, %147 : vector<8x8xf32>
    %149 = math.exp %148 : vector<8x8xf32>
    %cst_71 = arith.constant dense<0.000000e+00> : vector<8xf32>
    %150 = vector.multi_reduction <add>, %149, %cst_71 [1] : vector<8x8xf32> to vector<8xf32>
    %151 = vector.shape_cast %150 : vector<8xf32> to vector<8x1xf32>
    %152 = tpu.reciprocal %151 {approx = true} : vector<8x1xf32> -> vector<8x1xf32>
    %153 = vector.broadcast %152 : vector<8x1xf32> to vector<8x8xf32>
    %154 = arith.mulf %149, %153 : vector<8x8xf32>
    %155 = arith.truncf %154 : vector<8x8xf32> to vector<8x8xbf16>
    %cst_72 = arith.constant dense<0.000000e+00> : vector<8x8xf32>
    %156 = tpu.matmul %155, %143, %cst_72 {dimension_numbers = #tpu.dot_dimension_numbers<[1], [0], [0], [1], [0, 0, 1, 1], [], []>} : vector<8x8xbf16>, vector<8x8xbf16>, vector<8x8xf32> -> vector<8x8xf32>
    %c0_73 = arith.constant 0 : index
    %c0_74 = arith.constant 0 : index
    %c24 = arith.constant 24 : index
    %157 = vector.load %arg25[%c0_73, %c0_74, %c24] : memref<1x8x32xf32, #tpu.memory_space<vmem>>, vector<1x8x8xf32>
    %158 = vector.shape_cast %157 : vector<1x8x8xf32> to vector<8x8xf32>
    %159 = vector.shape_cast %156 : vector<8x8xf32> to vector<1x8x8xf32>
    tpu.vector_store %arg25[%c0_73, %c0_74, %c24], %159 {strides = array<i32>} : memref<1x8x32xf32, #tpu.memory_space<vmem>>, vector<1x8x8xf32>,
    %c0_75 = arith.constant 0 : index
    %c0_76 = arith.constant 0 : index
    %c0_77 = arith.constant 0 : index
    %160 = vector.load %arg25[%c0_75, %c0_76, %c0_77] : memref<1x8x32xf32, #tpu.memory_space<vmem>>, vector<1x8x32xf32>
    %161 = vector.shape_cast %160 : vector<1x8x32xf32> to vector<8x32xf32>
    %162 = arith.truncf %161 : vector<8x32xf32> to vector<8x32xbf16>
    %c0_78 = arith.constant 0 : index
    %c0_79 = arith.constant 0 : index
    %163 = vector.load %arg13[%c0_78, %c0_79] : memref<32x32xbf16, #tpu.memory_space<vmem>>, vector<32x32xbf16>
    %cst_80 = arith.constant dense<0.000000e+00> : vector<8x32xf32>
    %164 = tpu.matmul %162, %163, %cst_80 {dimension_numbers = #tpu.dot_dimension_numbers<[1], [0], [0], [1], [0, 0, 1, 1], [], []>} : vector<8x32xbf16>, vector<32x32xbf16>, vector<8x32xf32> -> vector<8x32xf32>
    %c0_81 = arith.constant 0 : index
    %c0_82 = arith.constant 0 : index
    %165 = vector.load %arg14[%c0_81, %c0_82] : memref<1x32xf32, #tpu.memory_space<vmem>>, vector<1x32xf32>
    %166 = vector.shape_cast %165 : vector<1x32xf32> to vector<32xf32>
    %167 = vector.shape_cast %166 : vector<32xf32> to vector<1x32xf32>
    %168 = vector.broadcast %167 : vector<1x32xf32> to vector<8x32xf32>
    %169 = arith.addf %164, %168 : vector<8x32xf32>
    %170 = arith.addf %1, %169 : vector<8x32xf32>
    %cst_83 = arith.constant dense<0.000000e+00> : vector<8xf32>
    %171 = vector.multi_reduction <add>, %170, %cst_83 [1] : vector<8x32xf32> to vector<8xf32>
    %172 = vector.shape_cast %171 : vector<8xf32> to vector<8x1xf32>
    %cst_84 = arith.constant 3.200000e+01 : f32
    %173 = vector.broadcast %cst_84 : f32 to vector<8x1xf32>
    %174 = arith.divf %172, %173 : vector<8x1xf32>
    %175 = vector.broadcast %174 : vector<8x1xf32> to vector<8x32xf32>
    %176 = arith.subf %170, %175 : vector<8x32xf32>
    %177 = arith.mulf %176, %176 : vector<8x32xf32>
    %cst_85 = arith.constant dense<0.000000e+00> : vector<8xf32>
    %178 = vector.multi_reduction <add>, %177, %cst_85 [1] : vector<8x32xf32> to vector<8xf32>
    %179 = vector.shape_cast %178 : vector<8xf32> to vector<8x1xf32>
    %cst_86 = arith.constant 3.200000e+01 : f32
    %180 = vector.broadcast %cst_86 : f32 to vector<8x1xf32>
    %181 = arith.divf %179, %180 : vector<8x1xf32>
    %182 = vector.broadcast %174 : vector<8x1xf32> to vector<8x32xf32>
    %183 = arith.subf %170, %182 : vector<8x32xf32>
    %cst_87 = arith.constant 9.99999974E-6 : f32
    %184 = vector.broadcast %cst_87 : f32 to vector<8x1xf32>
    %185 = arith.addf %181, %184 : vector<8x1xf32>
    %186 = math.rsqrt %185 : vector<8x1xf32>
    %187 = vector.broadcast %186 : vector<8x1xf32> to vector<8x32xf32>
    %188 = arith.mulf %183, %187 : vector<8x32xf32>
    %189 = vector.shape_cast %3 : vector<32xf32> to vector<1x32xf32>
    %190 = vector.broadcast %189 : vector<1x32xf32> to vector<8x32xf32>
    %191 = arith.mulf %188, %190 : vector<8x32xf32>
    %192 = vector.shape_cast %5 : vector<32xf32> to vector<1x32xf32>
    %193 = vector.broadcast %192 : vector<1x32xf32> to vector<8x32xf32>
    %194 = arith.addf %191, %193 : vector<8x32xf32>
    %195 = arith.truncf %194 : vector<8x32xf32> to vector<8x32xbf16>
    %c0_88 = arith.constant 0 : index
    %c0_89 = arith.constant 0 : index
    %196 = vector.load %arg15[%c0_88, %c0_89] : memref<32x64xbf16, #tpu.memory_space<vmem>>, vector<32x64xbf16>
    %cst_90 = arith.constant dense<0.000000e+00> : vector<8x64xf32>
    %197 = tpu.matmul %195, %196, %cst_90 {dimension_numbers = #tpu.dot_dimension_numbers<[1], [0], [0], [1], [0, 0, 1, 1], [], []>} : vector<8x32xbf16>, vector<32x64xbf16>, vector<8x64xf32> -> vector<8x64xf32>
    %c0_91 = arith.constant 0 : index
    %c0_92 = arith.constant 0 : index
    %198 = vector.load %arg16[%c0_91, %c0_92] : memref<1x64xf32, #tpu.memory_space<vmem>>, vector<1x64xf32>
    %199 = vector.shape_cast %198 : vector<1x64xf32> to vector<64xf32>
    %200 = vector.shape_cast %199 : vector<64xf32> to vector<1x64xf32>
    %201 = vector.broadcast %200 : vector<1x64xf32> to vector<8x64xf32>
    %202 = arith.addf %197, %201 : vector<8x64xf32>
    %cst_93 = arith.constant 5.000000e-01 : f32
    %203 = vector.broadcast %cst_93 : f32 to vector<8x64xf32>
    %204 = arith.mulf %203, %202 : vector<8x64xf32>
    %cst_94 = arith.constant 0.707106769 : f32
    %205 = vector.broadcast %cst_94 : f32 to vector<8x64xf32>
    %206 = arith.mulf %202, %205 : vector<8x64xf32>
    %207 = math.erf %206 : vector<8x64xf32>
    %cst_95 = arith.constant 1.000000e+00 : f32
    %208 = vector.broadcast %cst_95 : f32 to vector<8x64xf32>
    %209 = arith.addf %208, %207 : vector<8x64xf32>
    %210 = arith.mulf %204, %209 : vector<8x64xf32>
    %211 = arith.truncf %210 : vector<8x64xf32> to vector<8x64xbf16>
    %c0_96 = arith.constant 0 : index
    %c0_97 = arith.constant 0 : index
    %212 = vector.load %arg17[%c0_96, %c0_97] : memref<64x32xbf16, #tpu.memory_space<vmem>>, vector<64x32xbf16>
    %cst_98 = arith.constant dense<0.000000e+00> : vector<8x32xf32>
    %213 = tpu.matmul %211, %212, %cst_98 {dimension_numbers = #tpu.dot_dimension_numbers<[1], [0], [0], [1], [0, 0, 1, 1], [], []>} : vector<8x64xbf16>, vector<64x32xbf16>, vector<8x32xf32> -> vector<8x32xf32>
    %c0_99 = arith.constant 0 : index
    %c0_100 = arith.constant 0 : index
    %214 = vector.load %arg18[%c0_99, %c0_100] : memref<1x32xf32, #tpu.memory_space<vmem>>, vector<1x32xf32>
    %215 = vector.shape_cast %214 : vector<1x32xf32> to vector<32xf32>
    %216 = vector.shape_cast %215 : vector<32xf32> to vector<1x32xf32>
    %217 = vector.broadcast %216 : vector<1x32xf32> to vector<8x32xf32>
    %218 = arith.addf %213, %217 : vector<8x32xf32>
    %219 = arith.addf %218, %170 : vector<8x32xf32>
    %c0_101 = arith.constant 0 : index
    %c0_102 = arith.constant 0 : index
    %220 = vector.load %arg19[%c0_101, %c0_102] : memref<1x32xf32, #tpu.memory_space<vmem>>, vector<1x32xf32>
    %221 = vector.shape_cast %220 : vector<1x32xf32> to vector<32xf32>
    %c0_103 = arith.constant 0 : index
    %c0_104 = arith.constant 0 : index
    %222 = vector.load %arg20[%c0_103, %c0_104] : memref<1x32xf32, #tpu.memory_space<vmem>>, vector<1x32xf32>
    %223 = vector.shape_cast %222 : vector<1x32xf32> to vector<32xf32>
    %cst_105 = arith.constant dense<0.000000e+00> : vector<8xf32>
    %224 = vector.multi_reduction <add>, %219, %cst_105 [1] : vector<8x32xf32> to vector<8xf32>
    %225 = vector.shape_cast %224 : vector<8xf32> to vector<8x1xf32>
    %cst_106 = arith.constant 3.200000e+01 : f32
    %226 = vector.broadcast %cst_106 : f32 to vector<8x1xf32>
    %227 = arith.divf %225, %226 : vector<8x1xf32>
    %228 = vector.broadcast %227 : vector<8x1xf32> to vector<8x32xf32>
    %229 = arith.subf %219, %228 : vector<8x32xf32>
    %230 = arith.mulf %229, %229 : vector<8x32xf32>
    %cst_107 = arith.constant dense<0.000000e+00> : vector<8xf32>
    %231 = vector.multi_reduction <add>, %230, %cst_107 [1] : vector<8x32xf32> to vector<8xf32>
    %232 = vector.shape_cast %231 : vector<8xf32> to vector<8x1xf32>
    %cst_108 = arith.constant 3.200000e+01 : f32
    %233 = vector.broadcast %cst_108 : f32 to vector<8x1xf32>
    %234 = arith.divf %232, %233 : vector<8x1xf32>
    %235 = vector.broadcast %227 : vector<8x1xf32> to vector<8x32xf32>
    %236 = arith.subf %219, %235 : vector<8x32xf32>
    %cst_109 = arith.constant 9.99999974E-6 : f32
    %237 = vector.broadcast %cst_109 : f32 to vector<8x1xf32>
    %238 = arith.addf %234, %237 : vector<8x1xf32>
    %239 = math.rsqrt %238 : vector<8x1xf32>
    %240 = vector.broadcast %239 : vector<8x1xf32> to vector<8x32xf32>
    %241 = arith.mulf %236, %240 : vector<8x32xf32>
    %242 = vector.shape_cast %221 : vector<32xf32> to vector<1x32xf32>
    %243 = vector.broadcast %242 : vector<1x32xf32> to vector<8x32xf32>
    %244 = arith.mulf %241, %243 : vector<8x32xf32>
    %245 = vector.shape_cast %223 : vector<32xf32> to vector<1x32xf32>
    %246 = vector.broadcast %245 : vector<1x32xf32> to vector<8x32xf32>
    %247 = arith.addf %244, %246 : vector<8x32xf32>
    %248 = vector.shape_cast %247 : vector<8x32xf32> to vector<1x8x32xf32>
    %c0_110 = arith.constant 0 : index
    %c0_111 = arith.constant 0 : index
    %c0_112 = arith.constant 0 : index
    %249 = vector.load %arg21[%c0_110, %c0_111, %c0_112] : memref<1x8x32xf32, #tpu.memory_space<vmem>>, vector<1x8x32xf32>
    tpu.vector_store %arg21[%c0_110, %c0_111, %c0_112], %248 {strides = array<i32>} : memref<1x8x32xf32, #tpu.memory_space<vmem>>, vector<1x8x32xf32>,
    return
  }
  func.func @transform_0(%arg0: i32) -> (i32, i32, i32) {
    %c0_i32 = arith.constant 0 : i32
    %c0_i32_0 = arith.constant 0 : i32
    %c0_i32_1 = arith.constant 0 : i32
    return %arg0, %c0_i32, %c0_i32_0 : i32, i32, i32
  }
  func.func @transform_1(%arg0: i32) -> (i32, i32, i32) {
    %c0_i32 = arith.constant 0 : i32
    %c0_i32_0 = arith.constant 0 : i32
    %c0_i32_1 = arith.constant 0 : i32
    return %arg0, %c0_i32, %c0_i32_0 : i32, i32, i32
  }
  func.func @transform_2(%arg0: i32) -> (i32, i32, i32) {
    %c0_i32 = arith.constant 0 : i32
    %c0_i32_0 = arith.constant 0 : i32
    %c0_i32_1 = arith.constant 0 : i32
    return %arg0, %c0_i32, %c0_i32_0 : i32, i32, i32
  }
  func.func @transform_3(%arg0: i32) -> (i32, i32, i32) {
    %c0_i32 = arith.constant 0 : i32
    %c0_i32_0 = arith.constant 0 : i32
    %c0_i32_1 = arith.constant 0 : i32
    return %arg0, %c0_i32, %c0_i32_0 : i32, i32, i32
  }
  func.func @transform_4(%arg0: i32) -> (i32, i32) {
    %c0_i32 = arith.constant 0 : i32
    %c0_i32_0 = arith.constant 0 : i32
    %c0_i32_1 = arith.constant 0 : i32
    return %c0_i32, %c0_i32_0 : i32, i32
  }
  func.func @transform_5(%arg0: i32) -> (i32, i32) {
    %c0_i32 = arith.constant 0 : i32
    %c0_i32_0 = arith.constant 0 : i32
    %c0_i32_1 = arith.constant 0 : i32
    return %c0_i32, %c0_i32_0 : i32, i32
  }
  func.func @transform_6(%arg0: i32) -> (i32, i32) {
    %c0_i32 = arith.constant 0 : i32
    %c0_i32_0 = arith.constant 0 : i32
    %c0_i32_1 = arith.constant 0 : i32
    return %c0_i32, %c0_i32_0 : i32, i32
  }
  func.func @transform_7(%arg0: i32) -> (i32, i32) {
    %c0_i32 = arith.constant 0 : i32
    %c0_i32_0 = arith.constant 0 : i32
    %c0_i32_1 = arith.constant 0 : i32
    return %c0_i32, %c0_i32_0 : i32, i32
  }
  func.func @transform_8(%arg0: i32) -> (i32, i32) {
    %c0_i32 = arith.constant 0 : i32
    %c0_i32_0 = arith.constant 0 : i32
    %c0_i32_1 = arith.constant 0 : i32
    return %c0_i32, %c0_i32_0 : i32, i32
  }
  func.func @transform_9(%arg0: i32) -> (i32, i32) {
    %c0_i32 = arith.constant 0 : i32
    %c0_i32_0 = arith.constant 0 : i32
    %c0_i32_1 = arith.constant 0 : i32
    return %c0_i32, %c0_i32_0 : i32, i32
  }
  func.func @transform_10(%arg0: i32) -> (i32, i32) {
    %c0_i32 = arith.constant 0 : i32
    %c0_i32_0 = arith.constant 0 : i32
    %c0_i32_1 = arith.constant 0 : i32
    return %c0_i32, %c0_i32_0 : i32, i32
  }
  func.func @transform_11(%arg0: i32) -> (i32, i32) {
    %c0_i32 = arith.constant 0 : i32
    %c0_i32_0 = arith.constant 0 : i32
    %c0_i32_1 = arith.constant 0 : i32
    return %c0_i32, %c0_i32_0 : i32, i32
  }
  func.func @transform_12(%arg0: i32) -> (i32, i32) {
    %c0_i32 = arith.constant 0 : i32
    %c0_i32_0 = arith.constant 0 : i32
    %c0_i32_1 = arith.constant 0 : i32
    return %c0_i32, %c0_i32_0 : i32, i32
  }
  func.func @transform_13(%arg0: i32) -> (i32, i32) {
    %c0_i32 = arith.constant 0 : i32
    %c0_i32_0 = arith.constant 0 : i32
    %c0_i32_1 = arith.constant 0 : i32
    return %c0_i32, %c0_i32_0 : i32, i32
  }
  func.func @transform_14(%arg0: i32) -> (i32, i32) {
    %c0_i32 = arith.constant 0 : i32
    %c0_i32_0 = arith.constant 0 : i32
    %c0_i32_1 = arith.constant 0 : i32
    return %c0_i32, %c0_i32_0 : i32, i32
  }
  func.func @transform_15(%arg0: i32) -> (i32, i32) {
    %c0_i32 = arith.constant 0 : i32
    %c0_i32_0 = arith.constant 0 : i32
    %c0_i32_1 = arith.constant 0 : i32
    return %c0_i32, %c0_i32_0 : i32, i32
  }
  func.func @transform_16(%arg0: i32) -> (i32, i32) {
    %c0_i32 = arith.constant 0 : i32
    %c0_i32_0 = arith.constant 0 : i32
    %c0_i32_1 = arith.constant 0 : i32
    return %c0_i32, %c0_i32_0 : i32, i32
  }
  func.func @transform_17(%arg0: i32) -> (i32, i32) {
    %c0_i32 = arith.constant 0 : i32
    %c0_i32_0 = arith.constant 0 : i32
    %c0_i32_1 = arith.constant 0 : i32
    return %c0_i32, %c0_i32_0 : i32, i32
  }
  func.func @transform_18(%arg0: i32) -> (i32, i32) {
    %c0_i32 = arith.constant 0 : i32
    %c0_i32_0 = arith.constant 0 : i32
    %c0_i32_1 = arith.constant 0 : i32
    return %c0_i32, %c0_i32_0 : i32, i32
  }
  func.func @transform_19(%arg0: i32) -> (i32, i32) {
    %c0_i32 = arith.constant 0 : i32
    %c0_i32_0 = arith.constant 0 : i32
    %c0_i32_1 = arith.constant 0 : i32
    return %c0_i32, %c0_i32_0 : i32, i32
  }
  func.func @transform_20(%arg0: i32) -> (i32, i32, i32) {
    %c0_i32 = arith.constant 0 : i32
    %c0_i32_0 = arith.constant 0 : i32
    %c0_i32_1 = arith.constant 0 : i32
    return %arg0, %c0_i32, %c0_i32_0 : i32, i32, i32
  }
  func.func @transform_21(%arg0: i32) -> (i32, i32, i32) {
    %c0_i32 = arith.constant 0 : i32
    %c0_i32_0 = arith.constant 0 : i32
    %c0_i32_1 = arith.constant 0 : i32
    return %arg0, %c0_i32, %c0_i32_0 : i32, i32, i32
  }
  func.func @transform_22(%arg0: i32) -> (i32, i32, i32) {
    %c0_i32 = arith.constant 0 : i32
    %c0_i32_0 = arith.constant 0 : i32
    %c0_i32_1 = arith.constant 0 : i32
    return %arg0, %c0_i32, %c0_i32_0 : i32, i32, i32
  }
  func.func @transform_23(%arg0: i32) -> (i32, i32, i32) {
    %c0_i32 = arith.constant 0 : i32
    %c0_i32_0 = arith.constant 0 : i32
    %c0_i32_1 = arith.constant 0 : i32
    return %arg0, %c0_i32, %c0_i32_0 : i32, i32, i32
  }
}

</mosaic_0001>

<llo_original>
// kernel: mfi_model_forward.3
$region0: #{mfi_model_forward.3}
  #allocation0 [shape = 'u32[]', space=smem, size = 0x4, offset = 0x4, fixed_abs, tag = 'smem constant byte address 0x4 - core index']
  #allocation1 [shape = 'u32[144,128]{1,0:T(1,128)}', space=vmem, size = 0x12000, scoped, tag = 'internal scratch']
  #allocation2 [shape = 'f32[1,8,32]{2,1,0:T(8,128)}', space=vmem, size = 0x1000, scoped, tag = 'scratch operand']
  %s0 = inlined_call_operand.vmem [shape: f32[2,8,32], index: 0, kind: input, shape index: {}]
  %s1 = inlined_call_operand.vmem [shape: f32[2,8,32], index: 1, kind: input, shape index: {}]
  %s2 = inlined_call_operand.vmem [shape: f32[2,8,32], index: 2, kind: input, shape index: {}]
  %s3 = inlined_call_operand.vmem [shape: f32[2,8,32], index: 3, kind: input, shape index: {}]
  %s4 = inlined_call_operand.vmem [shape: f32[1,32], index: 4, kind: input, shape index: {}]
  %s5 = inlined_call_operand.vmem [shape: f32[1,32], index: 5, kind: input, shape index: {}]
  %s6 = inlined_call_operand.vmem [shape: bf16[32,32], index: 6, kind: input, shape index: {}]
  %s7 = inlined_call_operand.vmem [shape: f32[1,32], index: 7, kind: input, shape index: {}]
  %s8 = inlined_call_operand.vmem [shape: bf16[32,32], index: 8, kind: input, shape index: {}]
  %s9 = inlined_call_operand.vmem [shape: f32[1,32], index: 9, kind: input, shape index: {}]
  %s10 = inlined_call_operand.vmem [shape: bf16[32,32], index: 10, kind: input, shape index: {}]
  %s11 = inlined_call_operand.vmem [shape: f32[1,32], index: 11, kind: input, shape index: {}]
  %s12 = inlined_call_operand.vmem [shape: bf16[32,32], index: 12, kind: input, shape index: {}]
  %s13 = inlined_call_operand.vmem [shape: f32[1,32], index: 13, kind: input, shape index: {}]
  %s14 = inlined_call_operand.vmem [shape: bf16[32,64], index: 14, kind: input, shape index: {}]
  %s15 = inlined_call_operand.vmem [shape: f32[1,64], index: 15, kind: input, shape index: {}]
  %s16 = inlined_call_operand.vmem [shape: bf16[64,32], index: 16, kind: input, shape index: {}]
  %s17 = inlined_call_operand.vmem [shape: f32[1,32], index: 17, kind: input, shape index: {}]
  %s18 = inlined_call_operand.vmem [shape: f32[1,32], index: 18, kind: input, shape index: {}]
  %s19 = inlined_call_operand.vmem [shape: f32[1,32], index: 19, kind: input, shape index: {}]
  %s20 = inlined_call_operand.hbm [shape: f32[2,8,32], index: 20, kind: output, shape index: {0}]
  %s21 = inlined_call_operand.hbm [shape: f32[2,8,32], index: 21, kind: output, shape index: {1}]
  %s22 = inlined_call_operand.hbm [shape: f32[2,8,32], index: 22, kind: output, shape index: {2}]
  %s23 = inlined_call_operand.hbm [shape: f32[2,8,32], index: 23, kind: output, shape index: {3}]
  %24 = xla_tuple %s20, %s21, %s22, %s23
  %s25 = sld [smem:[#allocation0]]
  $region137: #{mfi_model_forward.3} parent=0
    _
  %s27 = ssub.s32 1, %s25
  %s28 = scalar_select 0, %s27, %s25
  $region1: #{mfi_model_forward.3} parent=0
    #allocation3 [shape = 'u8[8192]{0}', space=vmem, size = 0x2000, scoped, tag = 'output window, operand 0']
    #allocation4 [shape = 's32[2]{0}', space=sflag, size = 0x8, scoped, tag = 'scoped memory for mfi_model_forward.3']
    #allocation5 [shape = 'u8[8192]{0}', space=vmem, size = 0x2000, scoped, tag = 'output window, operand 1']
    #allocation6 [shape = 's32[2]{0}', space=sflag, size = 0x8, scoped, tag = 'scoped memory for mfi_model_forward.3']
    #allocation7 [shape = 'u8[8192]{0}', space=vmem, size = 0x2000, scoped, tag = 'output window, operand 2']
    #allocation8 [shape = 'u8[8192]{0}', space=vmem, size = 0x2000, scoped, tag = 'output window, operand 3']
    #allocation9 [shape = 's32[2]{0}', space=sflag, size = 0x8, scoped, tag = 'scoped memory for mfi_model_forward.3']
    %29 = vsyncpa [#allocation4], 0
    %s30 = scalar_lea.sflag [#allocation4], 1
    %31 = vsyncpa %s30, 0
    %32 = vsyncpa [#allocation6], 0
    %s33 = scalar_lea.sflag [#allocation6], 1
    %34 = vsyncpa %s33, 0
    %35 = vsyncpa [#allocation9], 0
    %s36 = scalar_lea.sflag [#allocation9], 1
    %37 = vsyncpa %s36, 0
    loop: start=0, step=1, limit=4
    $region2: #{mfi_model_forward.3} parent=1 // loop_pre_header
      _
    $region3: #{mfi_model_forward.3} parent=1 // loop_header
      %s39 = sphi 0, %s43
      %p40 = scmp.ge.s32.totalorder %s39, 4
      %s49 = sphi 0, %s51
      %s52 = sphi 0, %s49
      %s53 = sphi 0, %s52
      %s69 = sphi 0, %s53
      %s75 = sphi 0, %s77
      %s78 = sphi 0, %s75
      %s79 = sphi 0, %s78
      %s95 = sphi 0, %s79
      %s101 = sphi 0, %s103
      %s104 = sphi 0, %s101
      %s105 = sphi 0, %s104
      %s121 = sphi 0, %s105
      %s127 = sphi 0, %s129
      %s130 = sphi 0, %s127
      %s131 = sphi 0, %s130
      %s147 = sphi 0, %s131
      %s151 = sphi 0, %s151
      %s153 = sphi 0, %s151
      %s154 = sphi 0, %s153
      %s168 = sphi 0, %s154
      %s172 = sphi 0, %s172
      %s174 = sphi 0, %s172
      %s175 = sphi 0, %s174
      %s189 = sphi 0, %s175
      %s193 = sphi 0, %s193
      %s195 = sphi 0, %s193
      %s196 = sphi 0, %s195
      %s210 = sphi 0, %s196
      %s214 = sphi 0, %s214
      %s216 = sphi 0, %s214
      %s217 = sphi 0, %s216
      %s231 = sphi 0, %s217
      %s235 = sphi 0, %s235
      %s237 = sphi 0, %s235
      %s238 = sphi 0, %s237
      %s252 = sphi 0, %s238
      %s256 = sphi 0, %s256
      %s258 = sphi 0, %s256
      %s259 = sphi 0, %s258
      %s273 = sphi 0, %s259
      %s277 = sphi 0, %s277
      %s279 = sphi 0, %s277
      %s280 = sphi 0, %s279
      %s294 = sphi 0, %s280
      %s298 = sphi 0, %s298
      %s300 = sphi 0, %s298
      %s301 = sphi 0, %s300
      %s315 = sphi 0, %s301
      %s319 = sphi 0, %s319
      %s321 = sphi 0, %s319
      %s322 = sphi 0, %s321
      %s336 = sphi 0, %s322
      %s340 = sphi 0, %s340
      %s342 = sphi 0, %s340
      %s343 = sphi 0, %s342
      %s357 = sphi 0, %s343
      %s361 = sphi 0, %s361
      %s363 = sphi 0, %s361
      %s364 = sphi 0, %s363
      %s378 = sphi 0, %s364
      %s382 = sphi 0, %s382
      %s384 = sphi 0, %s382
      %s385 = sphi 0, %s384
      %s399 = sphi 0, %s385
      %s403 = sphi 0, %s403
      %s405 = sphi 0, %s403
      %s406 = sphi 0, %s405
      %s420 = sphi 0, %s406
      %s424 = sphi 0, %s424
      %s426 = sphi 0, %s424
      %s427 = sphi 0, %s426
      %s441 = sphi 0, %s427
      %s445 = sphi 0, %s445
      %s447 = sphi 0, %s445
      %s448 = sphi 0, %s447
      %s462 = sphi 0, %s448
      %s466 = sphi 0, %s466
      %s468 = sphi 0, %s466
      %s469 = sphi 0, %s468
      %s483 = sphi 0, %s469
      %s489 = sphi 0, %s491
      %s492 = sphi 0, %s489
      %s493 = sphi 0, %s492
      %s509 = sphi 0, %s493
      %s515 = sphi 0, %s517
      %s518 = sphi 0, %s515
      %s519 = sphi 0, %s518
      %s535 = sphi 0, %s519
      %s541 = sphi 0, %s543
      %s544 = sphi 0, %s541
      %s545 = sphi 0, %s544
      %s561 = sphi 0, %s545
      %s567 = sphi 0, %s569
      %s570 = sphi 0, %s567
      %s571 = sphi 0, %s570
      %s587 = sphi 0, %s571
    $region4: #{mfi_model_forward.3} parent=1 // loop_header_branch
      %42 = sbr.rel (%p40) target = $region8
    $region5: #{mfi_model_forward.3} parent=1 // loop_body
      %s44 = ssub.s32 %s39, 1
      %s45 = ssub.s32 %s39, 2
      %s46 = sadd.s32 %s39, 1
      %s47 = ssub.s32 %s39, %s46
      %p48 = scmp.eq.s32.totalorder %s47, 0
      %s50 = sadd.s32 %s49, 1
      %s51 = scalar_select %p48, %s49, %s50
      %p54 = pneg %p48
      %p55 = scmp.eq.s32.totalorder %s39, 1
      %p56 = por %p54, %p55
      %p57 = scmp.ne.s32.totalorder %s49, %s52
      %p58 = scmp.eq.s32.totalorder %s39, 0
      %p59 = por %p57, %p58
      %p60 = scmp.ne.s32.totalorder %s49, %s52
      %p61 = scmp.eq.s32.totalorder %s44, 1
      %p62 = por %p60, %p61
      %p63 = scmp.ne.s32.totalorder %s52, %s53
      %p64 = scmp.eq.s32.totalorder %s44, 0
      %p65 = por %p63, %p64
      %p66 = scmp.ne.s32.totalorder %s52, %s53
      %p67 = scmp.eq.s32.totalorder %s45, 1
      %p68 = por %p66, %p67
      %p70 = scmp.ne.s32.totalorder %s53, %s69
      %p71 = scmp.eq.s32.totalorder %s45, 0
      %p72 = por %p70, %p71
      %s73 = ssub.s32 %s39, %s46
      %p74 = scmp.eq.s32.totalorder %s73, 0
      %s76 = sadd.s32 %s75, 1
      %s77 = scalar_select %p74, %s75, %s76
      %p80 = pneg %p74
      %p81 = scmp.eq.s32.totalorder %s39, 1
      %p82 = por %p80, %p81
      %p83 = scmp.ne.s32.totalorder %s75, %s78
      %p84 = scmp.eq.s32.totalorder %s39, 0
      %p85 = por %p83, %p84
      %p86 = scmp.ne.s32.totalorder %s75, %s78
      %p87 = scmp.eq.s32.totalorder %s44, 1
      %p88 = por %p86, %p87
      %p89 = scmp.ne.s32.totalorder %s78, %s79
      %p90 = scmp.eq.s32.totalorder %s44, 0
      %p91 = por %p89, %p90
      %p92 = scmp.ne.s32.totalorder %s78, %s79
      %p93 = scmp.eq.s32.totalorder %s45, 1
      %p94 = por %p92, %p93
      %p96 = scmp.ne.s32.totalorder %s79, %s95
      %p97 = scmp.eq.s32.totalorder %s45, 0
      %p98 = por %p96, %p97
      %s99 = ssub.s32 %s39, %s46
      %p100 = scmp.eq.s32.totalorder %s99, 0
      %s102 = sadd.s32 %s101, 1
      %s103 = scalar_select %p100, %s101, %s102
      %p106 = pneg %p100
      %p107 = scmp.eq.s32.totalorder %s39, 1
      %p108 = por %p106, %p107
      %p109 = scmp.ne.s32.totalorder %s101, %s104
      %p110 = scmp.eq.s32.totalorder %s39, 0
      %p111 = por %p109, %p110
      %p112 = scmp.ne.s32.totalorder %s101, %s104
      %p113 = scmp.eq.s32.totalorder %s44, 1
      %p114 = por %p112, %p113
      %p115 = scmp.ne.s32.totalorder %s104, %s105
      %p116 = scmp.eq.s32.totalorder %s44, 0
      %p117 = por %p115, %p116
      %p118 = scmp.ne.s32.totalorder %s104, %s105
      %p119 = scmp.eq.s32.totalorder %s45, 1
      %p120 = por %p118, %p119
      %p122 = scmp.ne.s32.totalorder %s105, %s121
      %p123 = scmp.eq.s32.totalorder %s45, 0
      %p124 = por %p122, %p123
      %s125 = ssub.s32 %s39, %s46
      %p126 = scmp.eq.s32.totalorder %s125, 0
      %s128 = sadd.s32 %s127, 1
      %s129 = scalar_select %p126, %s127, %s128
      %p132 = pneg %p126
      %p133 = scmp.eq.s32.totalorder %s39, 1
      %p134 = por %p132, %p133
      %p135 = scmp.ne.s32.totalorder %s127, %s130
      %p136 = scmp.eq.s32.totalorder %s39, 0
      %p137 = por %p135, %p136
      %p138 = scmp.ne.s32.totalorder %s127, %s130
      %p139 = scmp.eq.s32.totalorder %s44, 1
      %p140 = por %p138, %p139
      %p141 = scmp.ne.s32.totalorder %s130, %s131
      %p142 = scmp.eq.s32.totalorder %s44, 0
      %p143 = por %p141, %p142
      %p144 = scmp.ne.s32.totalorder %s130, %s131
      %p145 = scmp.eq.s32.totalorder %s45, 1
      %p146 = por %p144, %p145
      %p148 = scmp.ne.s32.totalorder %s131, %s147
      %p149 = scmp.eq.s32.totalorder %s45, 0
      %p150 = por %p148, %p149
      %s152 = sadd.s32 %s151, 1
      %p155 = scmp.eq.s32.totalorder %s39, 1
      %p156 = scmp.ne.s32.totalorder %s151, %s153
      %p157 = scmp.eq.s32.totalorder %s39, 0
      %p158 = por %p156, %p157
      %p159 = scmp.ne.s32.totalorder %s151, %s153
      %p160 = scmp.eq.s32.totalorder %s44, 1
      %p161 = por %p159, %p160
      %p162 = scmp.ne.s32.totalorder %s153, %s154
      %p163 = scmp.eq.s32.totalorder %s44, 0
      %p164 = por %p162, %p163
      %p165 = scmp.ne.s32.totalorder %s153, %s154
      %p166 = scmp.eq.s32.totalorder %s45, 1
      %p167 = por %p165, %p166
      %p169 = scmp.ne.s32.totalorder %s154, %s168
      %p170 = scmp.eq.s32.totalorder %s45, 0
      %p171 = por %p169, %p170
      %s173 = sadd.s32 %s172, 1
      %p176 = scmp.eq.s32.totalorder %s39, 1
      %p177 = scmp.ne.s32.totalorder %s172, %s174
      %p178 = scmp.eq.s32.totalorder %s39, 0
      %p179 = por %p177, %p178
      %p180 = scmp.ne.s32.totalorder %s172, %s174
      %p181 = scmp.eq.s32.totalorder %s44, 1
      %p182 = por %p180, %p181
      %p183 = scmp.ne.s32.totalorder %s174, %s175
      %p184 = scmp.eq.s32.totalorder %s44, 0
      %p185 = por %p183, %p184
      %p186 = scmp.ne.s32.totalorder %s174, %s175
      %p187 = scmp.eq.s32.totalorder %s45, 1
      %p188 = por %p186, %p187
      %p190 = scmp.ne.s32.totalorder %s175, %s189
      %p191 = scmp.eq.s32.totalorder %s45, 0
      %p192 = por %p190, %p191
      %s194 = sadd.s32 %s193, 1
      %p197 = scmp.eq.s32.totalorder %s39, 1
      %p198 = scmp.ne.s32.totalorder %s193, %s195
      %p199 = scmp.eq.s32.totalorder %s39, 0
      %p200 = por %p198, %p199
      %p201 = scmp.ne.s32.totalorder %s193, %s195
      %p202 = scmp.eq.s32.totalorder %s44, 1
      %p203 = por %p201, %p202
      %p204 = scmp.ne.s32.totalorder %s195, %s196
      %p205 = scmp.eq.s32.totalorder %s44, 0
      %p206 = por %p204, %p205
      %p207 = scmp.ne.s32.totalorder %s195, %s196
      %p208 = scmp.eq.s32.totalorder %s45, 1
      %p209 = por %p207, %p208
      %p211 = scmp.ne.s32.totalorder %s196, %s210
      %p212 = scmp.eq.s32.totalorder %s45, 0
      %p213 = por %p211, %p212
      %s215 = sadd.s32 %s214, 1
      %p218 = scmp.eq.s32.totalorder %s39, 1
      %p219 = scmp.ne.s32.totalorder %s214, %s216
      %p220 = scmp.eq.s32.totalorder %s39, 0
      %p221 = por %p219, %p220
      %p222 = scmp.ne.s32.totalorder %s214, %s216
      %p223 = scmp.eq.s32.totalorder %s44, 1
      %p224 = por %p222, %p223
      %p225 = scmp.ne.s32.totalorder %s216, %s217
      %p226 = scmp.eq.s32.totalorder %s44, 0
      %p227 = por %p225, %p226
      %p228 = scmp.ne.s32.totalorder %s216, %s217
      %p229 = scmp.eq.s32.totalorder %s45, 1
      %p230 = por %p228, %p229
      %p232 = scmp.ne.s32.totalorder %s217, %s231
      %p233 = scmp.eq.s32.totalorder %s45, 0
      %p234 = por %p232, %p233
      %s236 = sadd.s32 %s235, 1
      %p239 = scmp.eq.s32.totalorder %s39, 1
      %p240 = scmp.ne.s32.totalorder %s235, %s237
      %p241 = scmp.eq.s32.totalorder %s39, 0
      %p242 = por %p240, %p241
      %p243 = scmp.ne.s32.totalorder %s235, %s237
      %p244 = scmp.eq.s32.totalorder %s44, 1
      %p245 = por %p243, %p244
      %p246 = scmp.ne.s32.totalorder %s237, %s238
      %p247 = scmp.eq.s32.totalorder %s44, 0
      %p248 = por %p246, %p247
      %p249 = scmp.ne.s32.totalorder %s237, %s238
      %p250 = scmp.eq.s32.totalorder %s45, 1
      %p251 = por %p249, %p250
      %p253 = scmp.ne.s32.totalorder %s238, %s252
      %p254 = scmp.eq.s32.totalorder %s45, 0
      %p255 = por %p253, %p254
      %s257 = sadd.s32 %s256, 1
      %p260 = scmp.eq.s32.totalorder %s39, 1
      %p261 = scmp.ne.s32.totalorder %s256, %s258
      %p262 = scmp.eq.s32.totalorder %s39, 0
      %p263 = por %p261, %p262
      %p264 = scmp.ne.s32.totalorder %s256, %s258
      %p265 = scmp.eq.s32.totalorder %s44, 1
      %p266 = por %p264, %p265
      %p267 = scmp.ne.s32.totalorder %s258, %s259
      %p268 = scmp.eq.s32.totalorder %s44, 0
      %p269 = por %p267, %p268
      %p270 = scmp.ne.s32.totalorder %s258, %s259
      %p271 = scmp.eq.s32.totalorder %s45, 1
      %p272 = por %p270, %p271
      %p274 = scmp.ne.s32.totalorder %s259, %s273
      %p275 = scmp.eq.s32.totalorder %s45, 0
      %p276 = por %p274, %p275
      %s278 = sadd.s32 %s277, 1
      %p281 = scmp.eq.s32.totalorder %s39, 1
      %p282 = scmp.ne.s32.totalorder %s277, %s279
      %p283 = scmp.eq.s32.totalorder %s39, 0
      %p284 = por %p282, %p283
      %p285 = scmp.ne.s32.totalorder %s277, %s279
      %p286 = scmp.eq.s32.totalorder %s44, 1
      %p287 = por %p285, %p286
      %p288 = scmp.ne.s32.totalorder %s279, %s280
      %p289 = scmp.eq.s32.totalorder %s44, 0
      %p290 = por %p288, %p289
      %p291 = scmp.ne.s32.totalorder %s279, %s280
      %p292 = scmp.eq.s32.totalorder %s45, 1
      %p293 = por %p291, %p292
      %p295 = scmp.ne.s32.totalorder %s280, %s294
      %p296 = scmp.eq.s32.totalorder %s45, 0
      %p297 = por %p295, %p296
      %s299 = sadd.s32 %s298, 1
      %p302 = scmp.eq.s32.totalorder %s39, 1
      %p303 = scmp.ne.s32.totalorder %s298, %s300
      %p304 = scmp.eq.s32.totalorder %s39, 0
      %p305 = por %p303, %p304
      %p306 = scmp.ne.s32.totalorder %s298, %s300
      %p307 = scmp.eq.s32.totalorder %s44, 1
      %p308 = por %p306, %p307
      %p309 = scmp.ne.s32.totalorder %s300, %s301
      %p310 = scmp.eq.s32.totalorder %s44, 0
      %p311 = por %p309, %p310
      %p312 = scmp.ne.s32.totalorder %s300, %s301
      %p313 = scmp.eq.s32.totalorder %s45, 1
      %p314 = por %p312, %p313
      %p316 = scmp.ne.s32.totalorder %s301, %s315
      %p317 = scmp.eq.s32.totalorder %s45, 0
      %p318 = por %p316, %p317
      %s320 = sadd.s32 %s319, 1
      %p323 = scmp.eq.s32.totalorder %s39, 1
      %p324 = scmp.ne.s32.totalorder %s319, %s321
      %p325 = scmp.eq.s32.totalorder %s39, 0
      %p326 = por %p324, %p325
      %p327 = scmp.ne.s32.totalorder %s319, %s321
      %p328 = scmp.eq.s32.totalorder %s44, 1
      %p329 = por %p327, %p328
      %p330 = scmp.ne.s32.totalorder %s321, %s322
      %p331 = scmp.eq.s32.totalorder %s44, 0
      %p332 = por %p330, %p331
      %p333 = scmp.ne.s32.totalorder %s321, %s322
      %p334 = scmp.eq.s32.totalorder %s45, 1
      %p335 = por %p333, %p334
      %p337 = scmp.ne.s32.totalorder %s322, %s336
      %p338 = scmp.eq.s32.totalorder %s45, 0
      %p339 = por %p337, %p338
      %s341 = sadd.s32 %s340, 1
      %p344 = scmp.eq.s32.totalorder %s39, 1
      %p345 = scmp.ne.s32.totalorder %s340, %s342
      %p346 = scmp.eq.s32.totalorder %s39, 0
      %p347 = por %p345, %p346
      %p348 = scmp.ne.s32.totalorder %s340, %s342
      %p349 = scmp.eq.s32.totalorder %s44, 1
      %p350 = por %p348, %p349
      %p351 = scmp.ne.s32.totalorder %s342, %s343
      %p352 = scmp.eq.s32.totalorder %s44, 0
      %p353 = por %p351, %p352
      %p354 = scmp.ne.s32.totalorder %s342, %s343
      %p355 = scmp.eq.s32.totalorder %s45, 1
      %p356 = por %p354, %p355
      %p358 = scmp.ne.s32.totalorder %s343, %s357
      %p359 = scmp.eq.s32.totalorder %s45, 0
      %p360 = por %p358, %p359
      %s362 = sadd.s32 %s361, 1
      %p365 = scmp.eq.s32.totalorder %s39, 1
      %p366 = scmp.ne.s32.totalorder %s361, %s363
      %p367 = scmp.eq.s32.totalorder %s39, 0
      %p368 = por %p366, %p367
      %p369 = scmp.ne.s32.totalorder %s361, %s363
      %p370 = scmp.eq.s32.totalorder %s44, 1
      %p371 = por %p369, %p370
      %p372 = scmp.ne.s32.totalorder %s363, %s364
      %p373 = scmp.eq.s32.totalorder %s44, 0
      %p374 = por %p372, %p373
      %p375 = scmp.ne.s32.totalorder %s363, %s364
      %p376 = scmp.eq.s32.totalorder %s45, 1
      %p377 = por %p375, %p376
      %p379 = scmp.ne.s32.totalorder %s364, %s378
      %p380 = scmp.eq.s32.totalorder %s45, 0
      %p381 = por %p379, %p380
      %s383 = sadd.s32 %s382, 1
      %p386 = scmp.eq.s32.totalorder %s39, 1
      %p387 = scmp.ne.s32.totalorder %s382, %s384
      %p388 = scmp.eq.s32.totalorder %s39, 0
      %p389 = por %p387, %p388
      %p390 = scmp.ne.s32.totalorder %s382, %s384
      %p391 = scmp.eq.s32.totalorder %s44, 1
      %p392 = por %p390, %p391
      %p393 = scmp.ne.s32.totalorder %s384, %s385
      %p394 = scmp.eq.s32.totalorder %s44, 0
      %p395 = por %p393, %p394
      %p396 = scmp.ne.s32.totalorder %s384, %s385
      %p397 = scmp.eq.s32.totalorder %s45, 1
      %p398 = por %p396, %p397
      %p400 = scmp.ne.s32.totalorder %s385, %s399
      %p401 = scmp.eq.s32.totalorder %s45, 0
      %p402 = por %p400, %p401
      %s404 = sadd.s32 %s403, 1
      %p407 = scmp.eq.s32.totalorder %s39, 1
      %p408 = scmp.ne.s32.totalorder %s403, %s405
      %p409 = scmp.eq.s32.totalorder %s39, 0
      %p410 = por %p408, %p409
      %p411 = scmp.ne.s32.totalorder %s403, %s405
      %p412 = scmp.eq.s32.totalorder %s44, 1
      %p413 = por %p411, %p412
      %p414 = scmp.ne.s32.totalorder %s405, %s406
      %p415 = scmp.eq.s32.totalorder %s44, 0
      %p416 = por %p414, %p415
      %p417 = scmp.ne.s32.totalorder %s405, %s406
      %p418 = scmp.eq.s32.totalorder %s45, 1
      %p419 = por %p417, %p418
      %p421 = scmp.ne.s32.totalorder %s406, %s420
      %p422 = scmp.eq.s32.totalorder %s45, 0
      %p423 = por %p421, %p422
      %s425 = sadd.s32 %s424, 1
      %p428 = scmp.eq.s32.totalorder %s39, 1
      %p429 = scmp.ne.s32.totalorder %s424, %s426
      %p430 = scmp.eq.s32.totalorder %s39, 0
      %p431 = por %p429, %p430
      %p432 = scmp.ne.s32.totalorder %s424, %s426
      %p433 = scmp.eq.s32.totalorder %s44, 1
      %p434 = por %p432, %p433
      %p435 = scmp.ne.s32.totalorder %s426, %s427
      %p436 = scmp.eq.s32.totalorder %s44, 0
      %p437 = por %p435, %p436
      %p438 = scmp.ne.s32.totalorder %s426, %s427
      %p439 = scmp.eq.s32.totalorder %s45, 1
      %p440 = por %p438, %p439
      %p442 = scmp.ne.s32.totalorder %s427, %s441
      %p443 = scmp.eq.s32.totalorder %s45, 0
      %p444 = por %p442, %p443
      %s446 = sadd.s32 %s445, 1
      %p449 = scmp.eq.s32.totalorder %s39, 1
      %p450 = scmp.ne.s32.totalorder %s445, %s447
      %p451 = scmp.eq.s32.totalorder %s39, 0
      %p452 = por %p450, %p451
      %p453 = scmp.ne.s32.totalorder %s445, %s447
      %p454 = scmp.eq.s32.totalorder %s44, 1
      %p455 = por %p453, %p454
      %p456 = scmp.ne.s32.totalorder %s447, %s448
      %p457 = scmp.eq.s32.totalorder %s44, 0
      %p458 = por %p456, %p457
      %p459 = scmp.ne.s32.totalorder %s447, %s448
      %p460 = scmp.eq.s32.totalorder %s45, 1
      %p461 = por %p459, %p460
      %p463 = scmp.ne.s32.totalorder %s448, %s462
      %p464 = scmp.eq.s32.totalorder %s45, 0
      %p465 = por %p463, %p464
      %s467 = sadd.s32 %s466, 1
      %p470 = scmp.eq.s32.totalorder %s39, 1
      %p471 = scmp.ne.s32.totalorder %s466, %s468
      %p472 = scmp.eq.s32.totalorder %s39, 0
      %p473 = por %p471, %p472
      %p474 = scmp.ne.s32.totalorder %s466, %s468
      %p475 = scmp.eq.s32.totalorder %s44, 1
      %p476 = por %p474, %p475
      %p477 = scmp.ne.s32.totalorder %s468, %s469
      %p478 = scmp.eq.s32.totalorder %s44, 0
      %p479 = por %p477, %p478
      %p480 = scmp.ne.s32.totalorder %s468, %s469
      %p481 = scmp.eq.s32.totalorder %s45, 1
      %p482 = por %p480, %p481
      %p484 = scmp.ne.s32.totalorder %s469, %s483
      %p485 = scmp.eq.s32.totalorder %s45, 0
      %p486 = por %p484, %p485
      %s487 = ssub.s32 %s39, %s46
      %p488 = scmp.eq.s32.totalorder %s487, 0
      %s490 = sadd.s32 %s489, 1
      %s491 = scalar_select %p488, %s489, %s490
      %p494 = pneg %p488
      %p495 = scmp.eq.s32.totalorder %s39, 1
      %p496 = por %p494, %p495
      %p497 = scmp.ne.s32.totalorder %s489, %s492
      %p498 = scmp.eq.s32.totalorder %s39, 0
      %p499 = por %p497, %p498
      %p500 = scmp.ne.s32.totalorder %s489, %s492
      %p501 = scmp.eq.s32.totalorder %s44, 1
      %p502 = por %p500, %p501
      %p503 = scmp.ne.s32.totalorder %s492, %s493
      %p504 = scmp.eq.s32.totalorder %s44, 0
      %p505 = por %p503, %p504
      %p506 = scmp.ne.s32.totalorder %s492, %s493
      %p507 = scmp.eq.s32.totalorder %s45, 1
      %p508 = por %p506, %p507
      %p510 = scmp.ne.s32.totalorder %s493, %s509
      %p511 = scmp.eq.s32.totalorder %s45, 0
      %p512 = por %p510, %p511
      %s513 = ssub.s32 %s39, %s46
      %p514 = scmp.eq.s32.totalorder %s513, 0
      %s516 = sadd.s32 %s515, 1
      %s517 = scalar_select %p514, %s515, %s516
      %p520 = pneg %p514
      %p521 = scmp.eq.s32.totalorder %s39, 1
      %p522 = por %p520, %p521
      %p523 = scmp.ne.s32.totalorder %s515, %s518
      %p524 = scmp.eq.s32.totalorder %s39, 0
      %p525 = por %p523, %p524
      %p526 = scmp.ne.s32.totalorder %s515, %s518
      %p527 = scmp.eq.s32.totalorder %s44, 1
      %p528 = por %p526, %p527
      %p529 = scmp.ne.s32.totalorder %s518, %s519
      %p530 = scmp.eq.s32.totalorder %s44, 0
      %p531 = por %p529, %p530
      %p532 = scmp.ne.s32.totalorder %s518, %s519
      %p533 = scmp.eq.s32.totalorder %s45, 1
      %p534 = por %p532, %p533
      %p536 = scmp.ne.s32.totalorder %s519, %s535
      %p537 = scmp.eq.s32.totalorder %s45, 0
      %p538 = por %p536, %p537
      %s539 = ssub.s32 %s39, %s46
      %p540 = scmp.eq.s32.totalorder %s539, 0
      %s542 = sadd.s32 %s541, 1
      %s543 = scalar_select %p540, %s541, %s542
      %p546 = pneg %p540
      %p547 = scmp.eq.s32.totalorder %s39, 1
      %p548 = por %p546, %p547
      %p549 = scmp.ne.s32.totalorder %s541, %s544
      %p550 = scmp.eq.s32.totalorder %s39, 0
      %p551 = por %p549, %p550
      %p552 = scmp.ne.s32.totalorder %s541, %s544
      %p553 = scmp.eq.s32.totalorder %s44, 1
      %p554 = por %p552, %p553
      %p555 = scmp.ne.s32.totalorder %s544, %s545
      %p556 = scmp.eq.s32.totalorder %s44, 0
      %p557 = por %p555, %p556
      %p558 = scmp.ne.s32.totalorder %s544, %s545
      %p559 = scmp.eq.s32.totalorder %s45, 1
      %p560 = por %p558, %p559
      %p562 = scmp.ne.s32.totalorder %s545, %s561
      %p563 = scmp.eq.s32.totalorder %s45, 0
      %p564 = por %p562, %p563
      %s565 = ssub.s32 %s39, %s46
      %p566 = scmp.eq.s32.totalorder %s565, 0
      %s568 = sadd.s32 %s567, 1
      %s569 = scalar_select %p566, %s567, %s568
      %p572 = pneg %p566
      %p573 = scmp.eq.s32.totalorder %s39, 1
      %p574 = por %p572, %p573
      %p575 = scmp.ne.s32.totalorder %s567, %s570
      %p576 = scmp.eq.s32.totalorder %s39, 0
      %p577 = por %p575, %p576
      %p578 = scmp.ne.s32.totalorder %s567, %s570
      %p579 = scmp.eq.s32.totalorder %s44, 1
      %p580 = por %p578, %p579
      %p581 = scmp.ne.s32.totalorder %s570, %s571
      %p582 = scmp.eq.s32.totalorder %s44, 0
      %p583 = por %p581, %p582
      %p584 = scmp.ne.s32.totalorder %s570, %s571
      %p585 = scmp.eq.s32.totalorder %s45, 1
      %p586 = por %p584, %p585
      %p588 = scmp.ne.s32.totalorder %s571, %s587
      %p589 = scmp.eq.s32.totalorder %s45, 0
      %p590 = por %p588, %p589
      %p591 = scmp.le.s32.totalorder 1, %s39
      %p592 = scmp.lt.s32.totalorder %s39, 3
      %p593 = pnand %p591, %p592
      %p594 = pneg %p593
      // Predicated region
      $region9: #{mfi_model_forward.3} parent=5 // pred_check
        _
      $region10: #{mfi_model_forward.3} parent=5 // pred_check_branch
        %596 = sbr.rel (%p593) target = $region12
      $region11: #{mfi_model_forward.3} parent=5 // pred_region
        %s597 = ssub.s32 %s39, 1
        // Predicated region
        $region13: #{mfi_model_forward.3} parent=11 // pred_check
          %p598 = pneg %p164
        $region14: #{mfi_model_forward.3} parent=11 // pred_check_branch
          %600 = sbr.rel (%p598) target = $region16
        $region15: #{mfi_model_forward.3} parent=11 // pred_region
          _
        $region16: #{mfi_model_forward.3} parent=11 // pred_fallthru
          _
        // Predicated region
        $region17: #{mfi_model_forward.3} parent=11 // pred_check
          %p601 = pneg %p185
        $region18: #{mfi_model_forward.3} parent=11 // pred_check_branch
          %603 = sbr.rel (%p601) target = $region20
        $region19: #{mfi_model_forward.3} parent=11 // pred_region
          _
        $region20: #{mfi_model_forward.3} parent=11 // pred_fallthru
          _
        // Predicated region
        $region21: #{mfi_model_forward.3} parent=11 // pred_check
          %p604 = pneg %p206
        $region22: #{mfi_model_forward.3} parent=11 // pred_check_branch
          %606 = sbr.rel (%p604) target = $region24
        $region23: #{mfi_model_forward.3} parent=11 // pred_region
          _
        $region24: #{mfi_model_forward.3} parent=11 // pred_fallthru
          _
        // Predicated region
        $region25: #{mfi_model_forward.3} parent=11 // pred_check
          %p607 = pneg %p227
        $region26: #{mfi_model_forward.3} parent=11 // pred_check_branch
          %609 = sbr.rel (%p607) target = $region28
        $region27: #{mfi_model_forward.3} parent=11 // pred_region
          _
        $region28: #{mfi_model_forward.3} parent=11 // pred_fallthru
          _
        // Predicated region
        $region29: #{mfi_model_forward.3} parent=11 // pred_check
          %p610 = pneg %p248
        $region30: #{mfi_model_forward.3} parent=11 // pred_check_branch
          %612 = sbr.rel (%p610) target = $region32
        $region31: #{mfi_model_forward.3} parent=11 // pred_region
          _
        $region32: #{mfi_model_forward.3} parent=11 // pred_fallthru
          _
        // Predicated region
        $region33: #{mfi_model_forward.3} parent=11 // pred_check
          %p613 = pneg %p269
        $region34: #{mfi_model_forward.3} parent=11 // pred_check_branch
          %615 = sbr.rel (%p613) target = $region36
        $region35: #{mfi_model_forward.3} parent=11 // pred_region
          _
        $region36: #{mfi_model_forward.3} parent=11 // pred_fallthru
          _
        // Predicated region
        $region37: #{mfi_model_forward.3} parent=11 // pred_check
          %p616 = pneg %p290
        $region38: #{mfi_model_forward.3} parent=11 // pred_check_branch
          %618 = sbr.rel (%p616) target = $region40
        $region39: #{mfi_model_forward.3} parent=11 // pred_region
          _
        $region40: #{mfi_model_forward.3} parent=11 // pred_fallthru
          _
        // Predicated region
        $region41: #{mfi_model_forward.3} parent=11 // pred_check
          %p619 = pneg %p311
        $region42: #{mfi_model_forward.3} parent=11 // pred_check_branch
          %621 = sbr.rel (%p619) target = $region44
        $region43: #{mfi_model_forward.3} parent=11 // pred_region
          _
        $region44: #{mfi_model_forward.3} parent=11 // pred_fallthru
          _
        // Predicated region
        $region45: #{mfi_model_forward.3} parent=11 // pred_check
          %p622 = pneg %p332
        $region46: #{mfi_model_forward.3} parent=11 // pred_check_branch
          %624 = sbr.rel (%p622) target = $region48
        $region47: #{mfi_model_forward.3} parent=11 // pred_region
          _
        $region48: #{mfi_model_forward.3} parent=11 // pred_fallthru
          _
        // Predicated region
        $region49: #{mfi_model_forward.3} parent=11 // pred_check
          %p625 = pneg %p353
        $region50: #{mfi_model_forward.3} parent=11 // pred_check_branch
          %627 = sbr.rel (%p625) target = $region52
        $region51: #{mfi_model_forward.3} parent=11 // pred_region
          _
        $region52: #{mfi_model_forward.3} parent=11 // pred_fallthru
          _
        // Predicated region
        $region53: #{mfi_model_forward.3} parent=11 // pred_check
          %p628 = pneg %p374
        $region54: #{mfi_model_forward.3} parent=11 // pred_check_branch
          %630 = sbr.rel (%p628) target = $region56
        $region55: #{mfi_model_forward.3} parent=11 // pred_region
          _
        $region56: #{mfi_model_forward.3} parent=11 // pred_fallthru
          _
        // Predicated region
        $region57: #{mfi_model_forward.3} parent=11 // pred_check
          %p631 = pneg %p395
        $region58: #{mfi_model_forward.3} parent=11 // pred_check_branch
          %633 = sbr.rel (%p631) target = $region60
        $region59: #{mfi_model_forward.3} parent=11 // pred_region
          _
        $region60: #{mfi_model_forward.3} parent=11 // pred_fallthru
          _
        // Predicated region
        $region61: #{mfi_model_forward.3} parent=11 // pred_check
          %p634 = pneg %p416
        $region62: #{mfi_model_forward.3} parent=11 // pred_check_branch
          %636 = sbr.rel (%p634) target = $region64
        $region63: #{mfi_model_forward.3} parent=11 // pred_region
          _
        $region64: #{mfi_model_forward.3} parent=11 // pred_fallthru
          _
        // Predicated region
        $region65: #{mfi_model_forward.3} parent=11 // pred_check
          %p637 = pneg %p437
        $region66: #{mfi_model_forward.3} parent=11 // pred_check_branch
          %639 = sbr.rel (%p637) target = $region68
        $region67: #{mfi_model_forward.3} parent=11 // pred_region
          _
        $region68: #{mfi_model_forward.3} parent=11 // pred_fallthru
          _
        // Predicated region
        $region69: #{mfi_model_forward.3} parent=11 // pred_check
          %p640 = pneg %p458
        $region70: #{mfi_model_forward.3} parent=11 // pred_check_branch
          %642 = sbr.rel (%p640) target = $region72
        $region71: #{mfi_model_forward.3} parent=11 // pred_region
          _
        $region72: #{mfi_model_forward.3} parent=11 // pred_fallthru
          _
        // Predicated region
        $region73: #{mfi_model_forward.3} parent=11 // pred_check
          %p643 = pneg %p479
        $region74: #{mfi_model_forward.3} parent=11 // pred_check_branch
          %645 = sbr.rel (%p643) target = $region76
        $region75: #{mfi_model_forward.3} parent=11 // pred_region
          _
        $region76: #{mfi_model_forward.3} parent=11 // pred_fallthru
          _
      $region12: #{mfi_model_forward.3} parent=5 // pred_fallthru
        _
      %p646 = scmp.lt.s32.totalorder %s39, 2
      // Predicated region
      $region77: #{mfi_model_forward.3} parent=5 // pred_check
        %p647 = pneg %p646
      $region78: #{mfi_model_forward.3} parent=5 // pred_check_branch
        %649 = sbr.rel (%p647) target = $region80
      $region79: #{mfi_model_forward.3} parent=5 // pred_region
        // Predicated region
        $region81: #{mfi_model_forward.3} parent=79 // pred_check
          %p650 = pneg %p59
        $region82: #{mfi_model_forward.3} parent=79 // pred_check_branch
          %652 = sbr.rel (%p650) target = $region84
        $region83: #{mfi_model_forward.3} parent=79 // pred_region
          %p653 = scmp.lt.s32.totalorder %s39, 1
          %s654 = scalar_select %p653, %s39, 1
          %s655 = smul.addr %s654, 8
          %s656 = scalar_lea.vmem %s0, %s655
        $region84: #{mfi_model_forward.3} parent=79 // pred_fallthru
          _
        // Predicated region
        $region85: #{mfi_model_forward.3} parent=79 // pred_check
          %p657 = pneg %p85
        $region86: #{mfi_model_forward.3} parent=79 // pred_check_branch
          %659 = sbr.rel (%p657) target = $region88
        $region87: #{mfi_model_forward.3} parent=79 // pred_region
          %p660 = scmp.lt.s32.totalorder %s39, 1
          %s661 = scalar_select %p660, %s39, 1
          %s662 = smul.addr %s661, 8
          %s663 = scalar_lea.vmem %s1, %s662
        $region88: #{mfi_model_forward.3} parent=79 // pred_fallthru
          _
        // Predicated region
        $region89: #{mfi_model_forward.3} parent=79 // pred_check
          %p664 = pneg %p111
        $region90: #{mfi_model_forward.3} parent=79 // pred_check_branch
          %666 = sbr.rel (%p664) target = $region92
        $region91: #{mfi_model_forward.3} parent=79 // pred_region
          %p667 = scmp.lt.s32.totalorder %s39, 1
          %s668 = scalar_select %p667, %s39, 1
          %s669 = smul.addr %s668, 8
          %s670 = scalar_lea.vmem %s2, %s669
        $region92: #{mfi_model_forward.3} parent=79 // pred_fallthru
          _
        // Predicated region
        $region93: #{mfi_model_forward.3} parent=79 // pred_check
          %p671 = pneg %p137
        $region94: #{mfi_model_forward.3} parent=79 // pred_check_branch
          %673 = sbr.rel (%p671) target = $region96
        $region95: #{mfi_model_forward.3} parent=79 // pred_region
          %p674 = scmp.lt.s32.totalorder %s39, 1
          %s675 = scalar_select %p674, %s39, 1
          %s676 = smul.addr %s675, 8
          %s677 = scalar_lea.vmem %s3, %s676
        $region96: #{mfi_model_forward.3} parent=79 // pred_fallthru
          _
      $region80: #{mfi_model_forward.3} parent=5 // pred_fallthru
        _
      %p678 = scmp.le.s32.totalorder 1, %s39
      %p679 = scmp.lt.s32.totalorder %s39, 3
      %p680 = pnand %p678, %p679
      %p681 = pneg %p680
      // Predicated region
      $region97: #{mfi_model_forward.3} parent=5 // pred_check
        _
      $region98: #{mfi_model_forward.3} parent=5 // pred_check_branch
        %683 = sbr.rel (%p680) target = $region100
      $region99: #{mfi_model_forward.3} parent=5 // pred_region
        %s684 = ssub.s32 %s39, 1
        %p685 = scmp.lt.s32.totalorder %s44, 1
        %s686 = scalar_select %p685, %s44, 1
        %s687 = smul.addr %s686, 8
        %s688 = scalar_lea.vmem %s0, %s687
        %p689 = pneg %p65
        %p690 = pneg %p62
        %p691 = scmp.lt.s32.totalorder %s44, 1
        %s692 = scalar_select %p691, %s44, 1
        %s693 = smul.addr %s692, 8
        %s694 = scalar_lea.vmem %s1, %s693
        %p695 = pneg %p91
        %p696 = pneg %p88
        %p697 = scmp.lt.s32.totalorder %s44, 1
        %s698 = scalar_select %p697, %s44, 1
        %s699 = smul.addr %s698, 8
        %s700 = scalar_lea.vmem %s2, %s699
        %p701 = pneg %p117
        %p702 = pneg %p114
        %p703 = scmp.lt.s32.totalorder %s44, 1
        %s704 = scalar_select %p703, %s44, 1
        %s705 = smul.addr %s704, 8
        %s706 = scalar_lea.vmem %s3, %s705
        %p707 = pneg %p143
        %p708 = pneg %p140
        %p709 = pneg %p164
        %p710 = pneg %p161
        %p711 = pneg %p185
        %p712 = pneg %p182
        %p713 = pneg %p206
        %p714 = pneg %p203
        %p715 = pneg %p227
        %p716 = pneg %p224
        %p717 = pneg %p248
        %p718 = pneg %p245
        %p719 = pneg %p269
        %p720 = pneg %p266
        %p721 = pneg %p290
        %p722 = pneg %p287
        %p723 = pneg %p311
        %p724 = pneg %p308
        %p725 = pneg %p332
        %p726 = pneg %p329
        %p727 = pneg %p353
        %p728 = pneg %p350
        %p729 = pneg %p374
        %p730 = pneg %p371
        %p731 = pneg %p395
        %p732 = pneg %p392
        %p733 = pneg %p416
        %p734 = pneg %p413
        %p735 = pneg %p437
        %p736 = pneg %p434
        %p737 = pneg %p458
        %p738 = pneg %p455
        %p739 = pneg %p479
        %p740 = pneg %p476
        %p741 = pneg %p505
        %p742 = pneg %p502
        %s743 = sand.u32 %s492, 1
        %s744 = scalar_lea.sflag [#allocation4], %s743
        %s745 = sand.u32 %s492, 1
        %s746 = smul.addr %s745, 8
        %s747 = scalar_lea.vmem [#allocation3], %s746
        %p748 = pneg %p531
        %p749 = pneg %p528
        %s750 = sand.u32 %s44, 1
        %s751 = scalar_lea.sflag [#allocation6], %s750
        %s752 = sand.u32 %s518, 1
        %s753 = smul.addr %s752, 8
        %s754 = scalar_lea.vmem [#allocation5], %s753
        %p755 = pneg %p557
        %p756 = pneg %p554
        %s757 = sand.u32 %s44, 1
        %s758 = scalar_lea.sflag [#allocation6], %s757
        %s759 = sand.u32 %s544, 1
        %s760 = smul.addr %s759, 8
        %s761 = scalar_lea.vmem [#allocation7], %s760
        %p762 = pneg %p583
        %p763 = pneg %p580
        %s764 = sand.u32 %s570, 1
        %s765 = scalar_lea.sflag [#allocation9], %s764
        %s766 = sand.u32 %s570, 1
        %s767 = smul.addr %s766, 8
        %s768 = scalar_lea.vmem [#allocation8], %s767
        %p769 = scmp.lt.s32.totalorder %s44, 1
        %s770 = scalar_select %p769, %s44, 1
        %s771 = smul.addr %s770, 8
        %s772 = scalar_lea.vmem %s0, %s771
        %p773 = scmp.lt.s32.totalorder %s44, 1
        %s774 = scalar_select %p773, %s44, 1
        %s775 = smul.addr %s774, 8
        %s776 = scalar_lea.vmem %s1, %s775
        %p777 = scmp.lt.s32.totalorder %s44, 1
        %s778 = scalar_select %p777, %s44, 1
        %s779 = smul.addr %s778, 8
        %s780 = scalar_lea.vmem %s2, %s779
        %p781 = scmp.lt.s32.totalorder %s44, 1
        %s782 = scalar_select %p781, %s44, 1
        %s783 = smul.addr %s782, 8
        %s784 = scalar_lea.vmem %s3, %s783
        %v786 = vld [vmem:[%s784] sm:$0xff]
        %v787 = vld [vmem:[%s4] sm:$0x1]
        %v788 = vld [vmem:[%s5] sm:$0x1]
        %vm789 = vcmask 261120
        %v790 = vsel %vm789, %v786, 0.0
        %791 = vadd.xlane.f32.xlu0 %v790
        %v792 = vpop.xlane.xlu0 %791
        %v793 = vrcp.pop 32.0
        %v794 = vmul.f32 %v792, %v793
        %v795 = vsub.f32 %v786, %v794
        %v796 = vmul.f32 %v795, %v795
        %v797 = vsel %vm789, %v796, 0.0
        %798 = vadd.xlane.f32.xlu0 %v797
        %v799 = vpop.xlane.xlu0 %798
        %v800 = vmul.f32 %v799, %v793
        %v801 = vadd.f32 %v800, 1e-05
        %v802 = vrsqrt.pop %v801
        %v803 = vmul.f32 %v795, %v802
        %v805 = vlaneseq
        %v806 = vshrl.u32 %v805, 7
        %v807 = vsub.s32 0, %v806
        %v808 = vrot.slane %v787, %v807
        %v810 = vmul.f32 %v803, %v808
        %v812 = vlaneseq
        %v813 = vshrl.u32 %v812, 7
        %v814 = vsub.s32 0, %v813
        %v815 = vrot.slane %v788, %v814
        %v817 = vadd.f32 %v810, %v815
        %v818 = vpack.c.bf16 %v817, %v817
        %v819 = vld [vmem:[%s6] sm:$0xf]
        %v820 = vld [vmem:[%s6 + $0x4] sm:$0xf]
        %v821 = vld [vmem:[%s6 + $0x8] sm:$0xf]
        %v822 = vld [vmem:[%s6 + $0xc] sm:$0xf]
        %v823 = vld [vmem:[%s7] sm:$0x1]
        %v825 = vlaneseq
        %v826 = vshrl.u32 %v825, 7
        %v827 = vsub.s32 0, %v826
        %v828 = vrot.slane %v823, %v827
        %v834 = vunpack.c.l.b16 %v819
        %v835 = vunpack.c.l.b16 %v820
        %v836 = vunpack.c.l.b16 %v821
        %v837 = vunpack.c.l.b16 %v822
        %v838 = vpack.c.b16 %v835, %v834
        %v839 = vpack.c.b16 %v837, %v836
        %v843 = vsel %vm789, %v818, 0
        %845 = vmatprep.subr.bf16.mxu0 0
        %846 = vmatpush1.bf16.msra.mxu0 %v838
        %847 = vmatprep.subr.bf16.mxu0 0
        %848 = vmatpush1.bf16.msra.mxu0 %v839
        %849 = vmatprep.subr.bf16.mxu0 0
        %850 = vmatpush1.bf16.msra.mxu0 0
        %851 = vmatprep.subr.bf16.mxu0 0
        %852 = vmatpush1.bf16.msra.mxu0 0
        %853 = vmatprep.subr.bf16.mxu0 0
        %854 = vmatpush1.bf16.msra.mxu0 0
        %855 = vmatprep.subr.bf16.mxu0 0
        %856 = vmatpush1.bf16.msra.mxu0 0
        %857 = vmatprep.subr.bf16.mxu0 0
        %858 = vmatpush1.bf16.msra.mxu0 0
        %859 = vmatprep.subr.bf16.mxu0 0
        %860 = vmatpush1.bf16.msra.mxu0 0
        %861 = vmatprep.subr.bf16.mxu0 0
        %862 = vmatpush1.bf16.msra.mxu0 0
        %863 = vmatprep.subr.bf16.mxu0 0
        %864 = vmatpush1.bf16.msra.mxu0 0
        %865 = vmatprep.subr.bf16.mxu0 0
        %866 = vmatpush1.bf16.msra.mxu0 0
        %867 = vmatprep.subr.bf16.mxu0 0
        %868 = vmatpush1.bf16.msra.mxu0 0
        %869 = vmatprep.subr.bf16.mxu0 0
        %870 = vmatpush1.bf16.msra.mxu0 0
        %871 = vmatprep.subr.bf16.mxu0 0
        %872 = vmatpush1.bf16.msra.mxu0 0
        %873 = vmatprep.subr.bf16.mxu0 0
        %874 = vmatpush1.bf16.msra.mxu0 0
        %875 = vmatprep.subr.bf16.mxu0 0
        %876 = vmatpush1.bf16.msra.mxu0 0
        %877 = vmatprep.mubr.bf16.mxu0 0
        %878 = vmatmul.mubr.bf16.gmra.mrb[0].mxu0 %v843
        %v879 = vpop.f32.mrb[0].mxu0
        %v880 = vadd.f32 %v828, %v879
        %v881 = vpop.f32.mrb[0].mxu0
        %v882 = vpop.f32.mrb[0].mxu0
        %v883 = vpop.f32.mrb[0].mxu0
        %884 = vdwg.mxu0
        %v885 = vld [vmem:[%s8] sm:$0xf]
        %v886 = vld [vmem:[%s8 + $0x4] sm:$0xf]
        %v887 = vld [vmem:[%s8 + $0x8] sm:$0xf]
        %v888 = vld [vmem:[%s8 + $0xc] sm:$0xf]
        %v889 = vld [vmem:[%s9] sm:$0x1]
        %v891 = vlaneseq
        %v892 = vshrl.u32 %v891, 7
        %v893 = vsub.s32 0, %v892
        %v894 = vrot.slane %v889, %v893
        %v900 = vunpack.c.l.b16 %v885
        %v901 = vunpack.c.l.b16 %v886
        %v902 = vunpack.c.l.b16 %v887
        %v903 = vunpack.c.l.b16 %v888
        %v904 = vpack.c.b16 %v901, %v900
        %v905 = vpack.c.b16 %v903, %v902
        %908 = vmatprep.subr.bf16.mxu0 0
        %909 = vmatpush1.bf16.msra.mxu0 %v904
        %910 = vmatprep.subr.bf16.mxu0 0
        %911 = vmatpush1.bf16.msra.mxu0 %v905
        %912 = vmatprep.subr.bf16.mxu0 0
        %913 = vmatpush1.bf16.msra.mxu0 0
        %914 = vmatprep.subr.bf16.mxu0 0
        %915 = vmatpush1.bf16.msra.mxu0 0
        %916 = vmatprep.subr.bf16.mxu0 0
        %917 = vmatpush1.bf16.msra.mxu0 0
        %918 = vmatprep.subr.bf16.mxu0 0
        %919 = vmatpush1.bf16.msra.mxu0 0
        %920 = vmatprep.subr.bf16.mxu0 0
        %921 = vmatpush1.bf16.msra.mxu0 0
        %922 = vmatprep.subr.bf16.mxu0 0
        %923 = vmatpush1.bf16.msra.mxu0 0
        %924 = vmatprep.subr.bf16.mxu0 0
        %925 = vmatpush1.bf16.msra.mxu0 0
        %926 = vmatprep.subr.bf16.mxu0 0
        %927 = vmatpush1.bf16.msra.mxu0 0
        %928 = vmatprep.subr.bf16.mxu0 0
        %929 = vmatpush1.bf16.msra.mxu0 0
        %930 = vmatprep.subr.bf16.mxu0 0
        %931 = vmatpush1.bf16.msra.mxu0 0
        %932 = vmatprep.subr.bf16.mxu0 0
        %933 = vmatpush1.bf16.msra.mxu0 0
        %934 = vmatprep.subr.bf16.mxu0 0
        %935 = vmatpush1.bf16.msra.mxu0 0
        %936 = vmatprep.subr.bf16.mxu0 0
        %937 = vmatpush1.bf16.msra.mxu0 0
        %938 = vmatprep.subr.bf16.mxu0 0
        %939 = vmatpush1.bf16.msra.mxu0 0
        %940 = vmatprep.mubr.bf16.mxu0 0
        %941 = vmatmul.mubr.bf16.gmra.mrb[0].mxu0 %v843
        %v942 = vpop.f32.mrb[0].mxu0
        %v943 = vadd.f32 %v894, %v942
        %v944 = vpop.f32.mrb[0].mxu0
        %v945 = vpop.f32.mrb[0].mxu0
        %v946 = vpop.f32.mrb[0].mxu0
        %947 = vdwg.mxu0
        %v948 = vld [vmem:[%s10] sm:$0xf]
        %v949 = vld [vmem:[%s10 + $0x4] sm:$0xf]
        %v950 = vld [vmem:[%s10 + $0x8] sm:$0xf]
        %v951 = vld [vmem:[%s10 + $0xc] sm:$0xf]
        %v952 = vld [vmem:[%s11] sm:$0x1]
        %v954 = vlaneseq
        %v955 = vshrl.u32 %v954, 7
        %v956 = vsub.s32 0, %v955
        %v957 = vrot.slane %v952, %v956
        %v963 = vunpack.c.l.b16 %v948
        %v964 = vunpack.c.l.b16 %v949
        %v965 = vunpack.c.l.b16 %v950
        %v966 = vunpack.c.l.b16 %v951
        %v967 = vpack.c.b16 %v964, %v963
        %v968 = vpack.c.b16 %v966, %v965
        %971 = vmatprep.subr.bf16.mxu0 0
        %972 = vmatpush1.bf16.msra.mxu0 %v967
        %973 = vmatprep.subr.bf16.mxu0 0
        %974 = vmatpush1.bf16.msra.mxu0 %v968
        %975 = vmatprep.subr.bf16.mxu0 0
        %976 = vmatpush1.bf16.msra.mxu0 0
        %977 = vmatprep.subr.bf16.mxu0 0
        %978 = vmatpush1.bf16.msra.mxu0 0
        %979 = vmatprep.subr.bf16.mxu0 0
        %980 = vmatpush1.bf16.msra.mxu0 0
        %981 = vmatprep.subr.bf16.mxu0 0
        %982 = vmatpush1.bf16.msra.mxu0 0
        %983 = vmatprep.subr.bf16.mxu0 0
        %984 = vmatpush1.bf16.msra.mxu0 0
        %985 = vmatprep.subr.bf16.mxu0 0
        %986 = vmatpush1.bf16.msra.mxu0 0
        %987 = vmatprep.subr.bf16.mxu0 0
        %988 = vmatpush1.bf16.msra.mxu0 0
        %989 = vmatprep.subr.bf16.mxu0 0
        %990 = vmatpush1.bf16.msra.mxu0 0
        %991 = vmatprep.subr.bf16.mxu0 0
        %992 = vmatpush1.bf16.msra.mxu0 0
        %993 = vmatprep.subr.bf16.mxu0 0
        %994 = vmatpush1.bf16.msra.mxu0 0
        %995 = vmatprep.subr.bf16.mxu0 0
        %996 = vmatpush1.bf16.msra.mxu0 0
        %997 = vmatprep.subr.bf16.mxu0 0
        %998 = vmatpush1.bf16.msra.mxu0 0
        %999 = vmatprep.subr.bf16.mxu0 0
        %1000 = vmatpush1.bf16.msra.mxu0 0
        %1001 = vmatprep.subr.bf16.mxu0 0
        %1002 = vmatpush1.bf16.msra.mxu0 0
        %1003 = vmatprep.mubr.bf16.mxu0 0
        %1004 = vmatmul.mubr.bf16.gmra.mrb[0].mxu0 %v843
        %v1005 = vpop.f32.mrb[0].mxu0
        %v1006 = vadd.f32 %v957, %v1005
        %v1007 = vpop.f32.mrb[0].mxu0
        %v1008 = vpop.f32.mrb[0].mxu0
        %v1009 = vpop.f32.mrb[0].mxu0
        %1010 = vdwg.mxu0
        %v1011 = vmul.f32 %v880, 0.7
        %v1012 = vld [vmem:[%s772] sm:$0xff]
        %v1013 = vmul.f32 %v1012, 0.3
        %v1014 = vadd.f32 %v1011, %v1013
        %v1015 = vmul.f32 %v943, 0.7
        %v1016 = vld [vmem:[%s776] sm:$0xff]
        %v1017 = vmul.f32 %v1016, 0.3
        %v1018 = vadd.f32 %v1015, %v1017
        %v1019 = vld [vmem:[%s780] sm:$0xff]
        %v1020 = vmul.f32 %v1019, 0.3
        %v1021 = vmul.f32 %v1006, 0.7
        %v1022 = vadd.f32 %v1020, %v1021
        %1023 = vst.msk [vmem:[%s754] sm:$0xff] %vm789, %v1014
        %1024 = vst.msk [vmem:[%s761] sm:$0xff] %vm789, %v1018
        %1025 = vst.msk [vmem:[%s768] sm:$0xff] %vm789, %v1022
        %v1026 = vmul.f32 %v1014, 0.35355338
        %v1027 = vpack.c.bf16 %v1026, %v1026
        %v1028 = vpack.c.bf16 %v1018, %v1018
        %v1029 = vpack.c.bf16 %v1022, %v1022
        %vm1030 = vcmask 64512
        %v1032 = vsel %vm1030, %v1027, 0
        %v1035 = vsel %vm1030, %v1028, 0
        %1037 = vmatprep.subr.bf16.mxu0 0
        %1038 = vmatpush1.bf16.xpose.msra.mxu0 %v1035
        %1039 = vmatprep.subr.bf16.mxu0 0
        %1040 = vmatpush1.bf16.xpose.msra.mxu0 0
        %1041 = vmatprep.subr.bf16.mxu0 0
        %1042 = vmatpush1.bf16.xpose.msra.mxu0 0
        %1043 = vmatprep.subr.bf16.mxu0 0
        %1044 = vmatpush1.bf16.xpose.msra.mxu0 0
        %1045 = vmatprep.subr.bf16.mxu0 0
        %1046 = vmatpush1.bf16.xpose.msra.mxu0 0
        %1047 = vmatprep.subr.bf16.mxu0 0
        %1048 = vmatpush1.bf16.xpose.msra.mxu0 0
        %1049 = vmatprep.subr.bf16.mxu0 0
        %1050 = vmatpush1.bf16.xpose.msra.mxu0 0
        %1051 = vmatprep.subr.bf16.mxu0 0
        %1052 = vmatpush1.bf16.xpose.msra.mxu0 0
        %1053 = vmatprep.subr.bf16.mxu0 0
        %1054 = vmatpush1.bf16.xpose.msra.mxu0 0
        %1055 = vmatprep.subr.bf16.mxu0 0
        %1056 = vmatpush1.bf16.xpose.msra.mxu0 0
        %1057 = vmatprep.subr.bf16.mxu0 0
        %1058 = vmatpush1.bf16.xpose.msra.mxu0 0
        %1059 = vmatprep.subr.bf16.mxu0 0
        %1060 = vmatpush1.bf16.xpose.msra.mxu0 0
        %1061 = vmatprep.subr.bf16.mxu0 0
        %1062 = vmatpush1.bf16.xpose.msra.mxu0 0
        %1063 = vmatprep.subr.bf16.mxu0 0
        %1064 = vmatpush1.bf16.xpose.msra.mxu0 0
        %1065 = vmatprep.subr.bf16.mxu0 0
        %1066 = vmatpush1.bf16.xpose.msra.mxu0 0
        %1067 = vmatprep.subr.bf16.mxu0 0
        %1068 = vmatpush1.bf16.xpose.msra.mxu0 0
        %1069 = vmatprep.mubr.bf16.mxu0 0
        %1070 = vmatmul.mubr.bf16.gmra.mrb[0].mxu0 %v1032
        %v1071 = vpop.f32.mrb[0].mxu0
        %v1072 = vadd.f32 0.0, %v1071
        %v1073 = vpop.f32.mrb[0].mxu0
        %v1074 = vpop.f32.mrb[0].mxu0
        %v1075 = vpop.f32.mrb[0].mxu0
        %1076 = vdwg.mxu0
        %v1077 = vsel %vm1030, %v1072, -inf
        %1078 = vmax.xlane.f32.xlu0 %v1077
        %v1079 = vpop.xlane.xlu0 %1078
        %v1080 = vsub.f32 %v1072, %v1079
        %v1081 = vmul.f32 %v1080, 1.442695
        %v1082 = vpow.pop %v1081
        %v1083 = vsel %vm1030, %v1082, 0.0
        %1084 = vadd.xlane.f32.xlu0 %v1083
        %v1085 = vpop.xlane.xlu0 %1084
        %v1086 = vrcp.pop %v1085
        %v1087 = vmul.f32 %v1082, %v1086
        %v1088 = vpack.c.bf16 %v1087, %v1087
        %v1090 = vsel %vm1030, %v1088, 0
        %vm1092 = vcmask 1043456
        %v1094 = vsel %vm1092, %v1029, 0
        %1096 = vmatprep.subr.bf16.mxu0 0
        %1097 = vmatpush1.bf16.msra.mxu0 %v1094
        %1098 = vmatprep.subr.bf16.mxu0 0
        %1099 = vmatpush1.bf16.msra.mxu0 0
        %1100 = vmatprep.subr.bf16.mxu0 0
        %1101 = vmatpush1.bf16.msra.mxu0 0
        %1102 = vmatprep.subr.bf16.mxu0 0
        %1103 = vmatpush1.bf16.msra.mxu0 0
        %1104 = vmatprep.subr.bf16.mxu0 0
        %1105 = vmatpush1.bf16.msra.mxu0 0
        %1106 = vmatprep.subr.bf16.mxu0 0
        %1107 = vmatpush1.bf16.msra.mxu0 0
        %1108 = vmatprep.subr.bf16.mxu0 0
        %1109 = vmatpush1.bf16.msra.mxu0 0
        %1110 = vmatprep.subr.bf16.mxu0 0
        %1111 = vmatpush1.bf16.msra.mxu0 0
        %1112 = vmatprep.subr.bf16.mxu0 0
        %1113 = vmatpush1.bf16.msra.mxu0 0
        %1114 = vmatprep.subr.bf16.mxu0 0
        %1115 = vmatpush1.bf16.msra.mxu0 0
        %1116 = vmatprep.subr.bf16.mxu0 0
        %1117 = vmatpush1.bf16.msra.mxu0 0
        %1118 = vmatprep.subr.bf16.mxu0 0
        %1119 = vmatpush1.bf16.msra.mxu0 0
        %1120 = vmatprep.subr.bf16.mxu0 0
        %1121 = vmatpush1.bf16.msra.mxu0 0
        %1122 = vmatprep.subr.bf16.mxu0 0
        %1123 = vmatpush1.bf16.msra.mxu0 0
        %1124 = vmatprep.subr.bf16.mxu0 0
        %1125 = vmatpush1.bf16.msra.mxu0 0
        %1126 = vmatprep.subr.bf16.mxu0 0
        %1127 = vmatpush1.bf16.msra.mxu0 0
        %1128 = vmatprep.mubr.bf16.mxu0 0
        %1129 = vmatmul.mubr.bf16.gmra.mrb[0].mxu0 %v1090
        %v1130 = vpop.f32.mrb[0].mxu0
        %v1131 = vadd.f32 0.0, %v1130
        %v1132 = vpop.f32.mrb[0].mxu0
        %v1133 = vpop.f32.mrb[0].mxu0
        %v1134 = vpop.f32.mrb[0].mxu0
        %1135 = vdwg.mxu0
        %1136 = vst.msk [vmem:[#allocation2] sm:$0xff] %vm1030, %v1131
        %1138 = vrot.lane.b32.xlu0 %v1027, 120
        %v1139 = vpop.permute.xlu0 %1138
        %1141 = vrot.lane.b32.xlu0 %v1028, 120
        %v1142 = vpop.permute.xlu0 %1141
        %v1144 = vsel %vm1030, %v1139, 0
        %v1147 = vsel %vm1030, %v1142, 0
        %1149 = vmatprep.subr.bf16.mxu0 0
        %1150 = vmatpush1.bf16.xpose.msra.mxu0 %v1147
        %1151 = vmatprep.subr.bf16.mxu0 0
        %1152 = vmatpush1.bf16.xpose.msra.mxu0 0
        %1153 = vmatprep.subr.bf16.mxu0 0
        %1154 = vmatpush1.bf16.xpose.msra.mxu0 0
        %1155 = vmatprep.subr.bf16.mxu0 0
        %1156 = vmatpush1.bf16.xpose.msra.mxu0 0
        %1157 = vmatprep.subr.bf16.mxu0 0
        %1158 = vmatpush1.bf16.xpose.msra.mxu0 0
        %1159 = vmatprep.subr.bf16.mxu0 0
        %1160 = vmatpush1.bf16.xpose.msra.mxu0 0
        %1161 = vmatprep.subr.bf16.mxu0 0
        %1162 = vmatpush1.bf16.xpose.msra.mxu0 0
        %1163 = vmatprep.subr.bf16.mxu0 0
        %1164 = vmatpush1.bf16.xpose.msra.mxu0 0
        %1165 = vmatprep.subr.bf16.mxu0 0
        %1166 = vmatpush1.bf16.xpose.msra.mxu0 0
        %1167 = vmatprep.subr.bf16.mxu0 0
        %1168 = vmatpush1.bf16.xpose.msra.mxu0 0
        %1169 = vmatprep.subr.bf16.mxu0 0
        %1170 = vmatpush1.bf16.xpose.msra.mxu0 0
        %1171 = vmatprep.subr.bf16.mxu0 0
        %1172 = vmatpush1.bf16.xpose.msra.mxu0 0
        %1173 = vmatprep.subr.bf16.mxu0 0
        %1174 = vmatpush1.bf16.xpose.msra.mxu0 0
        %1175 = vmatprep.subr.bf16.mxu0 0
        %1176 = vmatpush1.bf16.xpose.msra.mxu0 0
        %1177 = vmatprep.subr.bf16.mxu0 0
        %1178 = vmatpush1.bf16.xpose.msra.mxu0 0
        %1179 = vmatprep.subr.bf16.mxu0 0
        %1180 = vmatpush1.bf16.xpose.msra.mxu0 0
        %1181 = vmatprep.mubr.bf16.mxu0 0
        %1182 = vmatmul.mubr.bf16.gmra.mrb[0].mxu0 %v1144
        %v1183 = vpop.f32.mrb[0].mxu0
        %v1184 = vadd.f32 0.0, %v1183
        %v1185 = vpop.f32.mrb[0].mxu0
        %v1186 = vpop.f32.mrb[0].mxu0
        %v1187 = vpop.f32.mrb[0].mxu0
        %1188 = vdwg.mxu0
        %v1189 = vsel %vm1030, %v1184, -inf
        %1190 = vmax.xlane.f32.xlu0 %v1189
        %v1191 = vpop.xlane.xlu0 %1190
        %v1192 = vsub.f32 %v1184, %v1191
        %v1193 = vmul.f32 %v1192, 1.442695
        %v1194 = vpow.pop %v1193
        %v1195 = vsel %vm1030, %v1194, 0.0
        %1196 = vadd.xlane.f32.xlu0 %v1195
        %v1197 = vpop.xlane.xlu0 %1196
        %v1198 = vrcp.pop %v1197
        %v1199 = vmul.f32 %v1194, %v1198
        %v1200 = vpack.c.bf16 %v1199, %v1199
        %1202 = vrot.lane.b32.xlu0 %v1029, 120
        %v1203 = vpop.permute.xlu0 %1202
        %v1205 = vsel %vm1030, %v1200, 0
        %v1208 = vsel %vm1092, %v1203, 0
        %1210 = vmatprep.subr.bf16.mxu0 0
        %1211 = vmatpush1.bf16.msra.mxu0 %v1208
        %1212 = vmatprep.subr.bf16.mxu0 0
        %1213 = vmatpush1.bf16.msra.mxu0 0
        %1214 = vmatprep.subr.bf16.mxu0 0
        %1215 = vmatpush1.bf16.msra.mxu0 0
        %1216 = vmatprep.subr.bf16.mxu0 0
        %1217 = vmatpush1.bf16.msra.mxu0 0
        %1218 = vmatprep.subr.bf16.mxu0 0
        %1219 = vmatpush1.bf16.msra.mxu0 0
        %1220 = vmatprep.subr.bf16.mxu0 0
        %1221 = vmatpush1.bf16.msra.mxu0 0
        %1222 = vmatprep.subr.bf16.mxu0 0
        %1223 = vmatpush1.bf16.msra.mxu0 0
        %1224 = vmatprep.subr.bf16.mxu0 0
        %1225 = vmatpush1.bf16.msra.mxu0 0
        %1226 = vmatprep.subr.bf16.mxu0 0
        %1227 = vmatpush1.bf16.msra.mxu0 0
        %1228 = vmatprep.subr.bf16.mxu0 0
        %1229 = vmatpush1.bf16.msra.mxu0 0
        %1230 = vmatprep.subr.bf16.mxu0 0
        %1231 = vmatpush1.bf16.msra.mxu0 0
        %1232 = vmatprep.subr.bf16.mxu0 0
        %1233 = vmatpush1.bf16.msra.mxu0 0
        %1234 = vmatprep.subr.bf16.mxu0 0
        %1235 = vmatpush1.bf16.msra.mxu0 0
        %1236 = vmatprep.subr.bf16.mxu0 0
        %1237 = vmatpush1.bf16.msra.mxu0 0
        %1238 = vmatprep.subr.bf16.mxu0 0
        %1239 = vmatpush1.bf16.msra.mxu0 0
        %1240 = vmatprep.subr.bf16.mxu0 0
        %1241 = vmatpush1.bf16.msra.mxu0 0
        %1242 = vmatprep.mubr.bf16.mxu0 0
        %1243 = vmatmul.mubr.bf16.gmra.mrb[0].mxu0 %v1205
        %v1244 = vpop.f32.mrb[0].mxu0
        %v1245 = vadd.f32 0.0, %v1244
        %v1246 = vpop.f32.mrb[0].mxu0
        %v1247 = vpop.f32.mrb[0].mxu0
        %v1248 = vpop.f32.mrb[0].mxu0
        %1249 = vdwg.mxu0
        %1251 = vrot.lane.b32.xlu0 %v1245, 8
        %v1252 = vpop.permute.xlu0 %1251
        %vm1254 = vcmask 130112
        %1255 = vst.msk [vmem:[#allocation2] sm:$0xff] %vm1254, %v1252
        %1256 = vrot.lane.b32.xlu0 %v1027, 112
        %v1257 = vpop.permute.xlu0 %1256
        %1258 = vrot.lane.b32.xlu0 %v1028, 112
        %v1259 = vpop.permute.xlu0 %1258
        %v1261 = vsel %vm1030, %v1257, 0
        %v1264 = vsel %vm1030, %v1259, 0
        %1266 = vmatprep.subr.bf16.mxu0 0
        %1267 = vmatpush1.bf16.xpose.msra.mxu0 %v1264
        %1268 = vmatprep.subr.bf16.mxu0 0
        %1269 = vmatpush1.bf16.xpose.msra.mxu0 0
        %1270 = vmatprep.subr.bf16.mxu0 0
        %1271 = vmatpush1.bf16.xpose.msra.mxu0 0
        %1272 = vmatprep.subr.bf16.mxu0 0
        %1273 = vmatpush1.bf16.xpose.msra.mxu0 0
        %1274 = vmatprep.subr.bf16.mxu0 0
        %1275 = vmatpush1.bf16.xpose.msra.mxu0 0
        %1276 = vmatprep.subr.bf16.mxu0 0
        %1277 = vmatpush1.bf16.xpose.msra.mxu0 0
        %1278 = vmatprep.subr.bf16.mxu0 0
        %1279 = vmatpush1.bf16.xpose.msra.mxu0 0
        %1280 = vmatprep.subr.bf16.mxu0 0
        %1281 = vmatpush1.bf16.xpose.msra.mxu0 0
        %1282 = vmatprep.subr.bf16.mxu0 0
        %1283 = vmatpush1.bf16.xpose.msra.mxu0 0
        %1284 = vmatprep.subr.bf16.mxu0 0
        %1285 = vmatpush1.bf16.xpose.msra.mxu0 0
        %1286 = vmatprep.subr.bf16.mxu0 0
        %1287 = vmatpush1.bf16.xpose.msra.mxu0 0
        %1288 = vmatprep.subr.bf16.mxu0 0
        %1289 = vmatpush1.bf16.xpose.msra.mxu0 0
        %1290 = vmatprep.subr.bf16.mxu0 0
        %1291 = vmatpush1.bf16.xpose.msra.mxu0 0
        %1292 = vmatprep.subr.bf16.mxu0 0
        %1293 = vmatpush1.bf16.xpose.msra.mxu0 0
        %1294 = vmatprep.subr.bf16.mxu0 0
        %1295 = vmatpush1.bf16.xpose.msra.mxu0 0
        %1296 = vmatprep.subr.bf16.mxu0 0
        %1297 = vmatpush1.bf16.xpose.msra.mxu0 0
        %1298 = vmatprep.mubr.bf16.mxu0 0
        %1299 = vmatmul.mubr.bf16.gmra.mrb[0].mxu0 %v1261
        %v1300 = vpop.f32.mrb[0].mxu0
        %v1301 = vadd.f32 0.0, %v1300
        %v1302 = vpop.f32.mrb[0].mxu0
        %v1303 = vpop.f32.mrb[0].mxu0
        %v1304 = vpop.f32.mrb[0].mxu0
        %1305 = vdwg.mxu0
        %v1306 = vsel %vm1030, %v1301, -inf
        %1307 = vmax.xlane.f32.xlu0 %v1306
        %v1308 = vpop.xlane.xlu0 %1307
        %v1309 = vsub.f32 %v1301, %v1308
        %v1310 = vmul.f32 %v1309, 1.442695
        %v1311 = vpow.pop %v1310
        %v1312 = vsel %vm1030, %v1311, 0.0
        %1313 = vadd.xlane.f32.xlu0 %v1312
        %v1314 = vpop.xlane.xlu0 %1313
        %v1315 = vrcp.pop %v1314
        %v1316 = vmul.f32 %v1311, %v1315
        %v1317 = vpack.c.bf16 %v1316, %v1316
        %1318 = vrot.lane.b32.xlu0 %v1029, 112
        %v1319 = vpop.permute.xlu0 %1318
        %v1321 = vsel %vm1030, %v1317, 0
        %v1324 = vsel %vm1092, %v1319, 0
        %1326 = vmatprep.subr.bf16.mxu0 0
        %1327 = vmatpush1.bf16.msra.mxu0 %v1324
        %1328 = vmatprep.subr.bf16.mxu0 0
        %1329 = vmatpush1.bf16.msra.mxu0 0
        %1330 = vmatprep.subr.bf16.mxu0 0
        %1331 = vmatpush1.bf16.msra.mxu0 0
        %1332 = vmatprep.subr.bf16.mxu0 0
        %1333 = vmatpush1.bf16.msra.mxu0 0
        %1334 = vmatprep.subr.bf16.mxu0 0
        %1335 = vmatpush1.bf16.msra.mxu0 0
        %1336 = vmatprep.subr.bf16.mxu0 0
        %1337 = vmatpush1.bf16.msra.mxu0 0
        %1338 = vmatprep.subr.bf16.mxu0 0
        %1339 = vmatpush1.bf16.msra.mxu0 0
        %1340 = vmatprep.subr.bf16.mxu0 0
        %1341 = vmatpush1.bf16.msra.mxu0 0
        %1342 = vmatprep.subr.bf16.mxu0 0
        %1343 = vmatpush1.bf16.msra.mxu0 0
        %1344 = vmatprep.subr.bf16.mxu0 0
        %1345 = vmatpush1.bf16.msra.mxu0 0
        %1346 = vmatprep.subr.bf16.mxu0 0
        %1347 = vmatpush1.bf16.msra.mxu0 0
        %1348 = vmatprep.subr.bf16.mxu0 0
        %1349 = vmatpush1.bf16.msra.mxu0 0
        %1350 = vmatprep.subr.bf16.mxu0 0
        %1351 = vmatpush1.bf16.msra.mxu0 0
        %1352 = vmatprep.subr.bf16.mxu0 0
        %1353 = vmatpush1.bf16.msra.mxu0 0
        %1354 = vmatprep.subr.bf16.mxu0 0
        %1355 = vmatpush1.bf16.msra.mxu0 0
        %1356 = vmatprep.subr.bf16.mxu0 0
        %1357 = vmatpush1.bf16.msra.mxu0 0
        %1358 = vmatprep.mubr.bf16.mxu0 0
        %1359 = vmatmul.mubr.bf16.gmra.mrb[0].mxu0 %v1321
        %v1360 = vpop.f32.mrb[0].mxu0
        %v1361 = vadd.f32 0.0, %v1360
        %v1362 = vpop.f32.mrb[0].mxu0
        %v1363 = vpop.f32.mrb[0].mxu0
        %v1364 = vpop.f32.mrb[0].mxu0
        %1365 = vdwg.mxu0
        %1367 = vrot.lane.b32.xlu0 %v1361, 16
        %v1368 = vpop.permute.xlu0 %1367
        %vm1370 = vcmask 195712
        %1371 = vst.msk [vmem:[#allocation2] sm:$0xff] %vm1370, %v1368
        %1372 = vrot.lane.b32.xlu0 %v1027, 104
        %v1373 = vpop.permute.xlu0 %1372
        %1374 = vrot.lane.b32.xlu0 %v1028, 104
        %v1375 = vpop.permute.xlu0 %1374
        %v1377 = vsel %vm1030, %v1373, 0
        %v1380 = vsel %vm1030, %v1375, 0
        %1382 = vmatprep.subr.bf16.mxu0 0
        %1383 = vmatpush1.bf16.xpose.msra.mxu0 %v1380
        %1384 = vmatprep.subr.bf16.mxu0 0
        %1385 = vmatpush1.bf16.xpose.msra.mxu0 0
        %1386 = vmatprep.subr.bf16.mxu0 0
        %1387 = vmatpush1.bf16.xpose.msra.mxu0 0
        %1388 = vmatprep.subr.bf16.mxu0 0
        %1389 = vmatpush1.bf16.xpose.msra.mxu0 0
        %1390 = vmatprep.subr.bf16.mxu0 0
        %1391 = vmatpush1.bf16.xpose.msra.mxu0 0
        %1392 = vmatprep.subr.bf16.mxu0 0
        %1393 = vmatpush1.bf16.xpose.msra.mxu0 0
        %1394 = vmatprep.subr.bf16.mxu0 0
        %1395 = vmatpush1.bf16.xpose.msra.mxu0 0
        %1396 = vmatprep.subr.bf16.mxu0 0
        %1397 = vmatpush1.bf16.xpose.msra.mxu0 0
        %1398 = vmatprep.subr.bf16.mxu0 0
        %1399 = vmatpush1.bf16.xpose.msra.mxu0 0
        %1400 = vmatprep.subr.bf16.mxu0 0
        %1401 = vmatpush1.bf16.xpose.msra.mxu0 0
        %1402 = vmatprep.subr.bf16.mxu0 0
        %1403 = vmatpush1.bf16.xpose.msra.mxu0 0
        %1404 = vmatprep.subr.bf16.mxu0 0
        %1405 = vmatpush1.bf16.xpose.msra.mxu0 0
        %1406 = vmatprep.subr.bf16.mxu0 0
        %1407 = vmatpush1.bf16.xpose.msra.mxu0 0
        %1408 = vmatprep.subr.bf16.mxu0 0
        %1409 = vmatpush1.bf16.xpose.msra.mxu0 0
        %1410 = vmatprep.subr.bf16.mxu0 0
        %1411 = vmatpush1.bf16.xpose.msra.mxu0 0
        %1412 = vmatprep.subr.bf16.mxu0 0
        %1413 = vmatpush1.bf16.xpose.msra.mxu0 0
        %1414 = vmatprep.mubr.bf16.mxu0 0
        %1415 = vmatmul.mubr.bf16.gmra.mrb[0].mxu0 %v1377
        %v1416 = vpop.f32.mrb[0].mxu0
        %v1417 = vadd.f32 0.0, %v1416
        %v1418 = vpop.f32.mrb[0].mxu0
        %v1419 = vpop.f32.mrb[0].mxu0
        %v1420 = vpop.f32.mrb[0].mxu0
        %1421 = vdwg.mxu0
        %v1422 = vsel %vm1030, %v1417, -inf
        %1423 = vmax.xlane.f32.xlu0 %v1422
        %v1424 = vpop.xlane.xlu0 %1423
        %v1425 = vsub.f32 %v1417, %v1424
        %v1426 = vmul.f32 %v1425, 1.442695
        %v1427 = vpow.pop %v1426
        %v1428 = vsel %vm1030, %v1427, 0.0
        %1429 = vadd.xlane.f32.xlu0 %v1428
        %v1430 = vpop.xlane.xlu0 %1429
        %v1431 = vrcp.pop %v1430
        %v1432 = vmul.f32 %v1427, %v1431
        %v1433 = vpack.c.bf16 %v1432, %v1432
        %1434 = vrot.lane.b32.xlu0 %v1029, 104
        %v1435 = vpop.permute.xlu0 %1434
        %v1437 = vsel %vm1030, %v1433, 0
        %v1440 = vsel %vm1092, %v1435, 0
        %1442 = vmatprep.subr.bf16.mxu0 0
        %1443 = vmatpush1.bf16.msra.mxu0 %v1440
        %1444 = vmatprep.subr.bf16.mxu0 0
        %1445 = vmatpush1.bf16.msra.mxu0 0
        %1446 = vmatprep.subr.bf16.mxu0 0
        %1447 = vmatpush1.bf16.msra.mxu0 0
        %1448 = vmatprep.subr.bf16.mxu0 0
        %1449 = vmatpush1.bf16.msra.mxu0 0
        %1450 = vmatprep.subr.bf16.mxu0 0
        %1451 = vmatpush1.bf16.msra.mxu0 0
        %1452 = vmatprep.subr.bf16.mxu0 0
        %1453 = vmatpush1.bf16.msra.mxu0 0
        %1454 = vmatprep.subr.bf16.mxu0 0
        %1455 = vmatpush1.bf16.msra.mxu0 0
        %1456 = vmatprep.subr.bf16.mxu0 0
        %1457 = vmatpush1.bf16.msra.mxu0 0
        %1458 = vmatprep.subr.bf16.mxu0 0
        %1459 = vmatpush1.bf16.msra.mxu0 0
        %1460 = vmatprep.subr.bf16.mxu0 0
        %1461 = vmatpush1.bf16.msra.mxu0 0
        %1462 = vmatprep.subr.bf16.mxu0 0
        %1463 = vmatpush1.bf16.msra.mxu0 0
        %1464 = vmatprep.subr.bf16.mxu0 0
        %1465 = vmatpush1.bf16.msra.mxu0 0
        %1466 = vmatprep.subr.bf16.mxu0 0
        %1467 = vmatpush1.bf16.msra.mxu0 0
        %1468 = vmatprep.subr.bf16.mxu0 0
        %1469 = vmatpush1.bf16.msra.mxu0 0
        %1470 = vmatprep.subr.bf16.mxu0 0
        %1471 = vmatpush1.bf16.msra.mxu0 0
        %1472 = vmatprep.subr.bf16.mxu0 0
        %1473 = vmatpush1.bf16.msra.mxu0 0
        %1474 = vmatprep.mubr.bf16.mxu0 0
        %1475 = vmatmul.mubr.bf16.gmra.mrb[0].mxu0 %v1437
        %v1476 = vpop.f32.mrb[0].mxu0
        %v1477 = vadd.f32 0.0, %v1476
        %v1478 = vpop.f32.mrb[0].mxu0
        %v1479 = vpop.f32.mrb[0].mxu0
        %v1480 = vpop.f32.mrb[0].mxu0
        %1481 = vdwg.mxu0
        %1483 = vrot.lane.b32.xlu0 %v1477, 24
        %v1484 = vpop.permute.xlu0 %1483
        %vm1486 = vcmask 261312
        %1487 = vst.msk [vmem:[#allocation2] sm:$0xff] %vm1486, %v1484
        %v1488 = vld [vmem:[#allocation2] sm:$0xff]
        %v1489 = vpack.c.bf16 %v1488, %v1488
        %v1490 = vld [vmem:[%s12] sm:$0xf]
        %v1491 = vld [vmem:[%s12 + $0x4] sm:$0xf]
        %v1492 = vld [vmem:[%s12 + $0x8] sm:$0xf]
        %v1493 = vld [vmem:[%s12 + $0xc] sm:$0xf]
        %v1494 = vld [vmem:[%s13] sm:$0x1]
        %v1496 = vlaneseq
        %v1497 = vshrl.u32 %v1496, 7
        %v1498 = vsub.s32 0, %v1497
        %v1499 = vrot.slane %v1494, %v1498
        %v1505 = vunpack.c.l.b16 %v1490
        %v1506 = vunpack.c.l.b16 %v1491
        %v1507 = vunpack.c.l.b16 %v1492
        %v1508 = vunpack.c.l.b16 %v1493
        %v1509 = vpack.c.b16 %v1506, %v1505
        %v1510 = vpack.c.b16 %v1508, %v1507
        %v1514 = vsel %vm789, %v1489, 0
        %1516 = vmatprep.subr.bf16.mxu0 0
        %1517 = vmatpush1.bf16.msra.mxu0 %v1509
        %1518 = vmatprep.subr.bf16.mxu0 0
        %1519 = vmatpush1.bf16.msra.mxu0 %v1510
        %1520 = vmatprep.subr.bf16.mxu0 0
        %1521 = vmatpush1.bf16.msra.mxu0 0
        %1522 = vmatprep.subr.bf16.mxu0 0
        %1523 = vmatpush1.bf16.msra.mxu0 0
        %1524 = vmatprep.subr.bf16.mxu0 0
        %1525 = vmatpush1.bf16.msra.mxu0 0
        %1526 = vmatprep.subr.bf16.mxu0 0
        %1527 = vmatpush1.bf16.msra.mxu0 0
        %1528 = vmatprep.subr.bf16.mxu0 0
        %1529 = vmatpush1.bf16.msra.mxu0 0
        %1530 = vmatprep.subr.bf16.mxu0 0
        %1531 = vmatpush1.bf16.msra.mxu0 0
        %1532 = vmatprep.subr.bf16.mxu0 0
        %1533 = vmatpush1.bf16.msra.mxu0 0
        %1534 = vmatprep.subr.bf16.mxu0 0
        %1535 = vmatpush1.bf16.msra.mxu0 0
        %1536 = vmatprep.subr.bf16.mxu0 0
        %1537 = vmatpush1.bf16.msra.mxu0 0
        %1538 = vmatprep.subr.bf16.mxu0 0
        %1539 = vmatpush1.bf16.msra.mxu0 0
        %1540 = vmatprep.subr.bf16.mxu0 0
        %1541 = vmatpush1.bf16.msra.mxu0 0
        %1542 = vmatprep.subr.bf16.mxu0 0
        %1543 = vmatpush1.bf16.msra.mxu0 0
        %1544 = vmatprep.subr.bf16.mxu0 0
        %1545 = vmatpush1.bf16.msra.mxu0 0
        %1546 = vmatprep.subr.bf16.mxu0 0
        %1547 = vmatpush1.bf16.msra.mxu0 0
        %1548 = vmatprep.mubr.bf16.mxu0 0
        %1549 = vmatmul.mubr.bf16.gmra.mrb[0].mxu0 %v1514
        %v1550 = vpop.f32.mrb[0].mxu0
        %v1551 = vadd.f32 %v1499, %v1550
        %v1552 = vpop.f32.mrb[0].mxu0
        %v1553 = vpop.f32.mrb[0].mxu0
        %v1554 = vpop.f32.mrb[0].mxu0
        %1555 = vdwg.mxu0
        %v1556 = vadd.f32 %v786, %v1551
        %v1557 = vsel %vm789, %v1556, 0.0
        %1558 = vadd.xlane.f32.xlu0 %v1557
        %v1559 = vpop.xlane.xlu0 %1558
        %v1560 = vmul.f32 %v1559, %v793
        %v1561 = vsub.f32 %v1556, %v1560
        %v1562 = vmul.f32 %v1561, %v1561
        %v1563 = vsel %vm789, %v1562, 0.0
        %1564 = vadd.xlane.f32.xlu0 %v1563
        %v1565 = vpop.xlane.xlu0 %1564
        %v1566 = vmul.f32 %v1565, %v793
        %v1567 = vadd.f32 %v1566, 1e-05
        %v1568 = vrsqrt.pop %v1567
        %v1569 = vmul.f32 %v1561, %v1568
        %v1570 = vmul.f32 %v1569, %v808
        %v1571 = vadd.f32 %v1570, %v815
        %v1572 = vpack.c.bf16 %v1571, %v1571
        %v1573 = vld [vmem:[%s14] sm:$0xf]
        %v1574 = vld [vmem:[%s14 + $0x4] sm:$0xf]
        %v1575 = vld [vmem:[%s14 + $0x8] sm:$0xf]
        %v1576 = vld [vmem:[%s14 + $0xc] sm:$0xf]
        %v1577 = vld [vmem:[%s15] sm:$0x1]
        %v1579 = vlaneseq
        %v1580 = vshrl.u32 %v1579, 7
        %v1581 = vsub.s32 0, %v1580
        %v1582 = vrot.slane %v1577, %v1581
        %v1588 = vunpack.c.l.b16 %v1573
        %v1589 = vunpack.c.l.b16 %v1574
        %v1590 = vunpack.c.l.b16 %v1575
        %v1591 = vunpack.c.l.b16 %v1576
        %v1592 = vpack.c.b16 %v1589, %v1588
        %v1593 = vpack.c.b16 %v1591, %v1590
        %v1597 = vsel %vm789, %v1572, 0
        %1599 = vmatprep.subr.bf16.mxu0 0
        %1600 = vmatpush1.bf16.msra.mxu0 %v1592
        %1601 = vmatprep.subr.bf16.mxu0 0
        %1602 = vmatpush1.bf16.msra.mxu0 %v1593
        %1603 = vmatprep.subr.bf16.mxu0 0
        %1604 = vmatpush1.bf16.msra.mxu0 0
        %1605 = vmatprep.subr.bf16.mxu0 0
        %1606 = vmatpush1.bf16.msra.mxu0 0
        %1607 = vmatprep.subr.bf16.mxu0 0
        %1608 = vmatpush1.bf16.msra.mxu0 0
        %1609 = vmatprep.subr.bf16.mxu0 0
        %1610 = vmatpush1.bf16.msra.mxu0 0
        %1611 = vmatprep.subr.bf16.mxu0 0
        %1612 = vmatpush1.bf16.msra.mxu0 0
        %1613 = vmatprep.subr.bf16.mxu0 0
        %1614 = vmatpush1.bf16.msra.mxu0 0
        %1615 = vmatprep.subr.bf16.mxu0 0
        %1616 = vmatpush1.bf16.msra.mxu0 0
        %1617 = vmatprep.subr.bf16.mxu0 0
        %1618 = vmatpush1.bf16.msra.mxu0 0
        %1619 = vmatprep.subr.bf16.mxu0 0
        %1620 = vmatpush1.bf16.msra.mxu0 0
        %1621 = vmatprep.subr.bf16.mxu0 0
        %1622 = vmatpush1.bf16.msra.mxu0 0
        %1623 = vmatprep.subr.bf16.mxu0 0
        %1624 = vmatpush1.bf16.msra.mxu0 0
        %1625 = vmatprep.subr.bf16.mxu0 0
        %1626 = vmatpush1.bf16.msra.mxu0 0
        %1627 = vmatprep.subr.bf16.mxu0 0
        %1628 = vmatpush1.bf16.msra.mxu0 0
        %1629 = vmatprep.subr.bf16.mxu0 0
        %1630 = vmatpush1.bf16.msra.mxu0 0
        %1631 = vmatprep.mubr.bf16.mxu0 0
        %1632 = vmatmul.mubr.bf16.gmra.mrb[0].mxu0 %v1597
        %v1633 = vpop.f32.mrb[0].mxu0
        %v1634 = vadd.f32 %v1582, %v1633
        %v1635 = vpop.f32.mrb[0].mxu0
        %v1636 = vpop.f32.mrb[0].mxu0
        %v1637 = vpop.f32.mrb[0].mxu0
        %1638 = vdwg.mxu0
        %v1639 = vmul.f32 %v1634, 0.5
        %v1640 = vmul.f32 %v1634, 0.70710677
        %v1641 = verf.f32.pop %v1640
        %v1642 = vadd.f32 %v1641, 1.0
        %v1643 = vmul.f32 %v1639, %v1642
        %v1644 = vpack.c.bf16 %v1643, %v1643
        %v1645 = vld [vmem:[%s16] sm:$0xf]
        %v1646 = vld [vmem:[%s16 + $0x4] sm:$0xf]
        %v1647 = vld [vmem:[%s16 + $0x8] sm:$0xf]
        %v1648 = vld [vmem:[%s16 + $0xc] sm:$0xf]
        %v1649 = vld [vmem:[%s16 + $0x10] sm:$0xf]
        %v1650 = vld [vmem:[%s16 + $0x14] sm:$0xf]
        %v1651 = vld [vmem:[%s16 + $0x18] sm:$0xf]
        %v1652 = vld [vmem:[%s16 + $0x1c] sm:$0xf]
        %v1653 = vld [vmem:[%s17] sm:$0x1]
        %v1655 = vlaneseq
        %v1656 = vshrl.u32 %v1655, 7
        %v1657 = vsub.s32 0, %v1656
        %v1658 = vrot.slane %v1653, %v1657
        %v1668 = vunpack.c.l.b16 %v1645
        %v1669 = vunpack.c.l.b16 %v1646
        %v1670 = vunpack.c.l.b16 %v1647
        %v1671 = vunpack.c.l.b16 %v1648
        %v1672 = vunpack.c.l.b16 %v1649
        %v1673 = vunpack.c.l.b16 %v1650
        %v1674 = vunpack.c.l.b16 %v1651
        %v1675 = vunpack.c.l.b16 %v1652
        %v1676 = vpack.c.b16 %v1669, %v1668
        %v1677 = vpack.c.b16 %v1671, %v1670
        %v1678 = vpack.c.b16 %v1673, %v1672
        %v1679 = vpack.c.b16 %v1675, %v1674
        %vm1684 = vcmask 523264
        %v1686 = vsel %vm1684, %v1644, 0
        %1688 = vmatprep.subr.bf16.mxu0 0
        %1689 = vmatpush1.bf16.msra.mxu0 %v1676
        %1690 = vmatprep.subr.bf16.mxu0 0
        %1691 = vmatpush1.bf16.msra.mxu0 %v1677
        %1692 = vmatprep.subr.bf16.mxu0 0
        %1693 = vmatpush1.bf16.msra.mxu0 %v1678
        %1694 = vmatprep.subr.bf16.mxu0 0
        %1695 = vmatpush1.bf16.msra.mxu0 %v1679
        %1696 = vmatprep.subr.bf16.mxu0 0
        %1697 = vmatpush1.bf16.msra.mxu0 0
        %1698 = vmatprep.subr.bf16.mxu0 0
        %1699 = vmatpush1.bf16.msra.mxu0 0
        %1700 = vmatprep.subr.bf16.mxu0 0
        %1701 = vmatpush1.bf16.msra.mxu0 0
        %1702 = vmatprep.subr.bf16.mxu0 0
        %1703 = vmatpush1.bf16.msra.mxu0 0
        %1704 = vmatprep.subr.bf16.mxu0 0
        %1705 = vmatpush1.bf16.msra.mxu0 0
        %1706 = vmatprep.subr.bf16.mxu0 0
        %1707 = vmatpush1.bf16.msra.mxu0 0
        %1708 = vmatprep.subr.bf16.mxu0 0
        %1709 = vmatpush1.bf16.msra.mxu0 0
        %1710 = vmatprep.subr.bf16.mxu0 0
        %1711 = vmatpush1.bf16.msra.mxu0 0
        %1712 = vmatprep.subr.bf16.mxu0 0
        %1713 = vmatpush1.bf16.msra.mxu0 0
        %1714 = vmatprep.subr.bf16.mxu0 0
        %1715 = vmatpush1.bf16.msra.mxu0 0
        %1716 = vmatprep.subr.bf16.mxu0 0
        %1717 = vmatpush1.bf16.msra.mxu0 0
        %1718 = vmatprep.subr.bf16.mxu0 0
        %1719 = vmatpush1.bf16.msra.mxu0 0
        %1720 = vmatprep.mubr.bf16.mxu0 0
        %1721 = vmatmul.mubr.bf16.gmra.mrb[0].mxu0 %v1686
        %v1722 = vpop.f32.mrb[0].mxu0
        %v1723 = vadd.f32 %v1658, %v1722
        %v1724 = vpop.f32.mrb[0].mxu0
        %v1725 = vpop.f32.mrb[0].mxu0
        %v1726 = vpop.f32.mrb[0].mxu0
        %1727 = vdwg.mxu0
        %v1728 = vadd.f32 %v1723, %v1556
        %v1729 = vld [vmem:[%s18] sm:$0x1]
        %v1730 = vld [vmem:[%s19] sm:$0x1]
        %v1731 = vsel %vm789, %v1728, 0.0
        %1732 = vadd.xlane.f32.xlu0 %v1731
        %v1733 = vpop.xlane.xlu0 %1732
        %v1734 = vmul.f32 %v1733, %v793
        %v1735 = vsub.f32 %v1728, %v1734
        %v1736 = vmul.f32 %v1735, %v1735
        %v1737 = vsel %vm789, %v1736, 0.0
        %1738 = vadd.xlane.f32.xlu0 %v1737
        %v1739 = vpop.xlane.xlu0 %1738
        %v1740 = vmul.f32 %v1739, %v793
        %v1741 = vadd.f32 %v1740, 1e-05
        %v1742 = vrsqrt.pop %v1741
        %v1743 = vmul.f32 %v1735, %v1742
        %v1745 = vlaneseq
        %v1746 = vshrl.u32 %v1745, 7
        %v1747 = vsub.s32 0, %v1746
        %v1748 = vrot.slane %v1729, %v1747
        %v1750 = vmul.f32 %v1743, %v1748
        %v1752 = vlaneseq
        %v1753 = vshrl.u32 %v1752, 7
        %v1754 = vsub.s32 0, %v1753
        %v1755 = vrot.slane %v1730, %v1754
        %v1757 = vadd.f32 %v1750, %v1755
        %1758 = vst.msk [vmem:[%s747] sm:$0xff] %vm789, %v1757
        %s1759 = sand.u32 %s492, 1
        %s1760 = scalar_lea.sflag [#allocation4], %s1759
        %s1761 = sand.u32 %s492, 1
        %s1762 = smul.addr %s1761, 8
        %s1763 = scalar_lea.vmem [#allocation3], %s1762
        %s1764 = sand.u32 %s44, 1
        %s1765 = scalar_lea.sflag [#allocation6], %s1764
        %s1766 = sand.u32 %s518, 1
        %s1767 = smul.addr %s1766, 8
        %s1768 = scalar_lea.vmem [#allocation5], %s1767
        %s1769 = sand.u32 %s44, 1
        %s1770 = scalar_lea.sflag [#allocation6], %s1769
        %s1771 = sand.u32 %s544, 1
        %s1772 = smul.addr %s1771, 8
        %s1773 = scalar_lea.vmem [#allocation7], %s1772
        %s1774 = sand.u32 %s570, 1
        %s1775 = scalar_lea.sflag [#allocation9], %s1774
        %s1776 = sand.u32 %s570, 1
        %s1777 = smul.addr %s1776, 8
        %s1778 = scalar_lea.vmem [#allocation8], %s1777
        // Predicated region
        $region101: #{mfi_model_forward.3} parent=99 // pred_check
          %p1779 = pneg %p502
        $region102: #{mfi_model_forward.3} parent=99 // pred_check_branch
          %1781 = sbr.rel (%p1779) target = $region104
        $region103: #{mfi_model_forward.3} parent=99 // pred_region
          %s1783 = ssub.s32 128, 128
          %1784 = vsyncadd %s1760, %s1783
          %s1785 = smul.addr %s44, 128
          %s1786 = scalar_lea.hbm %s20, %s1785
          %s1788 = sshll.u32 %s1763, 4
          %s1789 = int_to_ptr.vmem [resolvable:$true] %s1788
          %1791 = dma.vmem_to_hbm [thread:$0]  %s1789, 128, %s1786, %s1760
        $region104: #{mfi_model_forward.3} parent=99 // pred_fallthru
          _
        // Predicated region
        $region105: #{mfi_model_forward.3} parent=99 // pred_check
          %p1792 = pneg %p528
        $region106: #{mfi_model_forward.3} parent=99 // pred_check_branch
          %1794 = sbr.rel (%p1792) target = $region108
        $region107: #{mfi_model_forward.3} parent=99 // pred_region
          %s1796 = ssub.s32 128, 128
          %1797 = vsyncadd %s1765, %s1796
          %s1798 = smul.addr %s44, 128
          %s1799 = scalar_lea.hbm %s21, %s1798
          %s1801 = sshll.u32 %s1768, 4
          %s1802 = int_to_ptr.vmem [resolvable:$true] %s1801
          %1804 = dma.vmem_to_hbm [thread:$0]  %s1802, 128, %s1799, %s1765
        $region108: #{mfi_model_forward.3} parent=99 // pred_fallthru
          _
        // Predicated region
        $region109: #{mfi_model_forward.3} parent=99 // pred_check
          %p1805 = pneg %p554
        $region110: #{mfi_model_forward.3} parent=99 // pred_check_branch
          %1807 = sbr.rel (%p1805) target = $region112
        $region111: #{mfi_model_forward.3} parent=99 // pred_region
          %s1809 = ssub.s32 128, 128
          %1810 = vsyncadd %s1770, %s1809
          %s1811 = smul.addr %s44, 128
          %s1812 = scalar_lea.hbm %s22, %s1811
          %s1814 = sshll.u32 %s1773, 4
          %s1815 = int_to_ptr.vmem [resolvable:$true] %s1814
          %1817 = dma.vmem_to_hbm [thread:$0]  %s1815, 128, %s1812, %s1770
        $region112: #{mfi_model_forward.3} parent=99 // pred_fallthru
          _
        // Predicated region
        $region113: #{mfi_model_forward.3} parent=99 // pred_check
          %p1818 = pneg %p580
        $region114: #{mfi_model_forward.3} parent=99 // pred_check_branch
          %1820 = sbr.rel (%p1818) target = $region116
        $region115: #{mfi_model_forward.3} parent=99 // pred_region
          %s1822 = ssub.s32 128, 128
          %1823 = vsyncadd %s1775, %s1822
          %s1824 = smul.addr %s44, 128
          %s1825 = scalar_lea.hbm %s23, %s1824
          %s1827 = sshll.u32 %s1778, 4
          %s1828 = int_to_ptr.vmem [resolvable:$true] %s1827
          %1830 = dma.vmem_to_hbm [thread:$0]  %s1828, 128, %s1825, %s1775
        $region116: #{mfi_model_forward.3} parent=99 // pred_fallthru
          _
      $region100: #{mfi_model_forward.3} parent=5 // pred_fallthru
        _
      %p1831 = scmp.le.s32.totalorder 2, %s39
      // Predicated region
      $region117: #{mfi_model_forward.3} parent=5 // pred_check
        %p1832 = pneg %p1831
      $region118: #{mfi_model_forward.3} parent=5 // pred_check_branch
        %1834 = sbr.rel (%p1832) target = $region120
      $region119: #{mfi_model_forward.3} parent=5 // pred_region
        %s1835 = ssub.s32 %s39, 2
        // Predicated region
        $region121: #{mfi_model_forward.3} parent=119 // pred_check
          %p1836 = pneg %p508
        $region122: #{mfi_model_forward.3} parent=119 // pred_check_branch
          %1838 = sbr.rel (%p1836) target = $region124
        $region123: #{mfi_model_forward.3} parent=119 // pred_region
          %s1839 = sand.u32 %s493, 1
          %s1840 = scalar_lea.sflag [#allocation4], %s1839
          %s1841 = sand.u32 %s493, 1
          %s1842 = smul.addr %s1841, 8
          %s1843 = scalar_lea.vmem [#allocation3], %s1842
          %1844 = dma.done %s1840, 128
        $region124: #{mfi_model_forward.3} parent=119 // pred_fallthru
          _
        // Predicated region
        $region125: #{mfi_model_forward.3} parent=119 // pred_check
          %p1845 = pneg %p534
        $region126: #{mfi_model_forward.3} parent=119 // pred_check_branch
          %1847 = sbr.rel (%p1845) target = $region128
        $region127: #{mfi_model_forward.3} parent=119 // pred_region
          %s1848 = sand.u32 %s45, 1
          %s1849 = scalar_lea.sflag [#allocation6], %s1848
          %s1850 = sand.u32 %s519, 1
          %s1851 = smul.addr %s1850, 8
          %s1852 = scalar_lea.vmem [#allocation5], %s1851
          %1853 = dma.done %s1849, 128
        $region128: #{mfi_model_forward.3} parent=119 // pred_fallthru
          _
        // Predicated region
        $region129: #{mfi_model_forward.3} parent=119 // pred_check
          %p1854 = pneg %p560
        $region130: #{mfi_model_forward.3} parent=119 // pred_check_branch
          %1856 = sbr.rel (%p1854) target = $region132
        $region131: #{mfi_model_forward.3} parent=119 // pred_region
          %s1857 = sand.u32 %s45, 1
          %s1858 = scalar_lea.sflag [#allocation6], %s1857
          %s1859 = sand.u32 %s545, 1
          %s1860 = smul.addr %s1859, 8
          %s1861 = scalar_lea.vmem [#allocation7], %s1860
          %1862 = dma.done %s1858, 128
        $region132: #{mfi_model_forward.3} parent=119 // pred_fallthru
          _
        // Predicated region
        $region133: #{mfi_model_forward.3} parent=119 // pred_check
          %p1863 = pneg %p586
        $region134: #{mfi_model_forward.3} parent=119 // pred_check_branch
          %1865 = sbr.rel (%p1863) target = $region136
        $region135: #{mfi_model_forward.3} parent=119 // pred_region
          %s1866 = sand.u32 %s571, 1
          %s1867 = scalar_lea.sflag [#allocation9], %s1866
          %s1868 = sand.u32 %s571, 1
          %s1869 = smul.addr %s1868, 8
          %s1870 = scalar_lea.vmem [#allocation8], %s1869
          %1871 = dma.done %s1867, 128
        $region136: #{mfi_model_forward.3} parent=119 // pred_fallthru
          _
      $region120: #{mfi_model_forward.3} parent=5 // pred_fallthru
        _
    $region6: #{mfi_model_forward.3} parent=1 // loop_footer
      %s43 = sadd.s32 1, %s39
    $region7: #{mfi_model_forward.3} parent=1 // loop_footer_branch
      %38 = sbr.rel target = $region3
    $region8: #{mfi_model_forward.3} parent=1 // loop_exit
      _
    %1872 = vsyncpa [#allocation4], 1
    %s1873 = scalar_lea.sflag [#allocation4], 1
    %1874 = vsyncpa %s1873, 1
    %1875 = vsyncpa [#allocation6], 1
    %s1876 = scalar_lea.sflag [#allocation6], 1
    %1877 = vsyncpa %s1876, 1
    %1878 = vsyncpa [#allocation9], 1
    %s1879 = scalar_lea.sflag [#allocation9], 1
    %1880 = vsyncpa %s1879, 1

// kernel: mfi_model_forward.2
$region0: #{mfi_model_forward.2}
  #allocation0 [shape = 'u32[]', space=smem, size = 0x4, offset = 0x4, fixed_abs, tag = 'smem constant byte address 0x4 - core index']
  #allocation1 [shape = 'u32[144,128]{1,0:T(1,128)}', space=vmem, size = 0x12000, scoped, tag = 'internal scratch']
  #allocation2 [shape = 'f32[1,8,32]{2,1,0:T(8,128)}', space=vmem, size = 0x1000, scoped, tag = 'scratch operand']
  %s0 = inlined_call_operand.vmem [shape: f32[2,8,32], index: 0, kind: input, shape index: {}]
  %s1 = inlined_call_operand.vmem [shape: f32[2,8,32], index: 1, kind: input, shape index: {}]
  %s2 = inlined_call_operand.vmem [shape: f32[2,8,32], index: 2, kind: input, shape index: {}]
  %s3 = inlined_call_operand.vmem [shape: f32[2,8,32], index: 3, kind: input, shape index: {}]
  %s4 = inlined_call_operand.hbm [shape: f32[1,32], index: 4, kind: input, shape index: {}]
  %s5 = inlined_call_operand.hbm [shape: f32[1,32], index: 5, kind: input, shape index: {}]
  %s6 = inlined_call_operand.vmem [shape: bf16[32,32], index: 6, kind: input, shape index: {}]
  %s7 = inlined_call_operand.hbm [shape: f32[1,32], index: 7, kind: input, shape index: {}]
  %s8 = inlined_call_operand.vmem [shape: bf16[32,32], index: 8, kind: input, shape index: {}]
  %s9 = inlined_call_operand.hbm [shape: f32[1,32], index: 9, kind: input, shape index: {}]
  %s10 = inlined_call_operand.vmem [shape: bf16[32,32], index: 10, kind: input, shape index: {}]
  %s11 = inlined_call_operand.hbm [shape: f32[1,32], index: 11, kind: input, shape index: {}]
  %s12 = inlined_call_operand.hbm [shape: bf16[32,32], index: 12, kind: input, shape index: {}]
  %s13 = inlined_call_operand.hbm [shape: f32[1,32], index: 13, kind: input, shape index: {}]
  %s14 = inlined_call_operand.hbm [shape: bf16[32,64], index: 14, kind: input, shape index: {}]
  %s15 = inlined_call_operand.hbm [shape: f32[1,64], index: 15, kind: input, shape index: {}]
  %s16 = inlined_call_operand.vmem [shape: bf16[64,32], index: 16, kind: input, shape index: {}]
  %s17 = inlined_call_operand.hbm [shape: f32[1,32], index: 17, kind: input, shape index: {}]
  %s18 = inlined_call_operand.vmem [shape: f32[1,32], index: 18, kind: input, shape index: {}]
  %s19 = inlined_call_operand.vmem [shape: f32[1,32], index: 19, kind: input, shape index: {}]
  %s20 = inlined_call_operand.vmem [shape: f32[2,8,32], index: 20, kind: output, shape index: {0}]
  %s21 = inlined_call_operand.vmem [shape: f32[2,8,32], index: 21, kind: output, shape index: {1}]
  %s22 = inlined_call_operand.vmem [shape: f32[2,8,32], index: 22, kind: output, shape index: {2}]
  %s23 = inlined_call_operand.vmem [shape: f32[2,8,32], index: 23, kind: output, shape index: {3}]
  %24 = xla_tuple %s20, %s21, %s22, %s23
  %s25 = sld [smem:[#allocation0]]
  $region177: #{mfi_model_forward.2} parent=0
    _
  %s27 = ssub.s32 1, %s25
  %s28 = scalar_select 0, %s27, %s25
  $region1: #{mfi_model_forward.2} parent=0
    #allocation3 [shape = 'u8[512]{0}', space=vmem, size = 0x400, scoped, tag = 'input window, operand 4, single buffered']
    #allocation4 [shape = 's32[2]{0}', space=sflag, size = 0x8, scoped, tag = 'scoped memory for mfi_model_forward.2']
    #allocation5 [shape = 'u8[512]{0}', space=vmem, size = 0x400, scoped, tag = 'input window, operand 5, single buffered']
    #allocation6 [shape = 's32[1]{0}', space=sflag, size = 0x4, scoped, tag = 'scoped memory for mfi_model_forward.2']
    #allocation7 [shape = 'u8[512]{0}', space=vmem, size = 0x400, scoped, tag = 'input window, operand 7, single buffered']
    #allocation8 [shape = 'u8[512]{0}', space=vmem, size = 0x400, scoped, tag = 'input window, operand 9, single buffered']
    #allocation9 [shape = 's32[1]{0}', space=sflag, size = 0x4, scoped, tag = 'scoped memory for mfi_model_forward.2']
    #allocation10 [shape = 'u8[512]{0}', space=vmem, size = 0x400, scoped, tag = 'input window, operand 11, single buffered']
    #allocation11 [shape = 'u8[8192]{0}', space=vmem, size = 0x2000, scoped, tag = 'input window, operand 12, single buffered']
    #allocation12 [shape = 's32[1]{0}', space=sflag, size = 0x4, scoped, tag = 'scoped memory for mfi_model_forward.2']
    #allocation13 [shape = 'u8[512]{0}', space=vmem, size = 0x400, scoped, tag = 'input window, operand 13, single buffered']
    #allocation14 [shape = 'u8[8192]{0}', space=vmem, size = 0x2000, scoped, tag = 'input window, operand 14, single buffered']
    #allocation15 [shape = 's32[1]{0}', space=sflag, size = 0x4, scoped, tag = 'scoped memory for mfi_model_forward.2']
    #allocation16 [shape = 'u8[512]{0}', space=vmem, size = 0x400, scoped, tag = 'input window, operand 15, single buffered']
    #allocation17 [shape = 'u8[512]{0}', space=vmem, size = 0x400, scoped, tag = 'input window, operand 17, single buffered']
    #allocation18 [shape = 's32[1]{0}', space=sflag, size = 0x4, scoped, tag = 'scoped memory for mfi_model_forward.2']
    %29 = vsyncpa [#allocation4], 0
    %30 = vsyncpa [#allocation6], 0
    %31 = vsyncpa [#allocation9], 0
    %32 = vsyncpa [#allocation12], 0
    %33 = vsyncpa [#allocation15], 0
    %34 = vsyncpa [#allocation18], 0
    loop: start=0, step=1, limit=4
    $region2: #{mfi_model_forward.2} parent=1 // loop_pre_header
      _
    $region3: #{mfi_model_forward.2} parent=1 // loop_header
      %s36 = sphi 0, %s40
      %p37 = scmp.ge.s32.totalorder %s36, 4
      %s46 = sphi 0, %s48
      %s49 = sphi 0, %s46
      %s50 = sphi 0, %s49
      %s66 = sphi 0, %s50
      %s72 = sphi 0, %s74
      %s75 = sphi 0, %s72
      %s76 = sphi 0, %s75
      %s92 = sphi 0, %s76
      %s98 = sphi 0, %s100
      %s101 = sphi 0, %s98
      %s102 = sphi 0, %s101
      %s118 = sphi 0, %s102
      %s124 = sphi 0, %s126
      %s127 = sphi 0, %s124
      %s128 = sphi 0, %s127
      %s144 = sphi 0, %s128
      %s148 = sphi 0, %s148
      %s150 = sphi 0, %s148
      %s151 = sphi 0, %s150
      %s165 = sphi 0, %s151
      %s169 = sphi 0, %s169
      %s171 = sphi 0, %s169
      %s172 = sphi 0, %s171
      %s186 = sphi 0, %s172
      %s190 = sphi 0, %s190
      %s192 = sphi 0, %s190
      %s193 = sphi 0, %s192
      %s207 = sphi 0, %s193
      %s211 = sphi 0, %s211
      %s213 = sphi 0, %s211
      %s214 = sphi 0, %s213
      %s228 = sphi 0, %s214
      %s232 = sphi 0, %s232
      %s234 = sphi 0, %s232
      %s235 = sphi 0, %s234
      %s249 = sphi 0, %s235
      %s253 = sphi 0, %s253
      %s255 = sphi 0, %s253
      %s256 = sphi 0, %s255
      %s270 = sphi 0, %s256
      %s274 = sphi 0, %s274
      %s276 = sphi 0, %s274
      %s277 = sphi 0, %s276
      %s291 = sphi 0, %s277
      %s295 = sphi 0, %s295
      %s297 = sphi 0, %s295
      %s298 = sphi 0, %s297
      %s312 = sphi 0, %s298
      %s316 = sphi 0, %s316
      %s318 = sphi 0, %s316
      %s319 = sphi 0, %s318
      %s333 = sphi 0, %s319
      %s337 = sphi 0, %s337
      %s339 = sphi 0, %s337
      %s340 = sphi 0, %s339
      %s354 = sphi 0, %s340
      %s358 = sphi 0, %s358
      %s360 = sphi 0, %s358
      %s361 = sphi 0, %s360
      %s375 = sphi 0, %s361
      %s379 = sphi 0, %s379
      %s381 = sphi 0, %s379
      %s382 = sphi 0, %s381
      %s396 = sphi 0, %s382
      %s400 = sphi 0, %s400
      %s402 = sphi 0, %s400
      %s403 = sphi 0, %s402
      %s417 = sphi 0, %s403
      %s421 = sphi 0, %s421
      %s423 = sphi 0, %s421
      %s424 = sphi 0, %s423
      %s438 = sphi 0, %s424
      %s442 = sphi 0, %s442
      %s444 = sphi 0, %s442
      %s445 = sphi 0, %s444
      %s459 = sphi 0, %s445
      %s463 = sphi 0, %s463
      %s465 = sphi 0, %s463
      %s466 = sphi 0, %s465
      %s480 = sphi 0, %s466
      %s486 = sphi 0, %s488
      %s489 = sphi 0, %s486
      %s490 = sphi 0, %s489
      %s506 = sphi 0, %s490
      %s512 = sphi 0, %s514
      %s515 = sphi 0, %s512
      %s516 = sphi 0, %s515
      %s532 = sphi 0, %s516
      %s538 = sphi 0, %s540
      %s541 = sphi 0, %s538
      %s542 = sphi 0, %s541
      %s558 = sphi 0, %s542
      %s564 = sphi 0, %s566
      %s567 = sphi 0, %s564
      %s568 = sphi 0, %s567
      %s584 = sphi 0, %s568
    $region4: #{mfi_model_forward.2} parent=1 // loop_header_branch
      %39 = sbr.rel (%p37) target = $region8
    $region5: #{mfi_model_forward.2} parent=1 // loop_body
      %s41 = ssub.s32 %s36, 1
      %s42 = ssub.s32 %s36, 2
      %s43 = sadd.s32 %s36, 1
      %s44 = ssub.s32 %s36, %s43
      %p45 = scmp.eq.s32.totalorder %s44, 0
      %s47 = sadd.s32 %s46, 1
      %s48 = scalar_select %p45, %s46, %s47
      %p51 = pneg %p45
      %p52 = scmp.eq.s32.totalorder %s36, 1
      %p53 = por %p51, %p52
      %p54 = scmp.ne.s32.totalorder %s46, %s49
      %p55 = scmp.eq.s32.totalorder %s36, 0
      %p56 = por %p54, %p55
      %p57 = scmp.ne.s32.totalorder %s46, %s49
      %p58 = scmp.eq.s32.totalorder %s41, 1
      %p59 = por %p57, %p58
      %p60 = scmp.ne.s32.totalorder %s49, %s50
      %p61 = scmp.eq.s32.totalorder %s41, 0
      %p62 = por %p60, %p61
      %p63 = scmp.ne.s32.totalorder %s49, %s50
      %p64 = scmp.eq.s32.totalorder %s42, 1
      %p65 = por %p63, %p64
      %p67 = scmp.ne.s32.totalorder %s50, %s66
      %p68 = scmp.eq.s32.totalorder %s42, 0
      %p69 = por %p67, %p68
      %s70 = ssub.s32 %s36, %s43
      %p71 = scmp.eq.s32.totalorder %s70, 0
      %s73 = sadd.s32 %s72, 1
      %s74 = scalar_select %p71, %s72, %s73
      %p77 = pneg %p71
      %p78 = scmp.eq.s32.totalorder %s36, 1
      %p79 = por %p77, %p78
      %p80 = scmp.ne.s32.totalorder %s72, %s75
      %p81 = scmp.eq.s32.totalorder %s36, 0
      %p82 = por %p80, %p81
      %p83 = scmp.ne.s32.totalorder %s72, %s75
      %p84 = scmp.eq.s32.totalorder %s41, 1
      %p85 = por %p83, %p84
      %p86 = scmp.ne.s32.totalorder %s75, %s76
      %p87 = scmp.eq.s32.totalorder %s41, 0
      %p88 = por %p86, %p87
      %p89 = scmp.ne.s32.totalorder %s75, %s76
      %p90 = scmp.eq.s32.totalorder %s42, 1
      %p91 = por %p89, %p90
      %p93 = scmp.ne.s32.totalorder %s76, %s92
      %p94 = scmp.eq.s32.totalorder %s42, 0
      %p95 = por %p93, %p94
      %s96 = ssub.s32 %s36, %s43
      %p97 = scmp.eq.s32.totalorder %s96, 0
      %s99 = sadd.s32 %s98, 1
      %s100 = scalar_select %p97, %s98, %s99
      %p103 = pneg %p97
      %p104 = scmp.eq.s32.totalorder %s36, 1
      %p105 = por %p103, %p104
      %p106 = scmp.ne.s32.totalorder %s98, %s101
      %p107 = scmp.eq.s32.totalorder %s36, 0
      %p108 = por %p106, %p107
      %p109 = scmp.ne.s32.totalorder %s98, %s101
      %p110 = scmp.eq.s32.totalorder %s41, 1
      %p111 = por %p109, %p110
      %p112 = scmp.ne.s32.totalorder %s101, %s102
      %p113 = scmp.eq.s32.totalorder %s41, 0
      %p114 = por %p112, %p113
      %p115 = scmp.ne.s32.totalorder %s101, %s102
      %p116 = scmp.eq.s32.totalorder %s42, 1
      %p117 = por %p115, %p116
      %p119 = scmp.ne.s32.totalorder %s102, %s118
      %p120 = scmp.eq.s32.totalorder %s42, 0
      %p121 = por %p119, %p120
      %s122 = ssub.s32 %s36, %s43
      %p123 = scmp.eq.s32.totalorder %s122, 0
      %s125 = sadd.s32 %s124, 1
      %s126 = scalar_select %p123, %s124, %s125
      %p129 = pneg %p123
      %p130 = scmp.eq.s32.totalorder %s36, 1
      %p131 = por %p129, %p130
      %p132 = scmp.ne.s32.totalorder %s124, %s127
      %p133 = scmp.eq.s32.totalorder %s36, 0
      %p134 = por %p132, %p133
      %p135 = scmp.ne.s32.totalorder %s124, %s127
      %p136 = scmp.eq.s32.totalorder %s41, 1
      %p137 = por %p135, %p136
      %p138 = scmp.ne.s32.totalorder %s127, %s128
      %p139 = scmp.eq.s32.totalorder %s41, 0
      %p140 = por %p138, %p139
      %p141 = scmp.ne.s32.totalorder %s127, %s128
      %p142 = scmp.eq.s32.totalorder %s42, 1
      %p143 = por %p141, %p142
      %p145 = scmp.ne.s32.totalorder %s128, %s144
      %p146 = scmp.eq.s32.totalorder %s42, 0
      %p147 = por %p145, %p146
      %s149 = sadd.s32 %s148, 1
      %p152 = scmp.eq.s32.totalorder %s36, 1
      %p153 = scmp.ne.s32.totalorder %s148, %s150
      %p154 = scmp.eq.s32.totalorder %s36, 0
      %p155 = por %p153, %p154
      %p156 = scmp.ne.s32.totalorder %s148, %s150
      %p157 = scmp.eq.s32.totalorder %s41, 1
      %p158 = por %p156, %p157
      %p159 = scmp.ne.s32.totalorder %s150, %s151
      %p160 = scmp.eq.s32.totalorder %s41, 0
      %p161 = por %p159, %p160
      %p162 = scmp.ne.s32.totalorder %s150, %s151
      %p163 = scmp.eq.s32.totalorder %s42, 1
      %p164 = por %p162, %p163
      %p166 = scmp.ne.s32.totalorder %s151, %s165
      %p167 = scmp.eq.s32.totalorder %s42, 0
      %p168 = por %p166, %p167
      %s170 = sadd.s32 %s169, 1
      %p173 = scmp.eq.s32.totalorder %s36, 1
      %p174 = scmp.ne.s32.totalorder %s169, %s171
      %p175 = scmp.eq.s32.totalorder %s36, 0
      %p176 = por %p174, %p175
      %p177 = scmp.ne.s32.totalorder %s169, %s171
      %p178 = scmp.eq.s32.totalorder %s41, 1
      %p179 = por %p177, %p178
      %p180 = scmp.ne.s32.totalorder %s171, %s172
      %p181 = scmp.eq.s32.totalorder %s41, 0
      %p182 = por %p180, %p181
      %p183 = scmp.ne.s32.totalorder %s171, %s172
      %p184 = scmp.eq.s32.totalorder %s42, 1
      %p185 = por %p183, %p184
      %p187 = scmp.ne.s32.totalorder %s172, %s186
      %p188 = scmp.eq.s32.totalorder %s42, 0
      %p189 = por %p187, %p188
      %s191 = sadd.s32 %s190, 1
      %p194 = scmp.eq.s32.totalorder %s36, 1
      %p195 = scmp.ne.s32.totalorder %s190, %s192
      %p196 = scmp.eq.s32.totalorder %s36, 0
      %p197 = por %p195, %p196
      %p198 = scmp.ne.s32.totalorder %s190, %s192
      %p199 = scmp.eq.s32.totalorder %s41, 1
      %p200 = por %p198, %p199
      %p201 = scmp.ne.s32.totalorder %s192, %s193
      %p202 = scmp.eq.s32.totalorder %s41, 0
      %p203 = por %p201, %p202
      %p204 = scmp.ne.s32.totalorder %s192, %s193
      %p205 = scmp.eq.s32.totalorder %s42, 1
      %p206 = por %p204, %p205
      %p208 = scmp.ne.s32.totalorder %s193, %s207
      %p209 = scmp.eq.s32.totalorder %s42, 0
      %p210 = por %p208, %p209
      %s212 = sadd.s32 %s211, 1
      %p215 = scmp.eq.s32.totalorder %s36, 1
      %p216 = scmp.ne.s32.totalorder %s211, %s213
      %p217 = scmp.eq.s32.totalorder %s36, 0
      %p218 = por %p216, %p217
      %p219 = scmp.ne.s32.totalorder %s211, %s213
      %p220 = scmp.eq.s32.totalorder %s41, 1
      %p221 = por %p219, %p220
      %p222 = scmp.ne.s32.totalorder %s213, %s214
      %p223 = scmp.eq.s32.totalorder %s41, 0
      %p224 = por %p222, %p223
      %p225 = scmp.ne.s32.totalorder %s213, %s214
      %p226 = scmp.eq.s32.totalorder %s42, 1
      %p227 = por %p225, %p226
      %p229 = scmp.ne.s32.totalorder %s214, %s228
      %p230 = scmp.eq.s32.totalorder %s42, 0
      %p231 = por %p229, %p230
      %s233 = sadd.s32 %s232, 1
      %p236 = scmp.eq.s32.totalorder %s36, 1
      %p237 = scmp.ne.s32.totalorder %s232, %s234
      %p238 = scmp.eq.s32.totalorder %s36, 0
      %p239 = por %p237, %p238
      %p240 = scmp.ne.s32.totalorder %s232, %s234
      %p241 = scmp.eq.s32.totalorder %s41, 1
      %p242 = por %p240, %p241
      %p243 = scmp.ne.s32.totalorder %s234, %s235
      %p244 = scmp.eq.s32.totalorder %s41, 0
      %p245 = por %p243, %p244
      %p246 = scmp.ne.s32.totalorder %s234, %s235
      %p247 = scmp.eq.s32.totalorder %s42, 1
      %p248 = por %p246, %p247
      %p250 = scmp.ne.s32.totalorder %s235, %s249
      %p251 = scmp.eq.s32.totalorder %s42, 0
      %p252 = por %p250, %p251
      %s254 = sadd.s32 %s253, 1
      %p257 = scmp.eq.s32.totalorder %s36, 1
      %p258 = scmp.ne.s32.totalorder %s253, %s255
      %p259 = scmp.eq.s32.totalorder %s36, 0
      %p260 = por %p258, %p259
      %p261 = scmp.ne.s32.totalorder %s253, %s255
      %p262 = scmp.eq.s32.totalorder %s41, 1
      %p263 = por %p261, %p262
      %p264 = scmp.ne.s32.totalorder %s255, %s256
      %p265 = scmp.eq.s32.totalorder %s41, 0
      %p266 = por %p264, %p265
      %p267 = scmp.ne.s32.totalorder %s255, %s256
      %p268 = scmp.eq.s32.totalorder %s42, 1
      %p269 = por %p267, %p268
      %p271 = scmp.ne.s32.totalorder %s256, %s270
      %p272 = scmp.eq.s32.totalorder %s42, 0
      %p273 = por %p271, %p272
      %s275 = sadd.s32 %s274, 1
      %p278 = scmp.eq.s32.totalorder %s36, 1
      %p279 = scmp.ne.s32.totalorder %s274, %s276
      %p280 = scmp.eq.s32.totalorder %s36, 0
      %p281 = por %p279, %p280
      %p282 = scmp.ne.s32.totalorder %s274, %s276
      %p283 = scmp.eq.s32.totalorder %s41, 1
      %p284 = por %p282, %p283
      %p285 = scmp.ne.s32.totalorder %s276, %s277
      %p286 = scmp.eq.s32.totalorder %s41, 0
      %p287 = por %p285, %p286
      %p288 = scmp.ne.s32.totalorder %s276, %s277
      %p289 = scmp.eq.s32.totalorder %s42, 1
      %p290 = por %p288, %p289
      %p292 = scmp.ne.s32.totalorder %s277, %s291
      %p293 = scmp.eq.s32.totalorder %s42, 0
      %p294 = por %p292, %p293
      %s296 = sadd.s32 %s295, 1
      %p299 = scmp.eq.s32.totalorder %s36, 1
      %p300 = scmp.ne.s32.totalorder %s295, %s297
      %p301 = scmp.eq.s32.totalorder %s36, 0
      %p302 = por %p300, %p301
      %p303 = scmp.ne.s32.totalorder %s295, %s297
      %p304 = scmp.eq.s32.totalorder %s41, 1
      %p305 = por %p303, %p304
      %p306 = scmp.ne.s32.totalorder %s297, %s298
      %p307 = scmp.eq.s32.totalorder %s41, 0
      %p308 = por %p306, %p307
      %p309 = scmp.ne.s32.totalorder %s297, %s298
      %p310 = scmp.eq.s32.totalorder %s42, 1
      %p311 = por %p309, %p310
      %p313 = scmp.ne.s32.totalorder %s298, %s312
      %p314 = scmp.eq.s32.totalorder %s42, 0
      %p315 = por %p313, %p314
      %s317 = sadd.s32 %s316, 1
      %p320 = scmp.eq.s32.totalorder %s36, 1
      %p321 = scmp.ne.s32.totalorder %s316, %s318
      %p322 = scmp.eq.s32.totalorder %s36, 0
      %p323 = por %p321, %p322
      %p324 = scmp.ne.s32.totalorder %s316, %s318
      %p325 = scmp.eq.s32.totalorder %s41, 1
      %p326 = por %p324, %p325
      %p327 = scmp.ne.s32.totalorder %s318, %s319
      %p328 = scmp.eq.s32.totalorder %s41, 0
      %p329 = por %p327, %p328
      %p330 = scmp.ne.s32.totalorder %s318, %s319
      %p331 = scmp.eq.s32.totalorder %s42, 1
      %p332 = por %p330, %p331
      %p334 = scmp.ne.s32.totalorder %s319, %s333
      %p335 = scmp.eq.s32.totalorder %s42, 0
      %p336 = por %p334, %p335
      %s338 = sadd.s32 %s337, 1
      %p341 = scmp.eq.s32.totalorder %s36, 1
      %p342 = scmp.ne.s32.totalorder %s337, %s339
      %p343 = scmp.eq.s32.totalorder %s36, 0
      %p344 = por %p342, %p343
      %p345 = scmp.ne.s32.totalorder %s337, %s339
      %p346 = scmp.eq.s32.totalorder %s41, 1
      %p347 = por %p345, %p346
      %p348 = scmp.ne.s32.totalorder %s339, %s340
      %p349 = scmp.eq.s32.totalorder %s41, 0
      %p350 = por %p348, %p349
      %p351 = scmp.ne.s32.totalorder %s339, %s340
      %p352 = scmp.eq.s32.totalorder %s42, 1
      %p353 = por %p351, %p352
      %p355 = scmp.ne.s32.totalorder %s340, %s354
      %p356 = scmp.eq.s32.totalorder %s42, 0
      %p357 = por %p355, %p356
      %s359 = sadd.s32 %s358, 1
      %p362 = scmp.eq.s32.totalorder %s36, 1
      %p363 = scmp.ne.s32.totalorder %s358, %s360
      %p364 = scmp.eq.s32.totalorder %s36, 0
      %p365 = por %p363, %p364
      %p366 = scmp.ne.s32.totalorder %s358, %s360
      %p367 = scmp.eq.s32.totalorder %s41, 1
      %p368 = por %p366, %p367
      %p369 = scmp.ne.s32.totalorder %s360, %s361
      %p370 = scmp.eq.s32.totalorder %s41, 0
      %p371 = por %p369, %p370
      %p372 = scmp.ne.s32.totalorder %s360, %s361
      %p373 = scmp.eq.s32.totalorder %s42, 1
      %p374 = por %p372, %p373
      %p376 = scmp.ne.s32.totalorder %s361, %s375
      %p377 = scmp.eq.s32.totalorder %s42, 0
      %p378 = por %p376, %p377
      %s380 = sadd.s32 %s379, 1
      %p383 = scmp.eq.s32.totalorder %s36, 1
      %p384 = scmp.ne.s32.totalorder %s379, %s381
      %p385 = scmp.eq.s32.totalorder %s36, 0
      %p386 = por %p384, %p385
      %p387 = scmp.ne.s32.totalorder %s379, %s381
      %p388 = scmp.eq.s32.totalorder %s41, 1
      %p389 = por %p387, %p388
      %p390 = scmp.ne.s32.totalorder %s381, %s382
      %p391 = scmp.eq.s32.totalorder %s41, 0
      %p392 = por %p390, %p391
      %p393 = scmp.ne.s32.totalorder %s381, %s382
      %p394 = scmp.eq.s32.totalorder %s42, 1
      %p395 = por %p393, %p394
      %p397 = scmp.ne.s32.totalorder %s382, %s396
      %p398 = scmp.eq.s32.totalorder %s42, 0
      %p399 = por %p397, %p398
      %s401 = sadd.s32 %s400, 1
      %p404 = scmp.eq.s32.totalorder %s36, 1
      %p405 = scmp.ne.s32.totalorder %s400, %s402
      %p406 = scmp.eq.s32.totalorder %s36, 0
      %p407 = por %p405, %p406
      %p408 = scmp.ne.s32.totalorder %s400, %s402
      %p409 = scmp.eq.s32.totalorder %s41, 1
      %p410 = por %p408, %p409
      %p411 = scmp.ne.s32.totalorder %s402, %s403
      %p412 = scmp.eq.s32.totalorder %s41, 0
      %p413 = por %p411, %p412
      %p414 = scmp.ne.s32.totalorder %s402, %s403
      %p415 = scmp.eq.s32.totalorder %s42, 1
      %p416 = por %p414, %p415
      %p418 = scmp.ne.s32.totalorder %s403, %s417
      %p419 = scmp.eq.s32.totalorder %s42, 0
      %p420 = por %p418, %p419
      %s422 = sadd.s32 %s421, 1
      %p425 = scmp.eq.s32.totalorder %s36, 1
      %p426 = scmp.ne.s32.totalorder %s421, %s423
      %p427 = scmp.eq.s32.totalorder %s36, 0
      %p428 = por %p426, %p427
      %p429 = scmp.ne.s32.totalorder %s421, %s423
      %p430 = scmp.eq.s32.totalorder %s41, 1
      %p431 = por %p429, %p430
      %p432 = scmp.ne.s32.totalorder %s423, %s424
      %p433 = scmp.eq.s32.totalorder %s41, 0
      %p434 = por %p432, %p433
      %p435 = scmp.ne.s32.totalorder %s423, %s424
      %p436 = scmp.eq.s32.totalorder %s42, 1
      %p437 = por %p435, %p436
      %p439 = scmp.ne.s32.totalorder %s424, %s438
      %p440 = scmp.eq.s32.totalorder %s42, 0
      %p441 = por %p439, %p440
      %s443 = sadd.s32 %s442, 1
      %p446 = scmp.eq.s32.totalorder %s36, 1
      %p447 = scmp.ne.s32.totalorder %s442, %s444
      %p448 = scmp.eq.s32.totalorder %s36, 0
      %p449 = por %p447, %p448
      %p450 = scmp.ne.s32.totalorder %s442, %s444
      %p451 = scmp.eq.s32.totalorder %s41, 1
      %p452 = por %p450, %p451
      %p453 = scmp.ne.s32.totalorder %s444, %s445
      %p454 = scmp.eq.s32.totalorder %s41, 0
      %p455 = por %p453, %p454
      %p456 = scmp.ne.s32.totalorder %s444, %s445
      %p457 = scmp.eq.s32.totalorder %s42, 1
      %p458 = por %p456, %p457
      %p460 = scmp.ne.s32.totalorder %s445, %s459
      %p461 = scmp.eq.s32.totalorder %s42, 0
      %p462 = por %p460, %p461
      %s464 = sadd.s32 %s463, 1
      %p467 = scmp.eq.s32.totalorder %s36, 1
      %p468 = scmp.ne.s32.totalorder %s463, %s465
      %p469 = scmp.eq.s32.totalorder %s36, 0
      %p470 = por %p468, %p469
      %p471 = scmp.ne.s32.totalorder %s463, %s465
      %p472 = scmp.eq.s32.totalorder %s41, 1
      %p473 = por %p471, %p472
      %p474 = scmp.ne.s32.totalorder %s465, %s466
      %p475 = scmp.eq.s32.totalorder %s41, 0
      %p476 = por %p474, %p475
      %p477 = scmp.ne.s32.totalorder %s465, %s466
      %p478 = scmp.eq.s32.totalorder %s42, 1
      %p479 = por %p477, %p478
      %p481 = scmp.ne.s32.totalorder %s466, %s480
      %p482 = scmp.eq.s32.totalorder %s42, 0
      %p483 = por %p481, %p482
      %s484 = ssub.s32 %s36, %s43
      %p485 = scmp.eq.s32.totalorder %s484, 0
      %s487 = sadd.s32 %s486, 1
      %s488 = scalar_select %p485, %s486, %s487
      %p491 = pneg %p485
      %p492 = scmp.eq.s32.totalorder %s36, 1
      %p493 = por %p491, %p492
      %p494 = scmp.ne.s32.totalorder %s486, %s489
      %p495 = scmp.eq.s32.totalorder %s36, 0
      %p496 = por %p494, %p495
      %p497 = scmp.ne.s32.totalorder %s486, %s489
      %p498 = scmp.eq.s32.totalorder %s41, 1
      %p499 = por %p497, %p498
      %p500 = scmp.ne.s32.totalorder %s489, %s490
      %p501 = scmp.eq.s32.totalorder %s41, 0
      %p502 = por %p500, %p501
      %p503 = scmp.ne.s32.totalorder %s489, %s490
      %p504 = scmp.eq.s32.totalorder %s42, 1
      %p505 = por %p503, %p504
      %p507 = scmp.ne.s32.totalorder %s490, %s506
      %p508 = scmp.eq.s32.totalorder %s42, 0
      %p509 = por %p507, %p508
      %s510 = ssub.s32 %s36, %s43
      %p511 = scmp.eq.s32.totalorder %s510, 0
      %s513 = sadd.s32 %s512, 1
      %s514 = scalar_select %p511, %s512, %s513
      %p517 = pneg %p511
      %p518 = scmp.eq.s32.totalorder %s36, 1
      %p519 = por %p517, %p518
      %p520 = scmp.ne.s32.totalorder %s512, %s515
      %p521 = scmp.eq.s32.totalorder %s36, 0
      %p522 = por %p520, %p521
      %p523 = scmp.ne.s32.totalorder %s512, %s515
      %p524 = scmp.eq.s32.totalorder %s41, 1
      %p525 = por %p523, %p524
      %p526 = scmp.ne.s32.totalorder %s515, %s516
      %p527 = scmp.eq.s32.totalorder %s41, 0
      %p528 = por %p526, %p527
      %p529 = scmp.ne.s32.totalorder %s515, %s516
      %p530 = scmp.eq.s32.totalorder %s42, 1
      %p531 = por %p529, %p530
      %p533 = scmp.ne.s32.totalorder %s516, %s532
      %p534 = scmp.eq.s32.totalorder %s42, 0
      %p535 = por %p533, %p534
      %s536 = ssub.s32 %s36, %s43
      %p537 = scmp.eq.s32.totalorder %s536, 0
      %s539 = sadd.s32 %s538, 1
      %s540 = scalar_select %p537, %s538, %s539
      %p543 = pneg %p537
      %p544 = scmp.eq.s32.totalorder %s36, 1
      %p545 = por %p543, %p544
      %p546 = scmp.ne.s32.totalorder %s538, %s541
      %p547 = scmp.eq.s32.totalorder %s36, 0
      %p548 = por %p546, %p547
      %p549 = scmp.ne.s32.totalorder %s538, %s541
      %p550 = scmp.eq.s32.totalorder %s41, 1
      %p551 = por %p549, %p550
      %p552 = scmp.ne.s32.totalorder %s541, %s542
      %p553 = scmp.eq.s32.totalorder %s41, 0
      %p554 = por %p552, %p553
      %p555 = scmp.ne.s32.totalorder %s541, %s542
      %p556 = scmp.eq.s32.totalorder %s42, 1
      %p557 = por %p555, %p556
      %p559 = scmp.ne.s32.totalorder %s542, %s558
      %p560 = scmp.eq.s32.totalorder %s42, 0
      %p561 = por %p559, %p560
      %s562 = ssub.s32 %s36, %s43
      %p563 = scmp.eq.s32.totalorder %s562, 0
      %s565 = sadd.s32 %s564, 1
      %s566 = scalar_select %p563, %s564, %s565
      %p569 = pneg %p563
      %p570 = scmp.eq.s32.totalorder %s36, 1
      %p571 = por %p569, %p570
      %p572 = scmp.ne.s32.totalorder %s564, %s567
      %p573 = scmp.eq.s32.totalorder %s36, 0
      %p574 = por %p572, %p573
      %p575 = scmp.ne.s32.totalorder %s564, %s567
      %p576 = scmp.eq.s32.totalorder %s41, 1
      %p577 = por %p575, %p576
      %p578 = scmp.ne.s32.totalorder %s567, %s568
      %p579 = scmp.eq.s32.totalorder %s41, 0
      %p580 = por %p578, %p579
      %p581 = scmp.ne.s32.totalorder %s567, %s568
      %p582 = scmp.eq.s32.totalorder %s42, 1
      %p583 = por %p581, %p582
      %p585 = scmp.ne.s32.totalorder %s568, %s584
      %p586 = scmp.eq.s32.totalorder %s42, 0
      %p587 = por %p585, %p586
      %p588 = scmp.le.s32.totalorder 1, %s36
      %p589 = scmp.lt.s32.totalorder %s36, 3
      %p590 = pnand %p588, %p589
      %p591 = pneg %p590
      // Predicated region
      $region9: #{mfi_model_forward.2} parent=5 // pred_check
        _
      $region10: #{mfi_model_forward.2} parent=5 // pred_check_branch
        %593 = sbr.rel (%p590) target = $region12
      $region11: #{mfi_model_forward.2} parent=5 // pred_region
        %s594 = ssub.s32 %s36, 1
        // Predicated region
        $region13: #{mfi_model_forward.2} parent=11 // pred_check
          %p595 = pneg %p161
        $region14: #{mfi_model_forward.2} parent=11 // pred_check_branch
          %597 = sbr.rel (%p595) target = $region16
        $region15: #{mfi_model_forward.2} parent=11 // pred_region
          %s599 = ssub.s32 16, 16
          %600 = vsyncadd [#allocation4], %s599
          %s602 = sshll.u32 [#allocation3], 4
          %s603 = int_to_ptr.vmem [resolvable:$true] %s602
          %605 = dma.hbm_to_vmem [thread:$0]  %s4, 16, %s603, [#allocation4]
        $region16: #{mfi_model_forward.2} parent=11 // pred_fallthru
          _
        // Predicated region
        $region17: #{mfi_model_forward.2} parent=11 // pred_check
          %p606 = pneg %p182
        $region18: #{mfi_model_forward.2} parent=11 // pred_check_branch
          %608 = sbr.rel (%p606) target = $region20
        $region19: #{mfi_model_forward.2} parent=11 // pred_region
          %s610 = ssub.s32 16, 16
          %611 = vsyncadd [#allocation6], %s610
          %s613 = sshll.u32 [#allocation5], 4
          %s614 = int_to_ptr.vmem [resolvable:$true] %s613
          %616 = dma.hbm_to_vmem [thread:$0]  %s5, 16, %s614, [#allocation6]
        $region20: #{mfi_model_forward.2} parent=11 // pred_fallthru
          _
        // Predicated region
        $region21: #{mfi_model_forward.2} parent=11 // pred_check
          %p617 = pneg %p203
        $region22: #{mfi_model_forward.2} parent=11 // pred_check_branch
          %619 = sbr.rel (%p617) target = $region24
        $region23: #{mfi_model_forward.2} parent=11 // pred_region
          _
        $region24: #{mfi_model_forward.2} parent=11 // pred_fallthru
          _
        // Predicated region
        $region25: #{mfi_model_forward.2} parent=11 // pred_check
          %p620 = pneg %p224
        $region26: #{mfi_model_forward.2} parent=11 // pred_check_branch
          %622 = sbr.rel (%p620) target = $region28
        $region27: #{mfi_model_forward.2} parent=11 // pred_region
          %s624 = ssub.s32 16, 16
          %625 = vsyncadd [#allocation6], %s624
          %s627 = sshll.u32 [#allocation7], 4
          %s628 = int_to_ptr.vmem [resolvable:$true] %s627
          %630 = dma.hbm_to_vmem [thread:$0]  %s7, 16, %s628, [#allocation6]
        $region28: #{mfi_model_forward.2} parent=11 // pred_fallthru
          _
        // Predicated region
        $region29: #{mfi_model_forward.2} parent=11 // pred_check
          %p631 = pneg %p245
        $region30: #{mfi_model_forward.2} parent=11 // pred_check_branch
          %633 = sbr.rel (%p631) target = $region32
        $region31: #{mfi_model_forward.2} parent=11 // pred_region
          _
        $region32: #{mfi_model_forward.2} parent=11 // pred_fallthru
          _
        // Predicated region
        $region33: #{mfi_model_forward.2} parent=11 // pred_check
          %p634 = pneg %p266
        $region34: #{mfi_model_forward.2} parent=11 // pred_check_branch
          %636 = sbr.rel (%p634) target = $region36
        $region35: #{mfi_model_forward.2} parent=11 // pred_region
          %s638 = ssub.s32 16, 16
          %639 = vsyncadd [#allocation9], %s638
          %s641 = sshll.u32 [#allocation8], 4
          %s642 = int_to_ptr.vmem [resolvable:$true] %s641
          %644 = dma.hbm_to_vmem [thread:$0]  %s9, 16, %s642, [#allocation9]
        $region36: #{mfi_model_forward.2} parent=11 // pred_fallthru
          _
        // Predicated region
        $region37: #{mfi_model_forward.2} parent=11 // pred_check
          %p645 = pneg %p287
        $region38: #{mfi_model_forward.2} parent=11 // pred_check_branch
          %647 = sbr.rel (%p645) target = $region40
        $region39: #{mfi_model_forward.2} parent=11 // pred_region
          _
        $region40: #{mfi_model_forward.2} parent=11 // pred_fallthru
          _
        // Predicated region
        $region41: #{mfi_model_forward.2} parent=11 // pred_check
          %p648 = pneg %p308
        $region42: #{mfi_model_forward.2} parent=11 // pred_check_branch
          %650 = sbr.rel (%p648) target = $region44
        $region43: #{mfi_model_forward.2} parent=11 // pred_region
          %s652 = ssub.s32 16, 16
          %653 = vsyncadd [#allocation9], %s652
          %s655 = sshll.u32 [#allocation10], 4
          %s656 = int_to_ptr.vmem [resolvable:$true] %s655
          %658 = dma.hbm_to_vmem [thread:$0]  %s11, 16, %s656, [#allocation9]
        $region44: #{mfi_model_forward.2} parent=11 // pred_fallthru
          _
        // Predicated region
        $region45: #{mfi_model_forward.2} parent=11 // pred_check
          %p659 = pneg %p329
        $region46: #{mfi_model_forward.2} parent=11 // pred_check_branch
          %661 = sbr.rel (%p659) target = $region48
        $region47: #{mfi_model_forward.2} parent=11 // pred_region
          %s663 = ssub.s32 256, 256
          %664 = vsyncadd [#allocation12], %s663
          %s665 = sshll.u32 [#allocation11], 4
          %s666 = int_to_ptr.vmem [resolvable:$true] %s665
          %671 = dma.hbm_to_vmem [thread:$0]  %s12, 256, %s666, [#allocation12], 64, 64, 4
        $region48: #{mfi_model_forward.2} parent=11 // pred_fallthru
          _
        // Predicated region
        $region49: #{mfi_model_forward.2} parent=11 // pred_check
          %p672 = pneg %p350
        $region50: #{mfi_model_forward.2} parent=11 // pred_check_branch
          %674 = sbr.rel (%p672) target = $region52
        $region51: #{mfi_model_forward.2} parent=11 // pred_region
          %s676 = ssub.s32 16, 16
          %677 = vsyncadd [#allocation12], %s676
          %s679 = sshll.u32 [#allocation13], 4
          %s680 = int_to_ptr.vmem [resolvable:$true] %s679
          %682 = dma.hbm_to_vmem [thread:$0]  %s13, 16, %s680, [#allocation12]
        $region52: #{mfi_model_forward.2} parent=11 // pred_fallthru
          _
        // Predicated region
        $region53: #{mfi_model_forward.2} parent=11 // pred_check
          %p683 = pneg %p371
        $region54: #{mfi_model_forward.2} parent=11 // pred_check_branch
          %685 = sbr.rel (%p683) target = $region56
        $region55: #{mfi_model_forward.2} parent=11 // pred_region
          %s687 = ssub.s32 256, 256
          %688 = vsyncadd [#allocation15], %s687
          %s689 = sshll.u32 [#allocation14], 4
          %s690 = int_to_ptr.vmem [resolvable:$true] %s689
          %695 = dma.hbm_to_vmem [thread:$0]  %s14, 256, %s690, [#allocation15], 64, 64, 4
        $region56: #{mfi_model_forward.2} parent=11 // pred_fallthru
          _
        // Predicated region
        $region57: #{mfi_model_forward.2} parent=11 // pred_check
          %p696 = pneg %p392
        $region58: #{mfi_model_forward.2} parent=11 // pred_check_branch
          %698 = sbr.rel (%p696) target = $region60
        $region59: #{mfi_model_forward.2} parent=11 // pred_region
          %s700 = ssub.s32 16, 16
          %701 = vsyncadd [#allocation15], %s700
          %s703 = sshll.u32 [#allocation16], 4
          %s704 = int_to_ptr.vmem [resolvable:$true] %s703
          %706 = dma.hbm_to_vmem [thread:$0]  %s15, 16, %s704, [#allocation15]
        $region60: #{mfi_model_forward.2} parent=11 // pred_fallthru
          _
        // Predicated region
        $region61: #{mfi_model_forward.2} parent=11 // pred_check
          %p707 = pneg %p413
        $region62: #{mfi_model_forward.2} parent=11 // pred_check_branch
          %709 = sbr.rel (%p707) target = $region64
        $region63: #{mfi_model_forward.2} parent=11 // pred_region
          _
        $region64: #{mfi_model_forward.2} parent=11 // pred_fallthru
          _
        // Predicated region
        $region65: #{mfi_model_forward.2} parent=11 // pred_check
          %p710 = pneg %p434
        $region66: #{mfi_model_forward.2} parent=11 // pred_check_branch
          %712 = sbr.rel (%p710) target = $region68
        $region67: #{mfi_model_forward.2} parent=11 // pred_region
          %s714 = ssub.s32 16, 16
          %715 = vsyncadd [#allocation18], %s714
          %s717 = sshll.u32 [#allocation17], 4
          %s718 = int_to_ptr.vmem [resolvable:$true] %s717
          %720 = dma.hbm_to_vmem [thread:$0]  %s17, 16, %s718, [#allocation18]
        $region68: #{mfi_model_forward.2} parent=11 // pred_fallthru
          _
        // Predicated region
        $region69: #{mfi_model_forward.2} parent=11 // pred_check
          %p721 = pneg %p455
        $region70: #{mfi_model_forward.2} parent=11 // pred_check_branch
          %723 = sbr.rel (%p721) target = $region72
        $region71: #{mfi_model_forward.2} parent=11 // pred_region
          _
        $region72: #{mfi_model_forward.2} parent=11 // pred_fallthru
          _
        // Predicated region
        $region73: #{mfi_model_forward.2} parent=11 // pred_check
          %p724 = pneg %p476
        $region74: #{mfi_model_forward.2} parent=11 // pred_check_branch
          %726 = sbr.rel (%p724) target = $region76
        $region75: #{mfi_model_forward.2} parent=11 // pred_region
          _
        $region76: #{mfi_model_forward.2} parent=11 // pred_fallthru
          _
      $region12: #{mfi_model_forward.2} parent=5 // pred_fallthru
        _
      %p727 = scmp.lt.s32.totalorder %s36, 2
      // Predicated region
      $region77: #{mfi_model_forward.2} parent=5 // pred_check
        %p728 = pneg %p727
      $region78: #{mfi_model_forward.2} parent=5 // pred_check_branch
        %730 = sbr.rel (%p728) target = $region80
      $region79: #{mfi_model_forward.2} parent=5 // pred_region
        // Predicated region
        $region81: #{mfi_model_forward.2} parent=79 // pred_check
          %p731 = pneg %p56
        $region82: #{mfi_model_forward.2} parent=79 // pred_check_branch
          %733 = sbr.rel (%p731) target = $region84
        $region83: #{mfi_model_forward.2} parent=79 // pred_region
          %p734 = scmp.lt.s32.totalorder %s36, 1
          %s735 = scalar_select %p734, %s36, 1
          %s736 = smul.addr %s735, 8
          %s737 = scalar_lea.vmem %s0, %s736
        $region84: #{mfi_model_forward.2} parent=79 // pred_fallthru
          _
        // Predicated region
        $region85: #{mfi_model_forward.2} parent=79 // pred_check
          %p738 = pneg %p82
        $region86: #{mfi_model_forward.2} parent=79 // pred_check_branch
          %740 = sbr.rel (%p738) target = $region88
        $region87: #{mfi_model_forward.2} parent=79 // pred_region
          %p741 = scmp.lt.s32.totalorder %s36, 1
          %s742 = scalar_select %p741, %s36, 1
          %s743 = smul.addr %s742, 8
          %s744 = scalar_lea.vmem %s1, %s743
        $region88: #{mfi_model_forward.2} parent=79 // pred_fallthru
          _
        // Predicated region
        $region89: #{mfi_model_forward.2} parent=79 // pred_check
          %p745 = pneg %p108
        $region90: #{mfi_model_forward.2} parent=79 // pred_check_branch
          %747 = sbr.rel (%p745) target = $region92
        $region91: #{mfi_model_forward.2} parent=79 // pred_region
          %p748 = scmp.lt.s32.totalorder %s36, 1
          %s749 = scalar_select %p748, %s36, 1
          %s750 = smul.addr %s749, 8
          %s751 = scalar_lea.vmem %s2, %s750
        $region92: #{mfi_model_forward.2} parent=79 // pred_fallthru
          _
        // Predicated region
        $region93: #{mfi_model_forward.2} parent=79 // pred_check
          %p752 = pneg %p134
        $region94: #{mfi_model_forward.2} parent=79 // pred_check_branch
          %754 = sbr.rel (%p752) target = $region96
        $region95: #{mfi_model_forward.2} parent=79 // pred_region
          %p755 = scmp.lt.s32.totalorder %s36, 1
          %s756 = scalar_select %p755, %s36, 1
          %s757 = smul.addr %s756, 8
          %s758 = scalar_lea.vmem %s3, %s757
        $region96: #{mfi_model_forward.2} parent=79 // pred_fallthru
          _
      $region80: #{mfi_model_forward.2} parent=5 // pred_fallthru
        _
      %p759 = scmp.le.s32.totalorder 1, %s36
      %p760 = scmp.lt.s32.totalorder %s36, 3
      %p761 = pnand %p759, %p760
      %p762 = pneg %p761
      // Predicated region
      $region97: #{mfi_model_forward.2} parent=5 // pred_check
        _
      $region98: #{mfi_model_forward.2} parent=5 // pred_check_branch
        %764 = sbr.rel (%p761) target = $region100
      $region99: #{mfi_model_forward.2} parent=5 // pred_region
        %s765 = ssub.s32 %s36, 1
        // Predicated region
        $region101: #{mfi_model_forward.2} parent=99 // pred_check
          %p766 = pneg %p161
        $region102: #{mfi_model_forward.2} parent=99 // pred_check_branch
          %768 = sbr.rel (%p766) target = $region104
        $region103: #{mfi_model_forward.2} parent=99 // pred_region
          %769 = dma.done [#allocation4], 16
        $region104: #{mfi_model_forward.2} parent=99 // pred_fallthru
          _
        // Predicated region
        $region105: #{mfi_model_forward.2} parent=99 // pred_check
          %p770 = pneg %p182
        $region106: #{mfi_model_forward.2} parent=99 // pred_check_branch
          %772 = sbr.rel (%p770) target = $region108
        $region107: #{mfi_model_forward.2} parent=99 // pred_region
          %773 = dma.done [#allocation6], 16
        $region108: #{mfi_model_forward.2} parent=99 // pred_fallthru
          _
        // Predicated region
        $region109: #{mfi_model_forward.2} parent=99 // pred_check
          %p774 = pneg %p224
        $region110: #{mfi_model_forward.2} parent=99 // pred_check_branch
          %776 = sbr.rel (%p774) target = $region112
        $region111: #{mfi_model_forward.2} parent=99 // pred_region
          %777 = dma.done [#allocation6], 16
        $region112: #{mfi_model_forward.2} parent=99 // pred_fallthru
          _
        // Predicated region
        $region113: #{mfi_model_forward.2} parent=99 // pred_check
          %p778 = pneg %p266
        $region114: #{mfi_model_forward.2} parent=99 // pred_check_branch
          %780 = sbr.rel (%p778) target = $region116
        $region115: #{mfi_model_forward.2} parent=99 // pred_region
          %781 = dma.done [#allocation9], 16
        $region116: #{mfi_model_forward.2} parent=99 // pred_fallthru
          _
        // Predicated region
        $region117: #{mfi_model_forward.2} parent=99 // pred_check
          %p782 = pneg %p308
        $region118: #{mfi_model_forward.2} parent=99 // pred_check_branch
          %784 = sbr.rel (%p782) target = $region120
        $region119: #{mfi_model_forward.2} parent=99 // pred_region
          %785 = dma.done [#allocation9], 16
        $region120: #{mfi_model_forward.2} parent=99 // pred_fallthru
          _
        // Predicated region
        $region121: #{mfi_model_forward.2} parent=99 // pred_check
          %p786 = pneg %p329
        $region122: #{mfi_model_forward.2} parent=99 // pred_check_branch
          %788 = sbr.rel (%p786) target = $region124
        $region123: #{mfi_model_forward.2} parent=99 // pred_region
          %789 = dma.done [#allocation12], 256
        $region124: #{mfi_model_forward.2} parent=99 // pred_fallthru
          _
        // Predicated region
        $region125: #{mfi_model_forward.2} parent=99 // pred_check
          %p790 = pneg %p350
        $region126: #{mfi_model_forward.2} parent=99 // pred_check_branch
          %792 = sbr.rel (%p790) target = $region128
        $region127: #{mfi_model_forward.2} parent=99 // pred_region
          %793 = dma.done [#allocation12], 16
        $region128: #{mfi_model_forward.2} parent=99 // pred_fallthru
          _
        // Predicated region
        $region129: #{mfi_model_forward.2} parent=99 // pred_check
          %p794 = pneg %p371
        $region130: #{mfi_model_forward.2} parent=99 // pred_check_branch
          %796 = sbr.rel (%p794) target = $region132
        $region131: #{mfi_model_forward.2} parent=99 // pred_region
          %797 = dma.done [#allocation15], 256
        $region132: #{mfi_model_forward.2} parent=99 // pred_fallthru
          _
        // Predicated region
        $region133: #{mfi_model_forward.2} parent=99 // pred_check
          %p798 = pneg %p392
        $region134: #{mfi_model_forward.2} parent=99 // pred_check_branch
          %800 = sbr.rel (%p798) target = $region136
        $region135: #{mfi_model_forward.2} parent=99 // pred_region
          %801 = dma.done [#allocation15], 16
        $region136: #{mfi_model_forward.2} parent=99 // pred_fallthru
          _
        // Predicated region
        $region137: #{mfi_model_forward.2} parent=99 // pred_check
          %p802 = pneg %p434
        $region138: #{mfi_model_forward.2} parent=99 // pred_check_branch
          %804 = sbr.rel (%p802) target = $region140
        $region139: #{mfi_model_forward.2} parent=99 // pred_region
          %805 = dma.done [#allocation18], 16
        $region140: #{mfi_model_forward.2} parent=99 // pred_fallthru
          _
        %p806 = scmp.lt.s32.totalorder %s41, 1
        %s807 = scalar_select %p806, %s41, 1
        %s808 = smul.addr %s807, 8
        %s809 = scalar_lea.vmem %s0, %s808
        %p810 = pneg %p62
        %p811 = pneg %p59
        %p812 = scmp.lt.s32.totalorder %s41, 1
        %s813 = scalar_select %p812, %s41, 1
        %s814 = smul.addr %s813, 8
        %s815 = scalar_lea.vmem %s1, %s814
        %p816 = pneg %p88
        %p817 = pneg %p85
        %p818 = scmp.lt.s32.totalorder %s41, 1
        %s819 = scalar_select %p818, %s41, 1
        %s820 = smul.addr %s819, 8
        %s821 = scalar_lea.vmem %s2, %s820
        %p822 = pneg %p114
        %p823 = pneg %p111
        %p824 = scmp.lt.s32.totalorder %s41, 1
        %s825 = scalar_select %p824, %s41, 1
        %s826 = smul.addr %s825, 8
        %s827 = scalar_lea.vmem %s3, %s826
        %p828 = pneg %p140
        %p829 = pneg %p137
        %p830 = pneg %p161
        %p831 = pneg %p158
        %p832 = pneg %p182
        %p833 = pneg %p179
        %p834 = pneg %p203
        %p835 = pneg %p200
        %p836 = pneg %p224
        %p837 = pneg %p221
        %p838 = pneg %p245
        %p839 = pneg %p242
        %p840 = pneg %p266
        %p841 = pneg %p263
        %p842 = pneg %p287
        %p843 = pneg %p284
        %p844 = pneg %p308
        %p845 = pneg %p305
        %p846 = pneg %p329
        %p847 = pneg %p326
        %p848 = pneg %p350
        %p849 = pneg %p347
        %p850 = pneg %p371
        %p851 = pneg %p368
        %p852 = pneg %p392
        %p853 = pneg %p389
        %p854 = pneg %p413
        %p855 = pneg %p410
        %p856 = pneg %p434
        %p857 = pneg %p431
        %p858 = pneg %p455
        %p859 = pneg %p452
        %p860 = pneg %p476
        %p861 = pneg %p473
        %p862 = pneg %p502
        %p863 = pneg %p499
        %p864 = scmp.lt.s32.totalorder %s41, 1
        %s865 = scalar_select %p864, %s41, 1
        %s866 = smul.addr %s865, 8
        %s867 = scalar_lea.vmem %s20, %s866
        %p868 = pneg %p528
        %p869 = pneg %p525
        %p870 = scmp.lt.s32.totalorder %s41, 1
        %s871 = scalar_select %p870, %s41, 1
        %s872 = smul.addr %s871, 8
        %s873 = scalar_lea.vmem %s21, %s872
        %p874 = pneg %p554
        %p875 = pneg %p551
        %p876 = scmp.lt.s32.totalorder %s41, 1
        %s877 = scalar_select %p876, %s41, 1
        %s878 = smul.addr %s877, 8
        %s879 = scalar_lea.vmem %s22, %s878
        %p880 = pneg %p580
        %p881 = pneg %p577
        %p882 = scmp.lt.s32.totalorder %s41, 1
        %s883 = scalar_select %p882, %s41, 1
        %s884 = smul.addr %s883, 8
        %s885 = scalar_lea.vmem %s23, %s884
        %p886 = scmp.lt.s32.totalorder %s41, 1
        %s887 = scalar_select %p886, %s41, 1
        %s888 = smul.addr %s887, 8
        %s889 = scalar_lea.vmem %s0, %s888
        %p890 = scmp.lt.s32.totalorder %s41, 1
        %s891 = scalar_select %p890, %s41, 1
        %s892 = smul.addr %s891, 8
        %s893 = scalar_lea.vmem %s1, %s892
        %p894 = scmp.lt.s32.totalorder %s41, 1
        %s895 = scalar_select %p894, %s41, 1
        %s896 = smul.addr %s895, 8
        %s897 = scalar_lea.vmem %s2, %s896
        %p898 = scmp.lt.s32.totalorder %s41, 1
        %s899 = scalar_select %p898, %s41, 1
        %s900 = smul.addr %s899, 8
        %s901 = scalar_lea.vmem %s3, %s900
        %p902 = scmp.lt.s32.totalorder %s41, 1
        %s903 = scalar_select %p902, %s41, 1
        %s904 = smul.addr %s903, 8
        %s905 = scalar_lea.vmem %s20, %s904
        %p906 = scmp.lt.s32.totalorder %s41, 1
        %s907 = scalar_select %p906, %s41, 1
        %s908 = smul.addr %s907, 8
        %s909 = scalar_lea.vmem %s21, %s908
        %p910 = scmp.lt.s32.totalorder %s41, 1
        %s911 = scalar_select %p910, %s41, 1
        %s912 = smul.addr %s911, 8
        %s913 = scalar_lea.vmem %s22, %s912
        %p914 = scmp.lt.s32.totalorder %s41, 1
        %s915 = scalar_select %p914, %s41, 1
        %s916 = smul.addr %s915, 8
        %s917 = scalar_lea.vmem %s23, %s916
        %v919 = vld [vmem:[%s901] sm:$0xff]
        %v920 = vld [vmem:[#allocation3] sm:$0x1]
        %v921 = vld [vmem:[#allocation5] sm:$0x1]
        %vm922 = vcmask 261120
        %v923 = vsel %vm922, %v919, 0.0
        %924 = vadd.xlane.f32.xlu0 %v923
        %v925 = vpop.xlane.xlu0 %924
        %v926 = vrcp.pop 32.0
        %v927 = vmul.f32 %v925, %v926
        %v928 = vsub.f32 %v919, %v927
        %v929 = vmul.f32 %v928, %v928
        %v930 = vsel %vm922, %v929, 0.0
        %931 = vadd.xlane.f32.xlu0 %v930
        %v932 = vpop.xlane.xlu0 %931
        %v933 = vmul.f32 %v932, %v926
        %v934 = vadd.f32 %v933, 1e-05
        %v935 = vrsqrt.pop %v934
        %v936 = vmul.f32 %v928, %v935
        %v938 = vlaneseq
        %v939 = vshrl.u32 %v938, 7
        %v940 = vsub.s32 0, %v939
        %v941 = vrot.slane %v920, %v940
        %v943 = vmul.f32 %v936, %v941
        %v945 = vlaneseq
        %v946 = vshrl.u32 %v945, 7
        %v947 = vsub.s32 0, %v946
        %v948 = vrot.slane %v921, %v947
        %v950 = vadd.f32 %v943, %v948
        %v951 = vpack.c.bf16 %v950, %v950
        %v952 = vld [vmem:[%s6] sm:$0xf]
        %v953 = vld [vmem:[%s6 + $0x4] sm:$0xf]
        %v954 = vld [vmem:[%s6 + $0x8] sm:$0xf]
        %v955 = vld [vmem:[%s6 + $0xc] sm:$0xf]
        %v956 = vld [vmem:[#allocation7] sm:$0x1]
        %v958 = vlaneseq
        %v959 = vshrl.u32 %v958, 7
        %v960 = vsub.s32 0, %v959
        %v961 = vrot.slane %v956, %v960
        %v967 = vunpack.c.l.b16 %v952
        %v968 = vunpack.c.l.b16 %v953
        %v969 = vunpack.c.l.b16 %v954
        %v970 = vunpack.c.l.b16 %v955
        %v971 = vpack.c.b16 %v968, %v967
        %v972 = vpack.c.b16 %v970, %v969
        %v976 = vsel %vm922, %v951, 0
        %978 = vmatprep.subr.bf16.mxu0 0
        %979 = vmatpush1.bf16.msra.mxu0 %v971
        %980 = vmatprep.subr.bf16.mxu0 0
        %981 = vmatpush1.bf16.msra.mxu0 %v972
        %982 = vmatprep.subr.bf16.mxu0 0
        %983 = vmatpush1.bf16.msra.mxu0 0
        %984 = vmatprep.subr.bf16.mxu0 0
        %985 = vmatpush1.bf16.msra.mxu0 0
        %986 = vmatprep.subr.bf16.mxu0 0
        %987 = vmatpush1.bf16.msra.mxu0 0
        %988 = vmatprep.subr.bf16.mxu0 0
        %989 = vmatpush1.bf16.msra.mxu0 0
        %990 = vmatprep.subr.bf16.mxu0 0
        %991 = vmatpush1.bf16.msra.mxu0 0
        %992 = vmatprep.subr.bf16.mxu0 0
        %993 = vmatpush1.bf16.msra.mxu0 0
        %994 = vmatprep.subr.bf16.mxu0 0
        %995 = vmatpush1.bf16.msra.mxu0 0
        %996 = vmatprep.subr.bf16.mxu0 0
        %997 = vmatpush1.bf16.msra.mxu0 0
        %998 = vmatprep.subr.bf16.mxu0 0
        %999 = vmatpush1.bf16.msra.mxu0 0
        %1000 = vmatprep.subr.bf16.mxu0 0
        %1001 = vmatpush1.bf16.msra.mxu0 0
        %1002 = vmatprep.subr.bf16.mxu0 0
        %1003 = vmatpush1.bf16.msra.mxu0 0
        %1004 = vmatprep.subr.bf16.mxu0 0
        %1005 = vmatpush1.bf16.msra.mxu0 0
        %1006 = vmatprep.subr.bf16.mxu0 0
        %1007 = vmatpush1.bf16.msra.mxu0 0
        %1008 = vmatprep.subr.bf16.mxu0 0
        %1009 = vmatpush1.bf16.msra.mxu0 0
        %1010 = vmatprep.mubr.bf16.mxu0 0
        %1011 = vmatmul.mubr.bf16.gmra.mrb[0].mxu0 %v976
        %v1012 = vpop.f32.mrb[0].mxu0
        %v1013 = vadd.f32 %v961, %v1012
        %v1014 = vpop.f32.mrb[0].mxu0
        %v1015 = vpop.f32.mrb[0].mxu0
        %v1016 = vpop.f32.mrb[0].mxu0
        %1017 = vdwg.mxu0
        %v1018 = vld [vmem:[%s8] sm:$0xf]
        %v1019 = vld [vmem:[%s8 + $0x4] sm:$0xf]
        %v1020 = vld [vmem:[%s8 + $0x8] sm:$0xf]
        %v1021 = vld [vmem:[%s8 + $0xc] sm:$0xf]
        %v1022 = vld [vmem:[#allocation8] sm:$0x1]
        %v1024 = vlaneseq
        %v1025 = vshrl.u32 %v1024, 7
        %v1026 = vsub.s32 0, %v1025
        %v1027 = vrot.slane %v1022, %v1026
        %v1033 = vunpack.c.l.b16 %v1018
        %v1034 = vunpack.c.l.b16 %v1019
        %v1035 = vunpack.c.l.b16 %v1020
        %v1036 = vunpack.c.l.b16 %v1021
        %v1037 = vpack.c.b16 %v1034, %v1033
        %v1038 = vpack.c.b16 %v1036, %v1035
        %1041 = vmatprep.subr.bf16.mxu0 0
        %1042 = vmatpush1.bf16.msra.mxu0 %v1037
        %1043 = vmatprep.subr.bf16.mxu0 0
        %1044 = vmatpush1.bf16.msra.mxu0 %v1038
        %1045 = vmatprep.subr.bf16.mxu0 0
        %1046 = vmatpush1.bf16.msra.mxu0 0
        %1047 = vmatprep.subr.bf16.mxu0 0
        %1048 = vmatpush1.bf16.msra.mxu0 0
        %1049 = vmatprep.subr.bf16.mxu0 0
        %1050 = vmatpush1.bf16.msra.mxu0 0
        %1051 = vmatprep.subr.bf16.mxu0 0
        %1052 = vmatpush1.bf16.msra.mxu0 0
        %1053 = vmatprep.subr.bf16.mxu0 0
        %1054 = vmatpush1.bf16.msra.mxu0 0
        %1055 = vmatprep.subr.bf16.mxu0 0
        %1056 = vmatpush1.bf16.msra.mxu0 0
        %1057 = vmatprep.subr.bf16.mxu0 0
        %1058 = vmatpush1.bf16.msra.mxu0 0
        %1059 = vmatprep.subr.bf16.mxu0 0
        %1060 = vmatpush1.bf16.msra.mxu0 0
        %1061 = vmatprep.subr.bf16.mxu0 0
        %1062 = vmatpush1.bf16.msra.mxu0 0
        %1063 = vmatprep.subr.bf16.mxu0 0
        %1064 = vmatpush1.bf16.msra.mxu0 0
        %1065 = vmatprep.subr.bf16.mxu0 0
        %1066 = vmatpush1.bf16.msra.mxu0 0
        %1067 = vmatprep.subr.bf16.mxu0 0
        %1068 = vmatpush1.bf16.msra.mxu0 0
        %1069 = vmatprep.subr.bf16.mxu0 0
        %1070 = vmatpush1.bf16.msra.mxu0 0
        %1071 = vmatprep.subr.bf16.mxu0 0
        %1072 = vmatpush1.bf16.msra.mxu0 0
        %1073 = vmatprep.mubr.bf16.mxu0 0
        %1074 = vmatmul.mubr.bf16.gmra.mrb[0].mxu0 %v976
        %v1075 = vpop.f32.mrb[0].mxu0
        %v1076 = vadd.f32 %v1027, %v1075
        %v1077 = vpop.f32.mrb[0].mxu0
        %v1078 = vpop.f32.mrb[0].mxu0
        %v1079 = vpop.f32.mrb[0].mxu0
        %1080 = vdwg.mxu0
        %v1081 = vld [vmem:[%s10] sm:$0xf]
        %v1082 = vld [vmem:[%s10 + $0x4] sm:$0xf]
        %v1083 = vld [vmem:[%s10 + $0x8] sm:$0xf]
        %v1084 = vld [vmem:[%s10 + $0xc] sm:$0xf]
        %v1085 = vld [vmem:[#allocation10] sm:$0x1]
        %v1087 = vlaneseq
        %v1088 = vshrl.u32 %v1087, 7
        %v1089 = vsub.s32 0, %v1088
        %v1090 = vrot.slane %v1085, %v1089
        %v1096 = vunpack.c.l.b16 %v1081
        %v1097 = vunpack.c.l.b16 %v1082
        %v1098 = vunpack.c.l.b16 %v1083
        %v1099 = vunpack.c.l.b16 %v1084
        %v1100 = vpack.c.b16 %v1097, %v1096
        %v1101 = vpack.c.b16 %v1099, %v1098
        %1104 = vmatprep.subr.bf16.mxu0 0
        %1105 = vmatpush1.bf16.msra.mxu0 %v1100
        %1106 = vmatprep.subr.bf16.mxu0 0
        %1107 = vmatpush1.bf16.msra.mxu0 %v1101
        %1108 = vmatprep.subr.bf16.mxu0 0
        %1109 = vmatpush1.bf16.msra.mxu0 0
        %1110 = vmatprep.subr.bf16.mxu0 0
        %1111 = vmatpush1.bf16.msra.mxu0 0
        %1112 = vmatprep.subr.bf16.mxu0 0
        %1113 = vmatpush1.bf16.msra.mxu0 0
        %1114 = vmatprep.subr.bf16.mxu0 0
        %1115 = vmatpush1.bf16.msra.mxu0 0
        %1116 = vmatprep.subr.bf16.mxu0 0
        %1117 = vmatpush1.bf16.msra.mxu0 0
        %1118 = vmatprep.subr.bf16.mxu0 0
        %1119 = vmatpush1.bf16.msra.mxu0 0
        %1120 = vmatprep.subr.bf16.mxu0 0
        %1121 = vmatpush1.bf16.msra.mxu0 0
        %1122 = vmatprep.subr.bf16.mxu0 0
        %1123 = vmatpush1.bf16.msra.mxu0 0
        %1124 = vmatprep.subr.bf16.mxu0 0
        %1125 = vmatpush1.bf16.msra.mxu0 0
        %1126 = vmatprep.subr.bf16.mxu0 0
        %1127 = vmatpush1.bf16.msra.mxu0 0
        %1128 = vmatprep.subr.bf16.mxu0 0
        %1129 = vmatpush1.bf16.msra.mxu0 0
        %1130 = vmatprep.subr.bf16.mxu0 0
        %1131 = vmatpush1.bf16.msra.mxu0 0
        %1132 = vmatprep.subr.bf16.mxu0 0
        %1133 = vmatpush1.bf16.msra.mxu0 0
        %1134 = vmatprep.subr.bf16.mxu0 0
        %1135 = vmatpush1.bf16.msra.mxu0 0
        %1136 = vmatprep.mubr.bf16.mxu0 0
        %1137 = vmatmul.mubr.bf16.gmra.mrb[0].mxu0 %v976
        %v1138 = vpop.f32.mrb[0].mxu0
        %v1139 = vadd.f32 %v1090, %v1138
        %v1140 = vpop.f32.mrb[0].mxu0
        %v1141 = vpop.f32.mrb[0].mxu0
        %v1142 = vpop.f32.mrb[0].mxu0
        %1143 = vdwg.mxu0
        %v1144 = vmul.f32 %v1013, 0.7
        %v1145 = vld [vmem:[%s889] sm:$0xff]
        %v1146 = vmul.f32 %v1145, 0.3
        %v1147 = vadd.f32 %v1144, %v1146
        %v1148 = vmul.f32 %v1076, 0.7
        %v1149 = vld [vmem:[%s893] sm:$0xff]
        %v1150 = vmul.f32 %v1149, 0.3
        %v1151 = vadd.f32 %v1148, %v1150
        %v1152 = vld [vmem:[%s897] sm:$0xff]
        %v1153 = vmul.f32 %v1152, 0.3
        %v1154 = vmul.f32 %v1139, 0.7
        %v1155 = vadd.f32 %v1153, %v1154
        %1156 = vst.msk [vmem:[%s909] sm:$0xff] %vm922, %v1147
        %1157 = vst.msk [vmem:[%s913] sm:$0xff] %vm922, %v1151
        %1158 = vst.msk [vmem:[%s917] sm:$0xff] %vm922, %v1155
        %v1159 = vmul.f32 %v1147, 0.35355338
        %v1160 = vpack.c.bf16 %v1159, %v1159
        %v1161 = vpack.c.bf16 %v1151, %v1151
        %v1162 = vpack.c.bf16 %v1155, %v1155
        %vm1163 = vcmask 64512
        %v1165 = vsel %vm1163, %v1160, 0
        %v1168 = vsel %vm1163, %v1161, 0
        %1170 = vmatprep.subr.bf16.mxu0 0
        %1171 = vmatpush1.bf16.xpose.msra.mxu0 %v1168
        %1172 = vmatprep.subr.bf16.mxu0 0
        %1173 = vmatpush1.bf16.xpose.msra.mxu0 0
        %1174 = vmatprep.subr.bf16.mxu0 0
        %1175 = vmatpush1.bf16.xpose.msra.mxu0 0
        %1176 = vmatprep.subr.bf16.mxu0 0
        %1177 = vmatpush1.bf16.xpose.msra.mxu0 0
        %1178 = vmatprep.subr.bf16.mxu0 0
        %1179 = vmatpush1.bf16.xpose.msra.mxu0 0
        %1180 = vmatprep.subr.bf16.mxu0 0
        %1181 = vmatpush1.bf16.xpose.msra.mxu0 0
        %1182 = vmatprep.subr.bf16.mxu0 0
        %1183 = vmatpush1.bf16.xpose.msra.mxu0 0
        %1184 = vmatprep.subr.bf16.mxu0 0
        %1185 = vmatpush1.bf16.xpose.msra.mxu0 0
        %1186 = vmatprep.subr.bf16.mxu0 0
        %1187 = vmatpush1.bf16.xpose.msra.mxu0 0
        %1188 = vmatprep.subr.bf16.mxu0 0
        %1189 = vmatpush1.bf16.xpose.msra.mxu0 0
        %1190 = vmatprep.subr.bf16.mxu0 0
        %1191 = vmatpush1.bf16.xpose.msra.mxu0 0
        %1192 = vmatprep.subr.bf16.mxu0 0
        %1193 = vmatpush1.bf16.xpose.msra.mxu0 0
        %1194 = vmatprep.subr.bf16.mxu0 0
        %1195 = vmatpush1.bf16.xpose.msra.mxu0 0
        %1196 = vmatprep.subr.bf16.mxu0 0
        %1197 = vmatpush1.bf16.xpose.msra.mxu0 0
        %1198 = vmatprep.subr.bf16.mxu0 0
        %1199 = vmatpush1.bf16.xpose.msra.mxu0 0
        %1200 = vmatprep.subr.bf16.mxu0 0
        %1201 = vmatpush1.bf16.xpose.msra.mxu0 0
        %1202 = vmatprep.mubr.bf16.mxu0 0
        %1203 = vmatmul.mubr.bf16.gmra.mrb[0].mxu0 %v1165
        %v1204 = vpop.f32.mrb[0].mxu0
        %v1205 = vadd.f32 0.0, %v1204
        %v1206 = vpop.f32.mrb[0].mxu0
        %v1207 = vpop.f32.mrb[0].mxu0
        %v1208 = vpop.f32.mrb[0].mxu0
        %1209 = vdwg.mxu0
        %v1210 = vsel %vm1163, %v1205, -inf
        %1211 = vmax.xlane.f32.xlu0 %v1210
        %v1212 = vpop.xlane.xlu0 %1211
        %v1213 = vsub.f32 %v1205, %v1212
        %v1214 = vmul.f32 %v1213, 1.442695
        %v1215 = vpow.pop %v1214
        %v1216 = vsel %vm1163, %v1215, 0.0
        %1217 = vadd.xlane.f32.xlu0 %v1216
        %v1218 = vpop.xlane.xlu0 %1217
        %v1219 = vrcp.pop %v1218
        %v1220 = vmul.f32 %v1215, %v1219
        %v1221 = vpack.c.bf16 %v1220, %v1220
        %v1223 = vsel %vm1163, %v1221, 0
        %vm1225 = vcmask 1043456
        %v1227 = vsel %vm1225, %v1162, 0
        %1229 = vmatprep.subr.bf16.mxu0 0
        %1230 = vmatpush1.bf16.msra.mxu0 %v1227
        %1231 = vmatprep.subr.bf16.mxu0 0
        %1232 = vmatpush1.bf16.msra.mxu0 0
        %1233 = vmatprep.subr.bf16.mxu0 0
        %1234 = vmatpush1.bf16.msra.mxu0 0
        %1235 = vmatprep.subr.bf16.mxu0 0
        %1236 = vmatpush1.bf16.msra.mxu0 0
        %1237 = vmatprep.subr.bf16.mxu0 0
        %1238 = vmatpush1.bf16.msra.mxu0 0
        %1239 = vmatprep.subr.bf16.mxu0 0
        %1240 = vmatpush1.bf16.msra.mxu0 0
        %1241 = vmatprep.subr.bf16.mxu0 0
        %1242 = vmatpush1.bf16.msra.mxu0 0
        %1243 = vmatprep.subr.bf16.mxu0 0
        %1244 = vmatpush1.bf16.msra.mxu0 0
        %1245 = vmatprep.subr.bf16.mxu0 0
        %1246 = vmatpush1.bf16.msra.mxu0 0
        %1247 = vmatprep.subr.bf16.mxu0 0
        %1248 = vmatpush1.bf16.msra.mxu0 0
        %1249 = vmatprep.subr.bf16.mxu0 0
        %1250 = vmatpush1.bf16.msra.mxu0 0
        %1251 = vmatprep.subr.bf16.mxu0 0
        %1252 = vmatpush1.bf16.msra.mxu0 0
        %1253 = vmatprep.subr.bf16.mxu0 0
        %1254 = vmatpush1.bf16.msra.mxu0 0
        %1255 = vmatprep.subr.bf16.mxu0 0
        %1256 = vmatpush1.bf16.msra.mxu0 0
        %1257 = vmatprep.subr.bf16.mxu0 0
        %1258 = vmatpush1.bf16.msra.mxu0 0
        %1259 = vmatprep.subr.bf16.mxu0 0
        %1260 = vmatpush1.bf16.msra.mxu0 0
        %1261 = vmatprep.mubr.bf16.mxu0 0
        %1262 = vmatmul.mubr.bf16.gmra.mrb[0].mxu0 %v1223
        %v1263 = vpop.f32.mrb[0].mxu0
        %v1264 = vadd.f32 0.0, %v1263
        %v1265 = vpop.f32.mrb[0].mxu0
        %v1266 = vpop.f32.mrb[0].mxu0
        %v1267 = vpop.f32.mrb[0].mxu0
        %1268 = vdwg.mxu0
        %1269 = vst.msk [vmem:[#allocation2] sm:$0xff] %vm1163, %v1264
        %1271 = vrot.lane.b32.xlu0 %v1160, 120
        %v1272 = vpop.permute.xlu0 %1271
        %1274 = vrot.lane.b32.xlu0 %v1161, 120
        %v1275 = vpop.permute.xlu0 %1274
        %v1277 = vsel %vm1163, %v1272, 0
        %v1280 = vsel %vm1163, %v1275, 0
        %1282 = vmatprep.subr.bf16.mxu0 0
        %1283 = vmatpush1.bf16.xpose.msra.mxu0 %v1280
        %1284 = vmatprep.subr.bf16.mxu0 0
        %1285 = vmatpush1.bf16.xpose.msra.mxu0 0
        %1286 = vmatprep.subr.bf16.mxu0 0
        %1287 = vmatpush1.bf16.xpose.msra.mxu0 0
        %1288 = vmatprep.subr.bf16.mxu0 0
        %1289 = vmatpush1.bf16.xpose.msra.mxu0 0
        %1290 = vmatprep.subr.bf16.mxu0 0
        %1291 = vmatpush1.bf16.xpose.msra.mxu0 0
        %1292 = vmatprep.subr.bf16.mxu0 0
        %1293 = vmatpush1.bf16.xpose.msra.mxu0 0
        %1294 = vmatprep.subr.bf16.mxu0 0
        %1295 = vmatpush1.bf16.xpose.msra.mxu0 0
        %1296 = vmatprep.subr.bf16.mxu0 0
        %1297 = vmatpush1.bf16.xpose.msra.mxu0 0
        %1298 = vmatprep.subr.bf16.mxu0 0
        %1299 = vmatpush1.bf16.xpose.msra.mxu0 0
        %1300 = vmatprep.subr.bf16.mxu0 0
        %1301 = vmatpush1.bf16.xpose.msra.mxu0 0
        %1302 = vmatprep.subr.bf16.mxu0 0
        %1303 = vmatpush1.bf16.xpose.msra.mxu0 0
        %1304 = vmatprep.subr.bf16.mxu0 0
        %1305 = vmatpush1.bf16.xpose.msra.mxu0 0
        %1306 = vmatprep.subr.bf16.mxu0 0
        %1307 = vmatpush1.bf16.xpose.msra.mxu0 0
        %1308 = vmatprep.subr.bf16.mxu0 0
        %1309 = vmatpush1.bf16.xpose.msra.mxu0 0
        %1310 = vmatprep.subr.bf16.mxu0 0
        %1311 = vmatpush1.bf16.xpose.msra.mxu0 0
        %1312 = vmatprep.subr.bf16.mxu0 0
        %1313 = vmatpush1.bf16.xpose.msra.mxu0 0
        %1314 = vmatprep.mubr.bf16.mxu0 0
        %1315 = vmatmul.mubr.bf16.gmra.mrb[0].mxu0 %v1277
        %v1316 = vpop.f32.mrb[0].mxu0
        %v1317 = vadd.f32 0.0, %v1316
        %v1318 = vpop.f32.mrb[0].mxu0
        %v1319 = vpop.f32.mrb[0].mxu0
        %v1320 = vpop.f32.mrb[0].mxu0
        %1321 = vdwg.mxu0
        %v1322 = vsel %vm1163, %v1317, -inf
        %1323 = vmax.xlane.f32.xlu0 %v1322
        %v1324 = vpop.xlane.xlu0 %1323
        %v1325 = vsub.f32 %v1317, %v1324
        %v1326 = vmul.f32 %v1325, 1.442695
        %v1327 = vpow.pop %v1326
        %v1328 = vsel %vm1163, %v1327, 0.0
        %1329 = vadd.xlane.f32.xlu0 %v1328
        %v1330 = vpop.xlane.xlu0 %1329
        %v1331 = vrcp.pop %v1330
        %v1332 = vmul.f32 %v1327, %v1331
        %v1333 = vpack.c.bf16 %v1332, %v1332
        %1335 = vrot.lane.b32.xlu0 %v1162, 120
        %v1336 = vpop.permute.xlu0 %1335
        %v1338 = vsel %vm1163, %v1333, 0
        %v1341 = vsel %vm1225, %v1336, 0
        %1343 = vmatprep.subr.bf16.mxu0 0
        %1344 = vmatpush1.bf16.msra.mxu0 %v1341
        %1345 = vmatprep.subr.bf16.mxu0 0
        %1346 = vmatpush1.bf16.msra.mxu0 0
        %1347 = vmatprep.subr.bf16.mxu0 0
        %1348 = vmatpush1.bf16.msra.mxu0 0
        %1349 = vmatprep.subr.bf16.mxu0 0
        %1350 = vmatpush1.bf16.msra.mxu0 0
        %1351 = vmatprep.subr.bf16.mxu0 0
        %1352 = vmatpush1.bf16.msra.mxu0 0
        %1353 = vmatprep.subr.bf16.mxu0 0
        %1354 = vmatpush1.bf16.msra.mxu0 0
        %1355 = vmatprep.subr.bf16.mxu0 0
        %1356 = vmatpush1.bf16.msra.mxu0 0
        %1357 = vmatprep.subr.bf16.mxu0 0
        %1358 = vmatpush1.bf16.msra.mxu0 0
        %1359 = vmatprep.subr.bf16.mxu0 0
        %1360 = vmatpush1.bf16.msra.mxu0 0
        %1361 = vmatprep.subr.bf16.mxu0 0
        %1362 = vmatpush1.bf16.msra.mxu0 0
        %1363 = vmatprep.subr.bf16.mxu0 0
        %1364 = vmatpush1.bf16.msra.mxu0 0
        %1365 = vmatprep.subr.bf16.mxu0 0
        %1366 = vmatpush1.bf16.msra.mxu0 0
        %1367 = vmatprep.subr.bf16.mxu0 0
        %1368 = vmatpush1.bf16.msra.mxu0 0
        %1369 = vmatprep.subr.bf16.mxu0 0
        %1370 = vmatpush1.bf16.msra.mxu0 0
        %1371 = vmatprep.subr.bf16.mxu0 0
        %1372 = vmatpush1.bf16.msra.mxu0 0
        %1373 = vmatprep.subr.bf16.mxu0 0
        %1374 = vmatpush1.bf16.msra.mxu0 0
        %1375 = vmatprep.mubr.bf16.mxu0 0
        %1376 = vmatmul.mubr.bf16.gmra.mrb[0].mxu0 %v1338
        %v1377 = vpop.f32.mrb[0].mxu0
        %v1378 = vadd.f32 0.0, %v1377
        %v1379 = vpop.f32.mrb[0].mxu0
        %v1380 = vpop.f32.mrb[0].mxu0
        %v1381 = vpop.f32.mrb[0].mxu0
        %1382 = vdwg.mxu0
        %1384 = vrot.lane.b32.xlu0 %v1378, 8
        %v1385 = vpop.permute.xlu0 %1384
        %vm1387 = vcmask 130112
        %1388 = vst.msk [vmem:[#allocation2] sm:$0xff] %vm1387, %v1385
        %1389 = vrot.lane.b32.xlu0 %v1160, 112
        %v1390 = vpop.permute.xlu0 %1389
        %1391 = vrot.lane.b32.xlu0 %v1161, 112
        %v1392 = vpop.permute.xlu0 %1391
        %v1394 = vsel %vm1163, %v1390, 0
        %v1397 = vsel %vm1163, %v1392, 0
        %1399 = vmatprep.subr.bf16.mxu0 0
        %1400 = vmatpush1.bf16.xpose.msra.mxu0 %v1397
        %1401 = vmatprep.subr.bf16.mxu0 0
        %1402 = vmatpush1.bf16.xpose.msra.mxu0 0
        %1403 = vmatprep.subr.bf16.mxu0 0
        %1404 = vmatpush1.bf16.xpose.msra.mxu0 0
        %1405 = vmatprep.subr.bf16.mxu0 0
        %1406 = vmatpush1.bf16.xpose.msra.mxu0 0
        %1407 = vmatprep.subr.bf16.mxu0 0
        %1408 = vmatpush1.bf16.xpose.msra.mxu0 0
        %1409 = vmatprep.subr.bf16.mxu0 0
        %1410 = vmatpush1.bf16.xpose.msra.mxu0 0
        %1411 = vmatprep.subr.bf16.mxu0 0
        %1412 = vmatpush1.bf16.xpose.msra.mxu0 0
        %1413 = vmatprep.subr.bf16.mxu0 0
        %1414 = vmatpush1.bf16.xpose.msra.mxu0 0
        %1415 = vmatprep.subr.bf16.mxu0 0
        %1416 = vmatpush1.bf16.xpose.msra.mxu0 0
        %1417 = vmatprep.subr.bf16.mxu0 0
        %1418 = vmatpush1.bf16.xpose.msra.mxu0 0
        %1419 = vmatprep.subr.bf16.mxu0 0
        %1420 = vmatpush1.bf16.xpose.msra.mxu0 0
        %1421 = vmatprep.subr.bf16.mxu0 0
        %1422 = vmatpush1.bf16.xpose.msra.mxu0 0
        %1423 = vmatprep.subr.bf16.mxu0 0
        %1424 = vmatpush1.bf16.xpose.msra.mxu0 0
        %1425 = vmatprep.subr.bf16.mxu0 0
        %1426 = vmatpush1.bf16.xpose.msra.mxu0 0
        %1427 = vmatprep.subr.bf16.mxu0 0
        %1428 = vmatpush1.bf16.xpose.msra.mxu0 0
        %1429 = vmatprep.subr.bf16.mxu0 0
        %1430 = vmatpush1.bf16.xpose.msra.mxu0 0
        %1431 = vmatprep.mubr.bf16.mxu0 0
        %1432 = vmatmul.mubr.bf16.gmra.mrb[0].mxu0 %v1394
        %v1433 = vpop.f32.mrb[0].mxu0
        %v1434 = vadd.f32 0.0, %v1433
        %v1435 = vpop.f32.mrb[0].mxu0
        %v1436 = vpop.f32.mrb[0].mxu0
        %v1437 = vpop.f32.mrb[0].mxu0
        %1438 = vdwg.mxu0
        %v1439 = vsel %vm1163, %v1434, -inf
        %1440 = vmax.xlane.f32.xlu0 %v1439
        %v1441 = vpop.xlane.xlu0 %1440
        %v1442 = vsub.f32 %v1434, %v1441
        %v1443 = vmul.f32 %v1442, 1.442695
        %v1444 = vpow.pop %v1443
        %v1445 = vsel %vm1163, %v1444, 0.0
        %1446 = vadd.xlane.f32.xlu0 %v1445
        %v1447 = vpop.xlane.xlu0 %1446
        %v1448 = vrcp.pop %v1447
        %v1449 = vmul.f32 %v1444, %v1448
        %v1450 = vpack.c.bf16 %v1449, %v1449
        %1451 = vrot.lane.b32.xlu0 %v1162, 112
        %v1452 = vpop.permute.xlu0 %1451
        %v1454 = vsel %vm1163, %v1450, 0
        %v1457 = vsel %vm1225, %v1452, 0
        %1459 = vmatprep.subr.bf16.mxu0 0
        %1460 = vmatpush1.bf16.msra.mxu0 %v1457
        %1461 = vmatprep.subr.bf16.mxu0 0
        %1462 = vmatpush1.bf16.msra.mxu0 0
        %1463 = vmatprep.subr.bf16.mxu0 0
        %1464 = vmatpush1.bf16.msra.mxu0 0
        %1465 = vmatprep.subr.bf16.mxu0 0
        %1466 = vmatpush1.bf16.msra.mxu0 0
        %1467 = vmatprep.subr.bf16.mxu0 0
        %1468 = vmatpush1.bf16.msra.mxu0 0
        %1469 = vmatprep.subr.bf16.mxu0 0
        %1470 = vmatpush1.bf16.msra.mxu0 0
        %1471 = vmatprep.subr.bf16.mxu0 0
        %1472 = vmatpush1.bf16.msra.mxu0 0
        %1473 = vmatprep.subr.bf16.mxu0 0
        %1474 = vmatpush1.bf16.msra.mxu0 0
        %1475 = vmatprep.subr.bf16.mxu0 0
        %1476 = vmatpush1.bf16.msra.mxu0 0
        %1477 = vmatprep.subr.bf16.mxu0 0
        %1478 = vmatpush1.bf16.msra.mxu0 0
        %1479 = vmatprep.subr.bf16.mxu0 0
        %1480 = vmatpush1.bf16.msra.mxu0 0
        %1481 = vmatprep.subr.bf16.mxu0 0
        %1482 = vmatpush1.bf16.msra.mxu0 0
        %1483 = vmatprep.subr.bf16.mxu0 0
        %1484 = vmatpush1.bf16.msra.mxu0 0
        %1485 = vmatprep.subr.bf16.mxu0 0
        %1486 = vmatpush1.bf16.msra.mxu0 0
        %1487 = vmatprep.subr.bf16.mxu0 0
        %1488 = vmatpush1.bf16.msra.mxu0 0
        %1489 = vmatprep.subr.bf16.mxu0 0
        %1490 = vmatpush1.bf16.msra.mxu0 0
        %1491 = vmatprep.mubr.bf16.mxu0 0
        %1492 = vmatmul.mubr.bf16.gmra.mrb[0].mxu0 %v1454
        %v1493 = vpop.f32.mrb[0].mxu0
        %v1494 = vadd.f32 0.0, %v1493
        %v1495 = vpop.f32.mrb[0].mxu0
        %v1496 = vpop.f32.mrb[0].mxu0
        %v1497 = vpop.f32.mrb[0].mxu0
        %1498 = vdwg.mxu0
        %1500 = vrot.lane.b32.xlu0 %v1494, 16
        %v1501 = vpop.permute.xlu0 %1500
        %vm1503 = vcmask 195712
        %1504 = vst.msk [vmem:[#allocation2] sm:$0xff] %vm1503, %v1501
        %1505 = vrot.lane.b32.xlu0 %v1160, 104
        %v1506 = vpop.permute.xlu0 %1505
        %1507 = vrot.lane.b32.xlu0 %v1161, 104
        %v1508 = vpop.permute.xlu0 %1507
        %v1510 = vsel %vm1163, %v1506, 0
        %v1513 = vsel %vm1163, %v1508, 0
        %1515 = vmatprep.subr.bf16.mxu0 0
        %1516 = vmatpush1.bf16.xpose.msra.mxu0 %v1513
        %1517 = vmatprep.subr.bf16.mxu0 0
        %1518 = vmatpush1.bf16.xpose.msra.mxu0 0
        %1519 = vmatprep.subr.bf16.mxu0 0
        %1520 = vmatpush1.bf16.xpose.msra.mxu0 0
        %1521 = vmatprep.subr.bf16.mxu0 0
        %1522 = vmatpush1.bf16.xpose.msra.mxu0 0
        %1523 = vmatprep.subr.bf16.mxu0 0
        %1524 = vmatpush1.bf16.xpose.msra.mxu0 0
        %1525 = vmatprep.subr.bf16.mxu0 0
        %1526 = vmatpush1.bf16.xpose.msra.mxu0 0
        %1527 = vmatprep.subr.bf16.mxu0 0
        %1528 = vmatpush1.bf16.xpose.msra.mxu0 0
        %1529 = vmatprep.subr.bf16.mxu0 0
        %1530 = vmatpush1.bf16.xpose.msra.mxu0 0
        %1531 = vmatprep.subr.bf16.mxu0 0
        %1532 = vmatpush1.bf16.xpose.msra.mxu0 0
        %1533 = vmatprep.subr.bf16.mxu0 0
        %1534 = vmatpush1.bf16.xpose.msra.mxu0 0
        %1535 = vmatprep.subr.bf16.mxu0 0
        %1536 = vmatpush1.bf16.xpose.msra.mxu0 0
        %1537 = vmatprep.subr.bf16.mxu0 0
        %1538 = vmatpush1.bf16.xpose.msra.mxu0 0
        %1539 = vmatprep.subr.bf16.mxu0 0
        %1540 = vmatpush1.bf16.xpose.msra.mxu0 0
        %1541 = vmatprep.subr.bf16.mxu0 0
        %1542 = vmatpush1.bf16.xpose.msra.mxu0 0
        %1543 = vmatprep.subr.bf16.mxu0 0
        %1544 = vmatpush1.bf16.xpose.msra.mxu0 0
        %1545 = vmatprep.subr.bf16.mxu0 0
        %1546 = vmatpush1.bf16.xpose.msra.mxu0 0
        %1547 = vmatprep.mubr.bf16.mxu0 0
        %1548 = vmatmul.mubr.bf16.gmra.mrb[0].mxu0 %v1510
        %v1549 = vpop.f32.mrb[0].mxu0
        %v1550 = vadd.f32 0.0, %v1549
        %v1551 = vpop.f32.mrb[0].mxu0
        %v1552 = vpop.f32.mrb[0].mxu0
        %v1553 = vpop.f32.mrb[0].mxu0
        %1554 = vdwg.mxu0
        %v1555 = vsel %vm1163, %v1550, -inf
        %1556 = vmax.xlane.f32.xlu0 %v1555
        %v1557 = vpop.xlane.xlu0 %1556
        %v1558 = vsub.f32 %v1550, %v1557
        %v1559 = vmul.f32 %v1558, 1.442695
        %v1560 = vpow.pop %v1559
        %v1561 = vsel %vm1163, %v1560, 0.0
        %1562 = vadd.xlane.f32.xlu0 %v1561
        %v1563 = vpop.xlane.xlu0 %1562
        %v1564 = vrcp.pop %v1563
        %v1565 = vmul.f32 %v1560, %v1564
        %v1566 = vpack.c.bf16 %v1565, %v1565
        %1567 = vrot.lane.b32.xlu0 %v1162, 104
        %v1568 = vpop.permute.xlu0 %1567
        %v1570 = vsel %vm1163, %v1566, 0
        %v1573 = vsel %vm1225, %v1568, 0
        %1575 = vmatprep.subr.bf16.mxu0 0
        %1576 = vmatpush1.bf16.msra.mxu0 %v1573
        %1577 = vmatprep.subr.bf16.mxu0 0
        %1578 = vmatpush1.bf16.msra.mxu0 0
        %1579 = vmatprep.subr.bf16.mxu0 0
        %1580 = vmatpush1.bf16.msra.mxu0 0
        %1581 = vmatprep.subr.bf16.mxu0 0
        %1582 = vmatpush1.bf16.msra.mxu0 0
        %1583 = vmatprep.subr.bf16.mxu0 0
        %1584 = vmatpush1.bf16.msra.mxu0 0
        %1585 = vmatprep.subr.bf16.mxu0 0
        %1586 = vmatpush1.bf16.msra.mxu0 0
        %1587 = vmatprep.subr.bf16.mxu0 0
        %1588 = vmatpush1.bf16.msra.mxu0 0
        %1589 = vmatprep.subr.bf16.mxu0 0
        %1590 = vmatpush1.bf16.msra.mxu0 0
        %1591 = vmatprep.subr.bf16.mxu0 0
        %1592 = vmatpush1.bf16.msra.mxu0 0
        %1593 = vmatprep.subr.bf16.mxu0 0
        %1594 = vmatpush1.bf16.msra.mxu0 0
        %1595 = vmatprep.subr.bf16.mxu0 0
        %1596 = vmatpush1.bf16.msra.mxu0 0
        %1597 = vmatprep.subr.bf16.mxu0 0
        %1598 = vmatpush1.bf16.msra.mxu0 0
        %1599 = vmatprep.subr.bf16.mxu0 0
        %1600 = vmatpush1.bf16.msra.mxu0 0
        %1601 = vmatprep.subr.bf16.mxu0 0
        %1602 = vmatpush1.bf16.msra.mxu0 0
        %1603 = vmatprep.subr.bf16.mxu0 0
        %1604 = vmatpush1.bf16.msra.mxu0 0
        %1605 = vmatprep.subr.bf16.mxu0 0
        %1606 = vmatpush1.bf16.msra.mxu0 0
        %1607 = vmatprep.mubr.bf16.mxu0 0
        %1608 = vmatmul.mubr.bf16.gmra.mrb[0].mxu0 %v1570
        %v1609 = vpop.f32.mrb[0].mxu0
        %v1610 = vadd.f32 0.0, %v1609
        %v1611 = vpop.f32.mrb[0].mxu0
        %v1612 = vpop.f32.mrb[0].mxu0
        %v1613 = vpop.f32.mrb[0].mxu0
        %1614 = vdwg.mxu0
        %1616 = vrot.lane.b32.xlu0 %v1610, 24
        %v1617 = vpop.permute.xlu0 %1616
        %vm1619 = vcmask 261312
        %1620 = vst.msk [vmem:[#allocation2] sm:$0xff] %vm1619, %v1617
        %v1621 = vld [vmem:[#allocation2] sm:$0xff]
        %v1622 = vpack.c.bf16 %v1621, %v1621
        %v1623 = vld [vmem:[#allocation11] sm:$0xf]
        %v1624 = vld [vmem:[#allocation11 + $0x4] sm:$0xf]
        %v1625 = vld [vmem:[#allocation11 + $0x8] sm:$0xf]
        %v1626 = vld [vmem:[#allocation11 + $0xc] sm:$0xf]
        %v1627 = vld [vmem:[#allocation13] sm:$0x1]
        %v1629 = vlaneseq
        %v1630 = vshrl.u32 %v1629, 7
        %v1631 = vsub.s32 0, %v1630
        %v1632 = vrot.slane %v1627, %v1631
        %v1638 = vunpack.c.l.b16 %v1623
        %v1639 = vunpack.c.l.b16 %v1624
        %v1640 = vunpack.c.l.b16 %v1625
        %v1641 = vunpack.c.l.b16 %v1626
        %v1642 = vpack.c.b16 %v1639, %v1638
        %v1643 = vpack.c.b16 %v1641, %v1640
        %v1647 = vsel %vm922, %v1622, 0
        %1649 = vmatprep.subr.bf16.mxu0 0
        %1650 = vmatpush1.bf16.msra.mxu0 %v1642
        %1651 = vmatprep.subr.bf16.mxu0 0
        %1652 = vmatpush1.bf16.msra.mxu0 %v1643
        %1653 = vmatprep.subr.bf16.mxu0 0
        %1654 = vmatpush1.bf16.msra.mxu0 0
        %1655 = vmatprep.subr.bf16.mxu0 0
        %1656 = vmatpush1.bf16.msra.mxu0 0
        %1657 = vmatprep.subr.bf16.mxu0 0
        %1658 = vmatpush1.bf16.msra.mxu0 0
        %1659 = vmatprep.subr.bf16.mxu0 0
        %1660 = vmatpush1.bf16.msra.mxu0 0
        %1661 = vmatprep.subr.bf16.mxu0 0
        %1662 = vmatpush1.bf16.msra.mxu0 0
        %1663 = vmatprep.subr.bf16.mxu0 0
        %1664 = vmatpush1.bf16.msra.mxu0 0
        %1665 = vmatprep.subr.bf16.mxu0 0
        %1666 = vmatpush1.bf16.msra.mxu0 0
        %1667 = vmatprep.subr.bf16.mxu0 0
        %1668 = vmatpush1.bf16.msra.mxu0 0
        %1669 = vmatprep.subr.bf16.mxu0 0
        %1670 = vmatpush1.bf16.msra.mxu0 0
        %1671 = vmatprep.subr.bf16.mxu0 0
        %1672 = vmatpush1.bf16.msra.mxu0 0
        %1673 = vmatprep.subr.bf16.mxu0 0
        %1674 = vmatpush1.bf16.msra.mxu0 0
        %1675 = vmatprep.subr.bf16.mxu0 0
        %1676 = vmatpush1.bf16.msra.mxu0 0
        %1677 = vmatprep.subr.bf16.mxu0 0
        %1678 = vmatpush1.bf16.msra.mxu0 0
        %1679 = vmatprep.subr.bf16.mxu0 0
        %1680 = vmatpush1.bf16.msra.mxu0 0
        %1681 = vmatprep.mubr.bf16.mxu0 0
        %1682 = vmatmul.mubr.bf16.gmra.mrb[0].mxu0 %v1647
        %v1683 = vpop.f32.mrb[0].mxu0
        %v1684 = vadd.f32 %v1632, %v1683
        %v1685 = vpop.f32.mrb[0].mxu0
        %v1686 = vpop.f32.mrb[0].mxu0
        %v1687 = vpop.f32.mrb[0].mxu0
        %1688 = vdwg.mxu0
        %v1689 = vadd.f32 %v919, %v1684
        %v1690 = vsel %vm922, %v1689, 0.0
        %1691 = vadd.xlane.f32.xlu0 %v1690
        %v1692 = vpop.xlane.xlu0 %1691
        %v1693 = vmul.f32 %v1692, %v926
        %v1694 = vsub.f32 %v1689, %v1693
        %v1695 = vmul.f32 %v1694, %v1694
        %v1696 = vsel %vm922, %v1695, 0.0
        %1697 = vadd.xlane.f32.xlu0 %v1696
        %v1698 = vpop.xlane.xlu0 %1697
        %v1699 = vmul.f32 %v1698, %v926
        %v1700 = vadd.f32 %v1699, 1e-05
        %v1701 = vrsqrt.pop %v1700
        %v1702 = vmul.f32 %v1694, %v1701
        %v1703 = vmul.f32 %v1702, %v941
        %v1704 = vadd.f32 %v1703, %v948
        %v1705 = vpack.c.bf16 %v1704, %v1704
        %v1706 = vld [vmem:[#allocation14] sm:$0xf]
        %v1707 = vld [vmem:[#allocation14 + $0x4] sm:$0xf]
        %v1708 = vld [vmem:[#allocation14 + $0x8] sm:$0xf]
        %v1709 = vld [vmem:[#allocation14 + $0xc] sm:$0xf]
        %v1710 = vld [vmem:[#allocation16] sm:$0x1]
        %v1712 = vlaneseq
        %v1713 = vshrl.u32 %v1712, 7
        %v1714 = vsub.s32 0, %v1713
        %v1715 = vrot.slane %v1710, %v1714
        %v1721 = vunpack.c.l.b16 %v1706
        %v1722 = vunpack.c.l.b16 %v1707
        %v1723 = vunpack.c.l.b16 %v1708
        %v1724 = vunpack.c.l.b16 %v1709
        %v1725 = vpack.c.b16 %v1722, %v1721
        %v1726 = vpack.c.b16 %v1724, %v1723
        %v1730 = vsel %vm922, %v1705, 0
        %1732 = vmatprep.subr.bf16.mxu0 0
        %1733 = vmatpush1.bf16.msra.mxu0 %v1725
        %1734 = vmatprep.subr.bf16.mxu0 0
        %1735 = vmatpush1.bf16.msra.mxu0 %v1726
        %1736 = vmatprep.subr.bf16.mxu0 0
        %1737 = vmatpush1.bf16.msra.mxu0 0
        %1738 = vmatprep.subr.bf16.mxu0 0
        %1739 = vmatpush1.bf16.msra.mxu0 0
        %1740 = vmatprep.subr.bf16.mxu0 0
        %1741 = vmatpush1.bf16.msra.mxu0 0
        %1742 = vmatprep.subr.bf16.mxu0 0
        %1743 = vmatpush1.bf16.msra.mxu0 0
        %1744 = vmatprep.subr.bf16.mxu0 0
        %1745 = vmatpush1.bf16.msra.mxu0 0
        %1746 = vmatprep.subr.bf16.mxu0 0
        %1747 = vmatpush1.bf16.msra.mxu0 0
        %1748 = vmatprep.subr.bf16.mxu0 0
        %1749 = vmatpush1.bf16.msra.mxu0 0
        %1750 = vmatprep.subr.bf16.mxu0 0
        %1751 = vmatpush1.bf16.msra.mxu0 0
        %1752 = vmatprep.subr.bf16.mxu0 0
        %1753 = vmatpush1.bf16.msra.mxu0 0
        %1754 = vmatprep.subr.bf16.mxu0 0
        %1755 = vmatpush1.bf16.msra.mxu0 0
        %1756 = vmatprep.subr.bf16.mxu0 0
        %1757 = vmatpush1.bf16.msra.mxu0 0
        %1758 = vmatprep.subr.bf16.mxu0 0
        %1759 = vmatpush1.bf16.msra.mxu0 0
        %1760 = vmatprep.subr.bf16.mxu0 0
        %1761 = vmatpush1.bf16.msra.mxu0 0
        %1762 = vmatprep.subr.bf16.mxu0 0
        %1763 = vmatpush1.bf16.msra.mxu0 0
        %1764 = vmatprep.mubr.bf16.mxu0 0
        %1765 = vmatmul.mubr.bf16.gmra.mrb[0].mxu0 %v1730
        %v1766 = vpop.f32.mrb[0].mxu0
        %v1767 = vadd.f32 %v1715, %v1766
        %v1768 = vpop.f32.mrb[0].mxu0
        %v1769 = vpop.f32.mrb[0].mxu0
        %v1770 = vpop.f32.mrb[0].mxu0
        %1771 = vdwg.mxu0
        %v1772 = vmul.f32 %v1767, 0.5
        %v1773 = vmul.f32 %v1767, 0.70710677
        %v1774 = verf.f32.pop %v1773
        %v1775 = vadd.f32 %v1774, 1.0
        %v1776 = vmul.f32 %v1772, %v1775
        %v1777 = vpack.c.bf16 %v1776, %v1776
        %v1778 = vld [vmem:[%s16] sm:$0xf]
        %v1779 = vld [vmem:[%s16 + $0x4] sm:$0xf]
        %v1780 = vld [vmem:[%s16 + $0x8] sm:$0xf]
        %v1781 = vld [vmem:[%s16 + $0xc] sm:$0xf]
        %v1782 = vld [vmem:[%s16 + $0x10] sm:$0xf]
        %v1783 = vld [vmem:[%s16 + $0x14] sm:$0xf]
        %v1784 = vld [vmem:[%s16 + $0x18] sm:$0xf]
        %v1785 = vld [vmem:[%s16 + $0x1c] sm:$0xf]
        %v1786 = vld [vmem:[#allocation17] sm:$0x1]
        %v1788 = vlaneseq
        %v1789 = vshrl.u32 %v1788, 7
        %v1790 = vsub.s32 0, %v1789
        %v1791 = vrot.slane %v1786, %v1790
        %v1801 = vunpack.c.l.b16 %v1778
        %v1802 = vunpack.c.l.b16 %v1779
        %v1803 = vunpack.c.l.b16 %v1780
        %v1804 = vunpack.c.l.b16 %v1781
        %v1805 = vunpack.c.l.b16 %v1782
        %v1806 = vunpack.c.l.b16 %v1783
        %v1807 = vunpack.c.l.b16 %v1784
        %v1808 = vunpack.c.l.b16 %v1785
        %v1809 = vpack.c.b16 %v1802, %v1801
        %v1810 = vpack.c.b16 %v1804, %v1803
        %v1811 = vpack.c.b16 %v1806, %v1805
        %v1812 = vpack.c.b16 %v1808, %v1807
        %vm1817 = vcmask 523264
        %v1819 = vsel %vm1817, %v1777, 0
        %1821 = vmatprep.subr.bf16.mxu0 0
        %1822 = vmatpush1.bf16.msra.mxu0 %v1809
        %1823 = vmatprep.subr.bf16.mxu0 0
        %1824 = vmatpush1.bf16.msra.mxu0 %v1810
        %1825 = vmatprep.subr.bf16.mxu0 0
        %1826 = vmatpush1.bf16.msra.mxu0 %v1811
        %1827 = vmatprep.subr.bf16.mxu0 0
        %1828 = vmatpush1.bf16.msra.mxu0 %v1812
        %1829 = vmatprep.subr.bf16.mxu0 0
        %1830 = vmatpush1.bf16.msra.mxu0 0
        %1831 = vmatprep.subr.bf16.mxu0 0
        %1832 = vmatpush1.bf16.msra.mxu0 0
        %1833 = vmatprep.subr.bf16.mxu0 0
        %1834 = vmatpush1.bf16.msra.mxu0 0
        %1835 = vmatprep.subr.bf16.mxu0 0
        %1836 = vmatpush1.bf16.msra.mxu0 0
        %1837 = vmatprep.subr.bf16.mxu0 0
        %1838 = vmatpush1.bf16.msra.mxu0 0
        %1839 = vmatprep.subr.bf16.mxu0 0
        %1840 = vmatpush1.bf16.msra.mxu0 0
        %1841 = vmatprep.subr.bf16.mxu0 0
        %1842 = vmatpush1.bf16.msra.mxu0 0
        %1843 = vmatprep.subr.bf16.mxu0 0
        %1844 = vmatpush1.bf16.msra.mxu0 0
        %1845 = vmatprep.subr.bf16.mxu0 0
        %1846 = vmatpush1.bf16.msra.mxu0 0
        %1847 = vmatprep.subr.bf16.mxu0 0
        %1848 = vmatpush1.bf16.msra.mxu0 0
        %1849 = vmatprep.subr.bf16.mxu0 0
        %1850 = vmatpush1.bf16.msra.mxu0 0
        %1851 = vmatprep.subr.bf16.mxu0 0
        %1852 = vmatpush1.bf16.msra.mxu0 0
        %1853 = vmatprep.mubr.bf16.mxu0 0
        %1854 = vmatmul.mubr.bf16.gmra.mrb[0].mxu0 %v1819
        %v1855 = vpop.f32.mrb[0].mxu0
        %v1856 = vadd.f32 %v1791, %v1855
        %v1857 = vpop.f32.mrb[0].mxu0
        %v1858 = vpop.f32.mrb[0].mxu0
        %v1859 = vpop.f32.mrb[0].mxu0
        %1860 = vdwg.mxu0
        %v1861 = vadd.f32 %v1856, %v1689
        %1862 = vst.msk [vmem:[%s905] sm:$0xff] %vm922, %v1861
        %p1863 = scmp.lt.s32.totalorder %s41, 1
        %s1864 = scalar_select %p1863, %s41, 1
        %s1865 = smul.addr %s1864, 8
        %s1866 = scalar_lea.vmem %s20, %s1865
        %p1867 = scmp.lt.s32.totalorder %s41, 1
        %s1868 = scalar_select %p1867, %s41, 1
        %s1869 = smul.addr %s1868, 8
        %s1870 = scalar_lea.vmem %s21, %s1869
        %p1871 = scmp.lt.s32.totalorder %s41, 1
        %s1872 = scalar_select %p1871, %s41, 1
        %s1873 = smul.addr %s1872, 8
        %s1874 = scalar_lea.vmem %s22, %s1873
        %p1875 = scmp.lt.s32.totalorder %s41, 1
        %s1876 = scalar_select %p1875, %s41, 1
        %s1877 = smul.addr %s1876, 8
        %s1878 = scalar_lea.vmem %s23, %s1877
        // Predicated region
        $region141: #{mfi_model_forward.2} parent=99 // pred_check
          %p1879 = pneg %p499
        $region142: #{mfi_model_forward.2} parent=99 // pred_check_branch
          %1881 = sbr.rel (%p1879) target = $region144
        $region143: #{mfi_model_forward.2} parent=99 // pred_region
          _
        $region144: #{mfi_model_forward.2} parent=99 // pred_fallthru
          _
        // Predicated region
        $region145: #{mfi_model_forward.2} parent=99 // pred_check
          %p1882 = pneg %p525
        $region146: #{mfi_model_forward.2} parent=99 // pred_check_branch
          %1884 = sbr.rel (%p1882) target = $region148
        $region147: #{mfi_model_forward.2} parent=99 // pred_region
          _
        $region148: #{mfi_model_forward.2} parent=99 // pred_fallthru
          _
        // Predicated region
        $region149: #{mfi_model_forward.2} parent=99 // pred_check
          %p1885 = pneg %p551
        $region150: #{mfi_model_forward.2} parent=99 // pred_check_branch
          %1887 = sbr.rel (%p1885) target = $region152
        $region151: #{mfi_model_forward.2} parent=99 // pred_region
          _
        $region152: #{mfi_model_forward.2} parent=99 // pred_fallthru
          _
        // Predicated region
        $region153: #{mfi_model_forward.2} parent=99 // pred_check
          %p1888 = pneg %p577
        $region154: #{mfi_model_forward.2} parent=99 // pred_check_branch
          %1890 = sbr.rel (%p1888) target = $region156
        $region155: #{mfi_model_forward.2} parent=99 // pred_region
          _
        $region156: #{mfi_model_forward.2} parent=99 // pred_fallthru
          _
      $region100: #{mfi_model_forward.2} parent=5 // pred_fallthru
        _
      %p1891 = scmp.le.s32.totalorder 2, %s36
      // Predicated region
      $region157: #{mfi_model_forward.2} parent=5 // pred_check
        %p1892 = pneg %p1891
      $region158: #{mfi_model_forward.2} parent=5 // pred_check_branch
        %1894 = sbr.rel (%p1892) target = $region160
      $region159: #{mfi_model_forward.2} parent=5 // pred_region
        %s1895 = ssub.s32 %s36, 2
        // Predicated region
        $region161: #{mfi_model_forward.2} parent=159 // pred_check
          %p1896 = pneg %p505
        $region162: #{mfi_model_forward.2} parent=159 // pred_check_branch
          %1898 = sbr.rel (%p1896) target = $region164
        $region163: #{mfi_model_forward.2} parent=159 // pred_region
          %p1899 = scmp.lt.s32.totalorder %s42, 1
          %s1900 = scalar_select %p1899, %s42, 1
          %s1901 = smul.addr %s1900, 8
          %s1902 = scalar_lea.vmem %s20, %s1901
        $region164: #{mfi_model_forward.2} parent=159 // pred_fallthru
          _
        // Predicated region
        $region165: #{mfi_model_forward.2} parent=159 // pred_check
          %p1903 = pneg %p531
        $region166: #{mfi_model_forward.2} parent=159 // pred_check_branch
          %1905 = sbr.rel (%p1903) target = $region168
        $region167: #{mfi_model_forward.2} parent=159 // pred_region
          %p1906 = scmp.lt.s32.totalorder %s42, 1
          %s1907 = scalar_select %p1906, %s42, 1
          %s1908 = smul.addr %s1907, 8
          %s1909 = scalar_lea.vmem %s21, %s1908
        $region168: #{mfi_model_forward.2} parent=159 // pred_fallthru
          _
        // Predicated region
        $region169: #{mfi_model_forward.2} parent=159 // pred_check
          %p1910 = pneg %p557
        $region170: #{mfi_model_forward.2} parent=159 // pred_check_branch
          %1912 = sbr.rel (%p1910) target = $region172
        $region171: #{mfi_model_forward.2} parent=159 // pred_region
          %p1913 = scmp.lt.s32.totalorder %s42, 1
          %s1914 = scalar_select %p1913, %s42, 1
          %s1915 = smul.addr %s1914, 8
          %s1916 = scalar_lea.vmem %s22, %s1915
        $region172: #{mfi_model_forward.2} parent=159 // pred_fallthru
          _
        // Predicated region
        $region173: #{mfi_model_forward.2} parent=159 // pred_check
          %p1917 = pneg %p583
        $region174: #{mfi_model_forward.2} parent=159 // pred_check_branch
          %1919 = sbr.rel (%p1917) target = $region176
        $region175: #{mfi_model_forward.2} parent=159 // pred_region
          %p1920 = scmp.lt.s32.totalorder %s42, 1
          %s1921 = scalar_select %p1920, %s42, 1
          %s1922 = smul.addr %s1921, 8
          %s1923 = scalar_lea.vmem %s23, %s1922
        $region176: #{mfi_model_forward.2} parent=159 // pred_fallthru
          _
      $region160: #{mfi_model_forward.2} parent=5 // pred_fallthru
        _
    $region6: #{mfi_model_forward.2} parent=1 // loop_footer
      %s40 = sadd.s32 1, %s36
    $region7: #{mfi_model_forward.2} parent=1 // loop_footer_branch
      %35 = sbr.rel target = $region3
    $region8: #{mfi_model_forward.2} parent=1 // loop_exit
      _
    %1924 = vsyncpa [#allocation4], 1
    %s1925 = scalar_lea.sflag [#allocation4], 1
    %1926 = vsyncpa %s1925, 1
    %1927 = vsyncpa [#allocation6], 1
    %1928 = vsyncpa [#allocation9], 1
    %1929 = vsyncpa [#allocation12], 1
    %1930 = vsyncpa [#allocation15], 1
    %1931 = vsyncpa [#allocation18], 1

</llo_original>
